<compile_context>
chip_gen: v7x
topology: tpu7x:2x2x1
jax: 0.10.0
libtpu: 0.0.40
codegen_flags: <defaults>
</compile_context>

<pallas_src>
import functools

import jax
import jax.numpy as jnp
from jax import lax
from jax.experimental import pallas as pl
from jax.experimental.pallas import tpu as pltpu

EPS = 1e-5
_C1, _C2, _C3 = 64, 128, 1024  # conv channel widths


def _pick_tile(n, target):
    """Largest divisor of n that is <= target, preferring multiples of 8 (sublanes)."""
    best, best8 = 1, None
    for d in range(1, n + 1):
        if n % d or d > target:
            continue
        best = d
        if d % 8 == 0:
            best8 = d
    return best8 if best8 is not None else best


# -----------------------------------------------------------------------------
# Passes 1-2: per-channel sum / sum-of-squares of the pre-BN activation.
# Flattened single-axis grid over all B*N rows (tiles may span batch boundaries).
# -----------------------------------------------------------------------------
def _make_stats12_kernel(depth):
    def kernel(*refs):
        if depth == 1:
            x_ref, w1_ref, b1_ref, s_ref, ss_ref = refs
        else:
            (x_ref, w1_ref, b1_ref, mu1_ref, rs1_ref, g1_ref, be1_ref,
             w2_ref, b2_ref, s_ref, ss_ref) = refs
        md = w1_ref.dtype  # matmul operand dtype (bf16 by default)

        # conv_1 (1x1 conv == per-point matmul), pre-BN, f32 accumulation.
        z = jnp.dot(x_ref[...].astype(md), w1_ref[...],
                    preferred_element_type=jnp.float32) + b1_ref[...]
        if depth == 2:  # bn_1 + relu, then conv_2 pre-BN
            h = jnp.maximum(g1_ref[...] * (z - mu1_ref[...]) * rs1_ref[...]
                            + be1_ref[...], 0.0)
            z = jnp.dot(h.astype(md), w2_ref[...],
                        preferred_element_type=jnp.float32) + b2_ref[...]

        @pl.when(pl.program_id(0) == 0)
        def _():
            s_ref[...] = jnp.zeros_like(s_ref)
            ss_ref[...] = jnp.zeros_like(ss_ref)

        # VPU/XLU sublane reductions (keep the MXU for the real matmuls).
        s_ref[...] += jnp.sum(z, axis=0, keepdims=True)
        ss_ref[...] += jnp.sum(z * z, axis=0, keepdims=True)

    return kernel


def _run_stats12(depth, x_flat, consts, *, tile_rows, c_out):
    rows, cin = x_flat.shape
    x_spec = pl.BlockSpec((tile_rows, cin), lambda i: (i, 0))
    # Constant index map -> DMA'd once, resident in VMEM across the whole grid.
    const_specs = [pl.BlockSpec(a.shape, lambda i: (0, 0)) for a in consts]
    out_spec = pl.BlockSpec((1, c_out), lambda i: (0, 0))
    out_shape = jax.ShapeDtypeStruct((1, c_out), jnp.float32)
    return pl.pallas_call(
        _make_stats12_kernel(depth),
        grid=(rows // tile_rows,),
        in_specs=[x_spec] + const_specs,
        out_specs=(out_spec, out_spec),
        out_shape=(out_shape, out_shape),
        compiler_params=pltpu.CompilerParams(dimension_semantics=("arbitrary",)),
    )(x_flat, *consts)


# -----------------------------------------------------------------------------
# Pass 3: BN3 statistics (per-batch partials) + per-batch sign-adjusted max-pool.
# Grid (batch, point-tiles); batch axis is megacore-parallel.
# -----------------------------------------------------------------------------
def _stats3_kernel(x_ref, w1_ref, b1_ref, mu1_ref, rs1_ref, g1_ref, be1_ref,
                   w2_ref, b2_ref, mu2_ref, rs2_ref, g2_ref, be2_ref,
                   w3_ref, b3_ref, sgn3_ref, s_ref, ss_ref, mx_ref):
    md = w1_ref.dtype

    z = jnp.dot(x_ref[...].astype(md), w1_ref[...],
                preferred_element_type=jnp.float32) + b1_ref[...]
    h = jnp.maximum(g1_ref[...] * (z - mu1_ref[...]) * rs1_ref[...]
                    + be1_ref[...], 0.0)
    z = jnp.dot(h.astype(md), w2_ref[...],
                preferred_element_type=jnp.float32) + b2_ref[...]
    h = jnp.maximum(g2_ref[...] * (z - mu2_ref[...]) * rs2_ref[...]
                    + be2_ref[...], 0.0)
    z = jnp.dot(h.astype(md), w3_ref[...],
                preferred_element_type=jnp.float32) + b3_ref[...]

    @pl.when(pl.program_id(1) == 0)
    def _():
        s_ref[...] = jnp.zeros_like(s_ref)
        ss_ref[...] = jnp.zeros_like(ss_ref)
        mx_ref[...] = jnp.full_like(mx_ref, -jnp.inf)

    s_ref[...] += jnp.sum(z, axis=0, keepdims=True).reshape(1, 1, -1)
    ss_ref[...] += jnp.sum(z * z, axis=0, keepdims=True).reshape(1, 1, -1)
    # Running sign-adjusted max per batch sample (max-pool over points).
    mx_ref[...] = jnp.maximum(
        mx_ref[...],
        jnp.max(z * sgn3_ref[...], axis=0, keepdims=True).reshape(1, 1, -1))


def _run_stats3(x_flat, consts, *, batch, tiles_per_batch, tile_rows, c_out):
    cin = x_flat.shape[1]
    x_spec = pl.BlockSpec((tile_rows, cin),
                          lambda b, t: (b * tiles_per_batch + t, 0))
    const_specs = [pl.BlockSpec(a.shape, lambda b, t: (0, 0)) for a in consts]
    out_spec = pl.BlockSpec((1, 1, c_out), lambda b, t: (b, 0, 0))
    out_shape = jax.ShapeDtypeStruct((batch, 1, c_out), jnp.float32)
    return pl.pallas_call(
        _stats3_kernel,
        grid=(batch, tiles_per_batch),
        in_specs=[x_spec] + const_specs,
        out_specs=(out_spec, out_spec, out_spec),
        out_shape=(out_shape, out_shape, out_shape),
        compiler_params=pltpu.CompilerParams(
            dimension_semantics=("parallel", "arbitrary")),
    )(x_flat, *consts)


# -----------------------------------------------------------------------------
# FC head: bn_3 + relu on the pooled features, fc_1/bn_4, fc_2/bn_5, fc_3 (+ I).
# -----------------------------------------------------------------------------
def _head_kernel(mx_ref, sgn3_ref, g3_ref, be3_ref, mu3_ref, rs3_ref,
                 fw1_ref, fb1_ref, g4_ref, be4_ref,
                 fw2_ref, fb2_ref, g5_ref, be5_ref,
                 fw3_ref, fb3_ref, eye_ref, out_ref):
    md = fw1_ref.dtype

    def bn_relu(h, g, be):
        # Training-mode BatchNorm1d over the batch axis (two-pass variance).
        mu = jnp.mean(h, axis=0, keepdims=True)
        var = jnp.mean((h - mu) * (h - mu), axis=0, keepdims=True)
        return jnp.maximum(g * (h - mu) * lax.rsqrt(var + EPS) + be, 0.0)

    # Undo the sign adjustment of the running max, then bn_3 + relu.
    pooled = jnp.maximum(
        g3_ref[...] * (mx_ref[...] * sgn3_ref[...] - mu3_ref[...]) * rs3_ref[...]
        + be3_ref[...], 0.0)                                            # (B, 1024)
    f = bn_relu(jnp.dot(pooled.astype(md), fw1_ref[...],
                        preferred_element_type=jnp.float32) + fb1_ref[...],
                g4_ref[...], be4_ref[...])                              # (B, 512)
    f = bn_relu(jnp.dot(f.astype(md), fw2_ref[...],
                        preferred_element_type=jnp.float32) + fb2_ref[...],
                g5_ref[...], be5_ref[...])                              # (B, 256)
    out_ref[...] = (jnp.dot(f.astype(md), fw3_ref[...],
                            preferred_element_type=jnp.float32)
                    + fb3_ref[...] + eye_ref[...])                      # (B, out_p)


# -----------------------------------------------------------------------------
# Wrapper.
# -----------------------------------------------------------------------------
def transformation_net(x, params, output_dim, *, matmul_dtype=jnp.bfloat16,
                       tile_rows12=None, tile_rows3=None):
    """x: (B, num_points, input_dim) -> (B, output_dim, output_dim). Training-mode BN."""
    B, N, Cin = x.shape
    D = output_dim
    cnt = float(B * N)

    # Layout / padding: pad the tiny conv_1 contraction to 8 lanes; keep x in HBM in
    # the matmul operand dtype (it is swept three times).
    cin_p = max(8, ((Cin + 7) // 8) * 8)
    x_flat = jnp.pad(x.reshape(B * N, Cin).astype(jnp.float32),
                     ((0, 0), (0, cin_p - Cin))).astype(matmul_dtype)

    w1 = jnp.pad(params["w1"], ((0, cin_p - Cin), (0, 0))).astype(matmul_dtype)
    w2 = params["w2"].astype(matmul_dtype)
    w3 = params["w3"].astype(matmul_dtype)
    fw1 = params["fw1"].astype(matmul_dtype)
    fw2 = params["fw2"].astype(matmul_dtype)

    dd = D * D
    out_p = ((dd + 127) // 128) * 128             # lane-dense FC-head output
    fw3 = jnp.pad(params["fw3"], ((0, 0), (0, out_p - dd))).astype(matmul_dtype)
    fb3 = jnp.pad(params["fb3"], ((0, 0), (0, out_p - dd)))
    eye = jnp.pad(jnp.eye(D, dtype=jnp.float32).reshape(1, dd),
                  ((0, 0), (0, out_p - dd)))

    # Per-pass tiling: big tiles for the overhead-bound passes 1-2; pass-3 tiles are
    # capped at 512 rows so the (tile, 1024) f32 live set stays inside v7x VMEM.
    if tile_rows12 is None:
        tile_rows12 = _pick_tile(B * N, target=2048)
    if tile_rows3 is None:
        tile_rows3 = _pick_tile(N, target=512)
    assert (B * N) % tile_rows12 == 0 and N % tile_rows3 == 0
    tiles_per_batch = N // tile_rows3

    def moments(s, ss):
        mu = s / cnt
        var = ss / cnt - mu * mu
        return mu, lax.rsqrt(var + EPS)

    # Pass 1: BN1 statistics.
    s1, ss1 = _run_stats12(1, x_flat, [w1, params["b1"]],
                           tile_rows=tile_rows12, c_out=_C1)
    mu1, rs1 = moments(s1, ss1)

    # Pass 2: BN2 statistics (recomputes the cheap layer 1).
    s2, ss2 = _run_stats12(
        2, x_flat,
        [w1, params["b1"], mu1, rs1, params["g1"], params["be1"], w2, params["b2"]],
        tile_rows=tile_rows12, c_out=_C2)
    mu2, rs2 = moments(s2, ss2)

    # Pass 3: BN3 statistics (per-batch partials) + per-batch sign-adjusted max-pool.
    sgn3 = jnp.where(params["g3"] >= 0, 1.0, -1.0).astype(jnp.float32)
    s3b, ss3b, mxb = _run_stats3(
        x_flat,
        [w1, params["b1"], mu1, rs1, params["g1"], params["be1"],
         w2, params["b2"], mu2, rs2, params["g2"], params["be2"],
         w3, params["b3"], sgn3],
        batch=B, tiles_per_batch=tiles_per_batch, tile_rows=tile_rows3, c_out=_C3)
    mu3, rs3 = moments(jnp.sum(s3b, axis=0), jnp.sum(ss3b, axis=0))
    mx = mxb.reshape(B, _C3)

    # FC head: tiny; single resident-block kernel, lane-dense padded output.
    head_args = [mx, sgn3, params["g3"], params["be3"], mu3, rs3,
                 fw1, params["fb1"], params["g4"], params["be4"],
                 fw2, params["fb2"], params["g5"], params["be5"],
                 fw3, fb3, eye]
    out = pl.pallas_call(
        _head_kernel,
        out_shape=jax.ShapeDtypeStruct((B, out_p), jnp.float32),
        in_specs=[pl.BlockSpec(memory_space=pltpu.MemorySpace.VMEM)] * len(head_args),
        out_specs=pl.BlockSpec(memory_space=pltpu.MemorySpace.VMEM),
    )(*head_args)
    return out[:, :dd].reshape(B, D, D)


# -----------------------------------------------------------------------------
# Parameters + plain-JAX reference (matmul operands cast like the kernel's).
# -----------------------------------------------------------------------------
def init_params(key, input_dim, output_dim):
    layer_dims = [("w1", "b1", input_dim, 64),
                  ("w2", "b2", 64, 128),
                  ("w3", "b3", 128, 1024),
                  ("fw1", "fb1", 1024, 512),
                  ("fw2", "fb2", 512, 256),
                  ("fw3", "fb3", 256, output_dim * output_dim)]
    keys = jax.random.split(key, 2 * len(layer_dims))
    p = {}
    for i, (wn, bn, din, dout) in enumerate(layer_dims):
        p[wn] = (jax.random.normal(keys[2 * i], (din, dout), jnp.float32)
                 / jnp.sqrt(jnp.float32(din)))
        p[bn] = 0.01 * jax.random.normal(keys[2 * i + 1], (1, dout), jnp.float32)
    # BatchNorm affine params (PyTorch defaults: gamma=1, beta=0).
    for gname, bname, c in [("g1", "be1", 64), ("g2", "be2", 128), ("g3", "be3", 1024),
                            ("g4", "be4", 512), ("g5", "be5", 256)]:
        p[gname] = jnp.ones((1, c), jnp.float32)
        p[bname] = jnp.zeros((1, c), jnp.float32)
    return p


def reference_forward(x, params, output_dim, matmul_dtype=jnp.bfloat16):
    """Plain-JAX reference. Matmul operands are cast to `matmul_dtype` with f32
    accumulation, exactly like the kernel, so the comparison isolates structural
    errors from the deliberate bf16-operand MXU precision."""
    B, N, Cin = x.shape
    D = output_dim

    def mm(a, b):
        return jnp.dot(a.astype(matmul_dtype), b.astype(matmul_dtype),
                       preferred_element_type=jnp.float32)

    def bn_relu(h, g, b):
        mu = h.mean(0, keepdims=True)
        var = ((h - mu) ** 2).mean(0, keepdims=True)
        return jnp.maximum(g * (h - mu) / jnp.sqrt(var + EPS) + b, 0.0)

    h = mm(x.reshape(B * N, Cin), params["w1"]) + params["b1"]
    h = bn_relu(h, params["g1"], params["be1"])
    h = bn_relu(mm(h, params["w2"]) + params["b2"], params["g2"], params["be2"])
    h = bn_relu(mm(h, params["w3"]) + params["b3"], params["g3"], params["be3"])
    pooled = h.reshape(B, N, -1).max(axis=1)
    f = bn_relu(mm(pooled, params["fw1"]) + params["fb1"], params["g4"], params["be4"])
    f = bn_relu(mm(f, params["fw2"]) + params["fb2"], params["g5"], params["be5"])
    out = (mm(f, params["fw3"]) + params["fb3"]
           + jnp.eye(D, dtype=jnp.float32).reshape(1, D * D))
    return out.reshape(B, D, D)


if __name__ == "__main__":
    B, N = 2, 16
    input_dim, output_dim = 3, 3

    key = jax.random.PRNGKey(0)
    pkey, xkey = jax.random.split(key)
    params = init_params(pkey, input_dim, output_dim)
    x = jax.random.normal(xkey, (B, N, input_dim), jnp.float32)

    fwd = jax.jit(functools.partial(transformation_net, output_dim=output_dim))
    out = jax.block_until_ready(fwd(x, params))
    assert out.shape == (B, output_dim, output_dim)

    ref = reference_forward(x, params, output_dim)
    # Both paths use bf16 MXU operands with f32 accumulation; the batch-of-2
    # BatchNorms in the head amplify tiny rounding differences, hence the tolerance.
    # Structural errors would show up as O(0.1 - 1) discrepancies.
    assert jnp.allclose(out, ref, atol=5e-3, rtol=5e-3), "mismatch vs JAX reference"

    # Exercise the sign-adjusted max-pool path with negative / zero gamma_3.
    ch = jnp.arange(_C3) % 3
    params_g3 = dict(params)
    params_g3["g3"] = jnp.where(ch == 0, -0.7, jnp.where(ch == 1, 0.0, 1.3)
                                ).reshape(1, _C3).astype(jnp.float32)
    params_g3["be3"] = jnp.full((1, _C3), 0.05, jnp.float32)
    out2 = jax.block_until_ready(fwd(x, params_g3))
    ref2 = reference_forward(x, params_g3, output_dim)
    assert jnp.allclose(out2, ref2, atol=5e-3, rtol=5e-3), "mismatch with signed gamma_3"

    print("KERNEL_OK")
</pallas_src>

<mosaic_0001>
module attributes {stable_mosaic.version = 11 : i64} {
  func.func @kernel(%arg0: i32, %arg1: memref<32x8xbf16, #tpu.memory_space<vmem>>, %arg2: memref<8x64xbf16, #tpu.memory_space<vmem>>, %arg3: memref<1x64xf32, #tpu.memory_space<vmem>>, %arg4: memref<1x64xf32, #tpu.memory_space<vmem>>, %arg5: memref<1x64xf32, #tpu.memory_space<vmem>>) attributes {dimension_semantics = [#tpu.dimension_semantics<arbitrary>], iteration_bounds = array<i64: 1>, scalar_prefetch = 0 : i64, scratch_operands = 0 : i64, tpu.core_type = #tpu.core_type<tc>, window_params = [{transform_indices = @transform_0, window_bounds = array<i64: 32, 8>}, {pipeline_mode = #tpu.pipeline_mode<synchronous>, transform_indices = @transform_1, window_bounds = array<i64: 8, 64>}, {pipeline_mode = #tpu.pipeline_mode<synchronous>, transform_indices = @transform_2, window_bounds = array<i64: 1, 64>}, {pipeline_mode = #tpu.pipeline_mode<synchronous>, transform_indices = @transform_3, window_bounds = array<i64: 1, 64>}, {pipeline_mode = #tpu.pipeline_mode<synchronous>, transform_indices = @transform_4, window_bounds = array<i64: 1, 64>}]} {
    %c0 = arith.constant 0 : index
    %c0_0 = arith.constant 0 : index
    %0 = vector.load %arg1[%c0, %c0_0] : memref<32x8xbf16, #tpu.memory_space<vmem>>, vector<32x8xbf16>
    %c0_1 = arith.constant 0 : index
    %c0_2 = arith.constant 0 : index
    %1 = vector.load %arg2[%c0_1, %c0_2] : memref<8x64xbf16, #tpu.memory_space<vmem>>, vector<8x64xbf16>
    %cst = arith.constant dense<0.000000e+00> : vector<32x64xf32>
    %2 = tpu.matmul %0, %1, %cst {dimension_numbers = #tpu.dot_dimension_numbers<[1], [0], [0], [1], [0, 0, 1, 1], [], []>} : vector<32x8xbf16>, vector<8x64xbf16>, vector<32x64xf32> -> vector<32x64xf32>
    %c0_3 = arith.constant 0 : index
    %c0_4 = arith.constant 0 : index
    %3 = vector.load %arg3[%c0_3, %c0_4] : memref<1x64xf32, #tpu.memory_space<vmem>>, vector<1x64xf32>
    %4 = vector.broadcast %3 : vector<1x64xf32> to vector<32x64xf32>
    %5 = arith.addf %2, %4 : vector<32x64xf32>
    %c0_i32 = arith.constant 0 : i32
    %6 = arith.cmpi eq, %arg0, %c0_i32 : i32
    %7 = arith.extui %6 : i1 to i32
    %c0_i32_5 = arith.constant 0 : i32
    %8 = arith.cmpi ne, %7, %c0_i32_5 : i32
    scf.if %8 {
      %cst_16 = arith.constant 0.000000e+00 : f32
      %20 = vector.broadcast %cst_16 : f32 to vector<1x64xf32>
      %c0_17 = arith.constant 0 : index
      %c0_18 = arith.constant 0 : index
      %21 = vector.load %arg4[%c0_17, %c0_18] : memref<1x64xf32, #tpu.memory_space<vmem>>, vector<1x64xf32>
      tpu.vector_store %arg4[%c0_17, %c0_18], %20 {strides = array<i32>} : memref<1x64xf32, #tpu.memory_space<vmem>>, vector<1x64xf32>,
      %cst_19 = arith.constant 0.000000e+00 : f32
      %22 = vector.broadcast %cst_19 : f32 to vector<1x64xf32>
      %c0_20 = arith.constant 0 : index
      %c0_21 = arith.constant 0 : index
      %23 = vector.load %arg5[%c0_20, %c0_21] : memref<1x64xf32, #tpu.memory_space<vmem>>, vector<1x64xf32>
      tpu.vector_store %arg5[%c0_20, %c0_21], %22 {strides = array<i32>} : memref<1x64xf32, #tpu.memory_space<vmem>>, vector<1x64xf32>,
    } else {
    }
    %c0_6 = arith.constant 0 : index
    %c0_7 = arith.constant 0 : index
    %9 = vector.load %arg4[%c0_6, %c0_7] : memref<1x64xf32, #tpu.memory_space<vmem>>, vector<1x64xf32>
    %cst_8 = arith.constant dense<0.000000e+00> : vector<64xf32>
    %10 = vector.multi_reduction <add>, %5, %cst_8 [0] : vector<32x64xf32> to vector<64xf32>
    %11 = vector.shape_cast %10 : vector<64xf32> to vector<1x64xf32>
    %12 = arith.addf %9, %11 : vector<1x64xf32>
    %c0_9 = arith.constant 0 : index
    %c0_10 = arith.constant 0 : index
    %13 = vector.load %arg4[%c0_9, %c0_10] : memref<1x64xf32, #tpu.memory_space<vmem>>, vector<1x64xf32>
    tpu.vector_store %arg4[%c0_9, %c0_10], %12 {strides = array<i32>} : memref<1x64xf32, #tpu.memory_space<vmem>>, vector<1x64xf32>,
    %c0_11 = arith.constant 0 : index
    %c0_12 = arith.constant 0 : index
    %14 = vector.load %arg5[%c0_11, %c0_12] : memref<1x64xf32, #tpu.memory_space<vmem>>, vector<1x64xf32>
    %15 = arith.mulf %5, %5 : vector<32x64xf32>
    %cst_13 = arith.constant dense<0.000000e+00> : vector<64xf32>
    %16 = vector.multi_reduction <add>, %15, %cst_13 [0] : vector<32x64xf32> to vector<64xf32>
    %17 = vector.shape_cast %16 : vector<64xf32> to vector<1x64xf32>
    %18 = arith.addf %14, %17 : vector<1x64xf32>
    %c0_14 = arith.constant 0 : index
    %c0_15 = arith.constant 0 : index
    %19 = vector.load %arg5[%c0_14, %c0_15] : memref<1x64xf32, #tpu.memory_space<vmem>>, vector<1x64xf32>
    tpu.vector_store %arg5[%c0_14, %c0_15], %18 {strides = array<i32>} : memref<1x64xf32, #tpu.memory_space<vmem>>, vector<1x64xf32>,
    return
  }
  func.func @transform_0(%arg0: i32) -> (i32, i32) {
    %c0_i32 = arith.constant 0 : i32
    %c0_i32_0 = arith.constant 0 : i32
    return %arg0, %c0_i32 : i32, i32
  }
  func.func @transform_1(%arg0: i32) -> (i32, i32) {
    %c0_i32 = arith.constant 0 : i32
    %c0_i32_0 = arith.constant 0 : i32
    %c0_i32_1 = arith.constant 0 : i32
    return %c0_i32, %c0_i32_0 : i32, i32
  }
  func.func @transform_2(%arg0: i32) -> (i32, i32) {
    %c0_i32 = arith.constant 0 : i32
    %c0_i32_0 = arith.constant 0 : i32
    %c0_i32_1 = arith.constant 0 : i32
    return %c0_i32, %c0_i32_0 : i32, i32
  }
  func.func @transform_3(%arg0: i32) -> (i32, i32) {
    %c0_i32 = arith.constant 0 : i32
    %c0_i32_0 = arith.constant 0 : i32
    %c0_i32_1 = arith.constant 0 : i32
    return %c0_i32, %c0_i32_0 : i32, i32
  }
  func.func @transform_4(%arg0: i32) -> (i32, i32) {
    %c0_i32 = arith.constant 0 : i32
    %c0_i32_0 = arith.constant 0 : i32
    %c0_i32_1 = arith.constant 0 : i32
    return %c0_i32, %c0_i32_0 : i32, i32
  }
}

module attributes {stable_mosaic.version = 11 : i64} {
  func.func @kernel(%arg0: i32, %arg1: memref<32x8xbf16, #tpu.memory_space<vmem>>, %arg2: memref<8x64xbf16, #tpu.memory_space<vmem>>, %arg3: memref<1x64xf32, #tpu.memory_space<vmem>>, %arg4: memref<1x64xf32, #tpu.memory_space<vmem>>, %arg5: memref<1x64xf32, #tpu.memory_space<vmem>>, %arg6: memref<1x64xf32, #tpu.memory_space<vmem>>, %arg7: memref<1x64xf32, #tpu.memory_space<vmem>>, %arg8: memref<64x128xbf16, #tpu.memory_space<vmem>>, %arg9: memref<1x128xf32, #tpu.memory_space<vmem>>, %arg10: memref<1x128xf32, #tpu.memory_space<vmem>>, %arg11: memref<1x128xf32, #tpu.memory_space<vmem>>) attributes {dimension_semantics = [#tpu.dimension_semantics<arbitrary>], iteration_bounds = array<i64: 1>, scalar_prefetch = 0 : i64, scratch_operands = 0 : i64, tpu.core_type = #tpu.core_type<tc>, window_params = [{transform_indices = @transform_0, window_bounds = array<i64: 32, 8>}, {pipeline_mode = #tpu.pipeline_mode<synchronous>, transform_indices = @transform_1, window_bounds = array<i64: 8, 64>}, {pipeline_mode = #tpu.pipeline_mode<synchronous>, transform_indices = @transform_2, window_bounds = array<i64: 1, 64>}, {pipeline_mode = #tpu.pipeline_mode<synchronous>, transform_indices = @transform_3, window_bounds = array<i64: 1, 64>}, {pipeline_mode = #tpu.pipeline_mode<synchronous>, transform_indices = @transform_4, window_bounds = array<i64: 1, 64>}, {pipeline_mode = #tpu.pipeline_mode<synchronous>, transform_indices = @transform_5, window_bounds = array<i64: 1, 64>}, {pipeline_mode = #tpu.pipeline_mode<synchronous>, transform_indices = @transform_6, window_bounds = array<i64: 1, 64>}, {pipeline_mode = #tpu.pipeline_mode<synchronous>, transform_indices = @transform_7, window_bounds = array<i64: 64, 128>}, {pipeline_mode = #tpu.pipeline_mode<synchronous>, transform_indices = @transform_8, window_bounds = array<i64: 1, 128>}, {pipeline_mode = #tpu.pipeline_mode<synchronous>, transform_indices = @transform_9, window_bounds = array<i64: 1, 128>}, {pipeline_mode = #tpu.pipeline_mode<synchronous>, transform_indices = @transform_10, window_bounds = array<i64: 1, 128>}]} {
    %c0 = arith.constant 0 : index
    %c0_0 = arith.constant 0 : index
    %0 = vector.load %arg1[%c0, %c0_0] : memref<32x8xbf16, #tpu.memory_space<vmem>>, vector<32x8xbf16>
    %c0_1 = arith.constant 0 : index
    %c0_2 = arith.constant 0 : index
    %1 = vector.load %arg2[%c0_1, %c0_2] : memref<8x64xbf16, #tpu.memory_space<vmem>>, vector<8x64xbf16>
    %cst = arith.constant dense<0.000000e+00> : vector<32x64xf32>
    %2 = tpu.matmul %0, %1, %cst {dimension_numbers = #tpu.dot_dimension_numbers<[1], [0], [0], [1], [0, 0, 1, 1], [], []>} : vector<32x8xbf16>, vector<8x64xbf16>, vector<32x64xf32> -> vector<32x64xf32>
    %c0_3 = arith.constant 0 : index
    %c0_4 = arith.constant 0 : index
    %3 = vector.load %arg3[%c0_3, %c0_4] : memref<1x64xf32, #tpu.memory_space<vmem>>, vector<1x64xf32>
    %4 = vector.broadcast %3 : vector<1x64xf32> to vector<32x64xf32>
    %5 = arith.addf %2, %4 : vector<32x64xf32>
    %c0_5 = arith.constant 0 : index
    %c0_6 = arith.constant 0 : index
    %6 = vector.load %arg6[%c0_5, %c0_6] : memref<1x64xf32, #tpu.memory_space<vmem>>, vector<1x64xf32>
    %c0_7 = arith.constant 0 : index
    %c0_8 = arith.constant 0 : index
    %7 = vector.load %arg4[%c0_7, %c0_8] : memref<1x64xf32, #tpu.memory_space<vmem>>, vector<1x64xf32>
    %8 = vector.broadcast %7 : vector<1x64xf32> to vector<32x64xf32>
    %9 = arith.subf %5, %8 : vector<32x64xf32>
    %10 = vector.broadcast %6 : vector<1x64xf32> to vector<32x64xf32>
    %11 = arith.mulf %10, %9 : vector<32x64xf32>
    %c0_9 = arith.constant 0 : index
    %c0_10 = arith.constant 0 : index
    %12 = vector.load %arg5[%c0_9, %c0_10] : memref<1x64xf32, #tpu.memory_space<vmem>>, vector<1x64xf32>
    %13 = vector.broadcast %12 : vector<1x64xf32> to vector<32x64xf32>
    %14 = arith.mulf %11, %13 : vector<32x64xf32>
    %c0_11 = arith.constant 0 : index
    %c0_12 = arith.constant 0 : index
    %15 = vector.load %arg7[%c0_11, %c0_12] : memref<1x64xf32, #tpu.memory_space<vmem>>, vector<1x64xf32>
    %16 = vector.broadcast %15 : vector<1x64xf32> to vector<32x64xf32>
    %17 = arith.addf %14, %16 : vector<32x64xf32>
    %cst_13 = arith.constant 0.000000e+00 : f32
    %18 = vector.broadcast %cst_13 : f32 to vector<32x64xf32>
    %19 = arith.maximumf %17, %18 : vector<32x64xf32>
    %20 = arith.truncf %19 : vector<32x64xf32> to vector<32x64xbf16>
    %c0_14 = arith.constant 0 : index
    %c0_15 = arith.constant 0 : index
    %21 = vector.load %arg8[%c0_14, %c0_15] : memref<64x128xbf16, #tpu.memory_space<vmem>>, vector<64x128xbf16>
    %cst_16 = arith.constant dense<0.000000e+00> : vector<32x128xf32>
    %22 = tpu.matmul %20, %21, %cst_16 {dimension_numbers = #tpu.dot_dimension_numbers<[1], [0], [0], [1], [0, 0, 1, 1], [], []>} : vector<32x64xbf16>, vector<64x128xbf16>, vector<32x128xf32> -> vector<32x128xf32>
    %c0_17 = arith.constant 0 : index
    %c0_18 = arith.constant 0 : index
    %23 = vector.load %arg9[%c0_17, %c0_18] : memref<1x128xf32, #tpu.memory_space<vmem>>, vector<1x128xf32>
    %24 = vector.broadcast %23 : vector<1x128xf32> to vector<32x128xf32>
    %25 = arith.addf %22, %24 : vector<32x128xf32>
    %c0_i32 = arith.constant 0 : i32
    %26 = arith.cmpi eq, %arg0, %c0_i32 : i32
    %27 = arith.extui %26 : i1 to i32
    %c0_i32_19 = arith.constant 0 : i32
    %28 = arith.cmpi ne, %27, %c0_i32_19 : i32
    scf.if %28 {
      %cst_30 = arith.constant 0.000000e+00 : f32
      %40 = vector.broadcast %cst_30 : f32 to vector<1x128xf32>
      %c0_31 = arith.constant 0 : index
      %c0_32 = arith.constant 0 : index
      %41 = vector.load %arg10[%c0_31, %c0_32] : memref<1x128xf32, #tpu.memory_space<vmem>>, vector<1x128xf32>
      tpu.vector_store %arg10[%c0_31, %c0_32], %40 {strides = array<i32>} : memref<1x128xf32, #tpu.memory_space<vmem>>, vector<1x128xf32>,
      %cst_33 = arith.constant 0.000000e+00 : f32
      %42 = vector.broadcast %cst_33 : f32 to vector<1x128xf32>
      %c0_34 = arith.constant 0 : index
      %c0_35 = arith.constant 0 : index
      %43 = vector.load %arg11[%c0_34, %c0_35] : memref<1x128xf32, #tpu.memory_space<vmem>>, vector<1x128xf32>
      tpu.vector_store %arg11[%c0_34, %c0_35], %42 {strides = array<i32>} : memref<1x128xf32, #tpu.memory_space<vmem>>, vector<1x128xf32>,
    } else {
    }
    %c0_20 = arith.constant 0 : index
    %c0_21 = arith.constant 0 : index
    %29 = vector.load %arg10[%c0_20, %c0_21] : memref<1x128xf32, #tpu.memory_space<vmem>>, vector<1x128xf32>
    %cst_22 = arith.constant dense<0.000000e+00> : vector<128xf32>
    %30 = vector.multi_reduction <add>, %25, %cst_22 [0] : vector<32x128xf32> to vector<128xf32>
    %31 = vector.shape_cast %30 : vector<128xf32> to vector<1x128xf32>
    %32 = arith.addf %29, %31 : vector<1x128xf32>
    %c0_23 = arith.constant 0 : index
    %c0_24 = arith.constant 0 : index
    %33 = vector.load %arg10[%c0_23, %c0_24] : memref<1x128xf32, #tpu.memory_space<vmem>>, vector<1x128xf32>
    tpu.vector_store %arg10[%c0_23, %c0_24], %32 {strides = array<i32>} : memref<1x128xf32, #tpu.memory_space<vmem>>, vector<1x128xf32>,
    %c0_25 = arith.constant 0 : index
    %c0_26 = arith.constant 0 : index
    %34 = vector.load %arg11[%c0_25, %c0_26] : memref<1x128xf32, #tpu.memory_space<vmem>>, vector<1x128xf32>
    %35 = arith.mulf %25, %25 : vector<32x128xf32>
    %cst_27 = arith.constant dense<0.000000e+00> : vector<128xf32>
    %36 = vector.multi_reduction <add>, %35, %cst_27 [0] : vector<32x128xf32> to vector<128xf32>
    %37 = vector.shape_cast %36 : vector<128xf32> to vector<1x128xf32>
    %38 = arith.addf %34, %37 : vector<1x128xf32>
    %c0_28 = arith.constant 0 : index
    %c0_29 = arith.constant 0 : index
    %39 = vector.load %arg11[%c0_28, %c0_29] : memref<1x128xf32, #tpu.memory_space<vmem>>, vector<1x128xf32>
    tpu.vector_store %arg11[%c0_28, %c0_29], %38 {strides = array<i32>} : memref<1x128xf32, #tpu.memory_space<vmem>>, vector<1x128xf32>,
    return
  }
  func.func @transform_0(%arg0: i32) -> (i32, i32) {
    %c0_i32 = arith.constant 0 : i32
    %c0_i32_0 = arith.constant 0 : i32
    return %arg0, %c0_i32 : i32, i32
  }
  func.func @transform_1(%arg0: i32) -> (i32, i32) {
    %c0_i32 = arith.constant 0 : i32
    %c0_i32_0 = arith.constant 0 : i32
    %c0_i32_1 = arith.constant 0 : i32
    return %c0_i32, %c0_i32_0 : i32, i32
  }
  func.func @transform_2(%arg0: i32) -> (i32, i32) {
    %c0_i32 = arith.constant 0 : i32
    %c0_i32_0 = arith.constant 0 : i32
    %c0_i32_1 = arith.constant 0 : i32
    return %c0_i32, %c0_i32_0 : i32, i32
  }
  func.func @transform_3(%arg0: i32) -> (i32, i32) {
    %c0_i32 = arith.constant 0 : i32
    %c0_i32_0 = arith.constant 0 : i32
    %c0_i32_1 = arith.constant 0 : i32
    return %c0_i32, %c0_i32_0 : i32, i32
  }
  func.func @transform_4(%arg0: i32) -> (i32, i32) {
    %c0_i32 = arith.constant 0 : i32
    %c0_i32_0 = arith.constant 0 : i32
    %c0_i32_1 = arith.constant 0 : i32
    return %c0_i32, %c0_i32_0 : i32, i32
  }
  func.func @transform_5(%arg0: i32) -> (i32, i32) {
    %c0_i32 = arith.constant 0 : i32
    %c0_i32_0 = arith.constant 0 : i32
    %c0_i32_1 = arith.constant 0 : i32
    return %c0_i32, %c0_i32_0 : i32, i32
  }
  func.func @transform_6(%arg0: i32) -> (i32, i32) {
    %c0_i32 = arith.constant 0 : i32
    %c0_i32_0 = arith.constant 0 : i32
    %c0_i32_1 = arith.constant 0 : i32
    return %c0_i32, %c0_i32_0 : i32, i32
  }
  func.func @transform_7(%arg0: i32) -> (i32, i32) {
    %c0_i32 = arith.constant 0 : i32
    %c0_i32_0 = arith.constant 0 : i32
    %c0_i32_1 = arith.constant 0 : i32
    return %c0_i32, %c0_i32_0 : i32, i32
  }
  func.func @transform_8(%arg0: i32) -> (i32, i32) {
    %c0_i32 = arith.constant 0 : i32
    %c0_i32_0 = arith.constant 0 : i32
    %c0_i32_1 = arith.constant 0 : i32
    return %c0_i32, %c0_i32_0 : i32, i32
  }
  func.func @transform_9(%arg0: i32) -> (i32, i32) {
    %c0_i32 = arith.constant 0 : i32
    %c0_i32_0 = arith.constant 0 : i32
    %c0_i32_1 = arith.constant 0 : i32
    return %c0_i32, %c0_i32_0 : i32, i32
  }
  func.func @transform_10(%arg0: i32) -> (i32, i32) {
    %c0_i32 = arith.constant 0 : i32
    %c0_i32_0 = arith.constant 0 : i32
    %c0_i32_1 = arith.constant 0 : i32
    return %c0_i32, %c0_i32_0 : i32, i32
  }
}

module attributes {stable_mosaic.version = 11 : i64} {
  func.func @_stats3_kernel(%arg0: i32, %arg1: i32, %arg2: memref<16x8xbf16, #tpu.memory_space<vmem>>, %arg3: memref<8x64xbf16, #tpu.memory_space<vmem>>, %arg4: memref<1x64xf32, #tpu.memory_space<vmem>>, %arg5: memref<1x64xf32, #tpu.memory_space<vmem>>, %arg6: memref<1x64xf32, #tpu.memory_space<vmem>>, %arg7: memref<1x64xf32, #tpu.memory_space<vmem>>, %arg8: memref<1x64xf32, #tpu.memory_space<vmem>>, %arg9: memref<64x128xbf16, #tpu.memory_space<vmem>>, %arg10: memref<1x128xf32, #tpu.memory_space<vmem>>, %arg11: memref<1x128xf32, #tpu.memory_space<vmem>>, %arg12: memref<1x128xf32, #tpu.memory_space<vmem>>, %arg13: memref<1x128xf32, #tpu.memory_space<vmem>>, %arg14: memref<1x128xf32, #tpu.memory_space<vmem>>, %arg15: memref<128x1024xbf16, #tpu.memory_space<vmem>>, %arg16: memref<1x1024xf32, #tpu.memory_space<vmem>>, %arg17: memref<1x1024xf32, #tpu.memory_space<vmem>>, %arg18: memref<1x1x1024xf32, #tpu.memory_space<vmem>>, %arg19: memref<1x1x1024xf32, #tpu.memory_space<vmem>>, %arg20: memref<1x1x1024xf32, #tpu.memory_space<vmem>>) attributes {dimension_semantics = [#tpu.dimension_semantics<parallel>, #tpu.dimension_semantics<arbitrary>], iteration_bounds = array<i64: 2, 1>, scalar_prefetch = 0 : i64, scratch_operands = 0 : i64, tpu.core_type = #tpu.core_type<tc>, window_params = [{transform_indices = @transform_0, window_bounds = array<i64: 16, 8>}, {pipeline_mode = #tpu.pipeline_mode<synchronous>, transform_indices = @transform_1, window_bounds = array<i64: 8, 64>}, {pipeline_mode = #tpu.pipeline_mode<synchronous>, transform_indices = @transform_2, window_bounds = array<i64: 1, 64>}, {pipeline_mode = #tpu.pipeline_mode<synchronous>, transform_indices = @transform_3, window_bounds = array<i64: 1, 64>}, {pipeline_mode = #tpu.pipeline_mode<synchronous>, transform_indices = @transform_4, window_bounds = array<i64: 1, 64>}, {pipeline_mode = #tpu.pipeline_mode<synchronous>, transform_indices = @transform_5, window_bounds = array<i64: 1, 64>}, {pipeline_mode = #tpu.pipeline_mode<synchronous>, transform_indices = @transform_6, window_bounds = array<i64: 1, 64>}, {pipeline_mode = #tpu.pipeline_mode<synchronous>, transform_indices = @transform_7, window_bounds = array<i64: 64, 128>}, {pipeline_mode = #tpu.pipeline_mode<synchronous>, transform_indices = @transform_8, window_bounds = array<i64: 1, 128>}, {pipeline_mode = #tpu.pipeline_mode<synchronous>, transform_indices = @transform_9, window_bounds = array<i64: 1, 128>}, {pipeline_mode = #tpu.pipeline_mode<synchronous>, transform_indices = @transform_10, window_bounds = array<i64: 1, 128>}, {pipeline_mode = #tpu.pipeline_mode<synchronous>, transform_indices = @transform_11, window_bounds = array<i64: 1, 128>}, {pipeline_mode = #tpu.pipeline_mode<synchronous>, transform_indices = @transform_12, window_bounds = array<i64: 1, 128>}, {pipeline_mode = #tpu.pipeline_mode<synchronous>, transform_indices = @transform_13, window_bounds = array<i64: 128, 1024>}, {pipeline_mode = #tpu.pipeline_mode<synchronous>, transform_indices = @transform_14, window_bounds = array<i64: 1, 1024>}, {pipeline_mode = #tpu.pipeline_mode<synchronous>, transform_indices = @transform_15, window_bounds = array<i64: 1, 1024>}, {transform_indices = @transform_16, window_bounds = array<i64: 1, 1, 1024>}, {transform_indices = @transform_17, window_bounds = array<i64: 1, 1, 1024>}, {transform_indices = @transform_18, window_bounds = array<i64: 1, 1, 1024>}]} {
    %c0 = arith.constant 0 : index
    %c0_0 = arith.constant 0 : index
    %0 = vector.load %arg2[%c0, %c0_0] : memref<16x8xbf16, #tpu.memory_space<vmem>>, vector<16x8xbf16>
    %c0_1 = arith.constant 0 : index
    %c0_2 = arith.constant 0 : index
    %1 = vector.load %arg3[%c0_1, %c0_2] : memref<8x64xbf16, #tpu.memory_space<vmem>>, vector<8x64xbf16>
    %cst = arith.constant dense<0.000000e+00> : vector<16x64xf32>
    %2 = tpu.matmul %0, %1, %cst {dimension_numbers = #tpu.dot_dimension_numbers<[1], [0], [0], [1], [0, 0, 1, 1], [], []>} : vector<16x8xbf16>, vector<8x64xbf16>, vector<16x64xf32> -> vector<16x64xf32>
    %c0_3 = arith.constant 0 : index
    %c0_4 = arith.constant 0 : index
    %3 = vector.load %arg4[%c0_3, %c0_4] : memref<1x64xf32, #tpu.memory_space<vmem>>, vector<1x64xf32>
    %4 = vector.broadcast %3 : vector<1x64xf32> to vector<16x64xf32>
    %5 = arith.addf %2, %4 : vector<16x64xf32>
    %c0_5 = arith.constant 0 : index
    %c0_6 = arith.constant 0 : index
    %6 = vector.load %arg7[%c0_5, %c0_6] : memref<1x64xf32, #tpu.memory_space<vmem>>, vector<1x64xf32>
    %c0_7 = arith.constant 0 : index
    %c0_8 = arith.constant 0 : index
    %7 = vector.load %arg5[%c0_7, %c0_8] : memref<1x64xf32, #tpu.memory_space<vmem>>, vector<1x64xf32>
    %8 = vector.broadcast %7 : vector<1x64xf32> to vector<16x64xf32>
    %9 = arith.subf %5, %8 : vector<16x64xf32>
    %10 = vector.broadcast %6 : vector<1x64xf32> to vector<16x64xf32>
    %11 = arith.mulf %10, %9 : vector<16x64xf32>
    %c0_9 = arith.constant 0 : index
    %c0_10 = arith.constant 0 : index
    %12 = vector.load %arg6[%c0_9, %c0_10] : memref<1x64xf32, #tpu.memory_space<vmem>>, vector<1x64xf32>
    %13 = vector.broadcast %12 : vector<1x64xf32> to vector<16x64xf32>
    %14 = arith.mulf %11, %13 : vector<16x64xf32>
    %c0_11 = arith.constant 0 : index
    %c0_12 = arith.constant 0 : index
    %15 = vector.load %arg8[%c0_11, %c0_12] : memref<1x64xf32, #tpu.memory_space<vmem>>, vector<1x64xf32>
    %16 = vector.broadcast %15 : vector<1x64xf32> to vector<16x64xf32>
    %17 = arith.addf %14, %16 : vector<16x64xf32>
    %cst_13 = arith.constant 0.000000e+00 : f32
    %18 = vector.broadcast %cst_13 : f32 to vector<16x64xf32>
    %19 = arith.maximumf %17, %18 : vector<16x64xf32>
    %20 = arith.truncf %19 : vector<16x64xf32> to vector<16x64xbf16>
    %c0_14 = arith.constant 0 : index
    %c0_15 = arith.constant 0 : index
    %21 = vector.load %arg9[%c0_14, %c0_15] : memref<64x128xbf16, #tpu.memory_space<vmem>>, vector<64x128xbf16>
    %cst_16 = arith.constant dense<0.000000e+00> : vector<16x128xf32>
    %22 = tpu.matmul %20, %21, %cst_16 {dimension_numbers = #tpu.dot_dimension_numbers<[1], [0], [0], [1], [0, 0, 1, 1], [], []>} : vector<16x64xbf16>, vector<64x128xbf16>, vector<16x128xf32> -> vector<16x128xf32>
    %c0_17 = arith.constant 0 : index
    %c0_18 = arith.constant 0 : index
    %23 = vector.load %arg10[%c0_17, %c0_18] : memref<1x128xf32, #tpu.memory_space<vmem>>, vector<1x128xf32>
    %24 = vector.broadcast %23 : vector<1x128xf32> to vector<16x128xf32>
    %25 = arith.addf %22, %24 : vector<16x128xf32>
    %c0_19 = arith.constant 0 : index
    %c0_20 = arith.constant 0 : index
    %26 = vector.load %arg13[%c0_19, %c0_20] : memref<1x128xf32, #tpu.memory_space<vmem>>, vector<1x128xf32>
    %c0_21 = arith.constant 0 : index
    %c0_22 = arith.constant 0 : index
    %27 = vector.load %arg11[%c0_21, %c0_22] : memref<1x128xf32, #tpu.memory_space<vmem>>, vector<1x128xf32>
    %28 = vector.broadcast %27 : vector<1x128xf32> to vector<16x128xf32>
    %29 = arith.subf %25, %28 : vector<16x128xf32>
    %30 = vector.broadcast %26 : vector<1x128xf32> to vector<16x128xf32>
    %31 = arith.mulf %30, %29 : vector<16x128xf32>
    %c0_23 = arith.constant 0 : index
    %c0_24 = arith.constant 0 : index
    %32 = vector.load %arg12[%c0_23, %c0_24] : memref<1x128xf32, #tpu.memory_space<vmem>>, vector<1x128xf32>
    %33 = vector.broadcast %32 : vector<1x128xf32> to vector<16x128xf32>
    %34 = arith.mulf %31, %33 : vector<16x128xf32>
    %c0_25 = arith.constant 0 : index
    %c0_26 = arith.constant 0 : index
    %35 = vector.load %arg14[%c0_25, %c0_26] : memref<1x128xf32, #tpu.memory_space<vmem>>, vector<1x128xf32>
    %36 = vector.broadcast %35 : vector<1x128xf32> to vector<16x128xf32>
    %37 = arith.addf %34, %36 : vector<16x128xf32>
    %cst_27 = arith.constant 0.000000e+00 : f32
    %38 = vector.broadcast %cst_27 : f32 to vector<16x128xf32>
    %39 = arith.maximumf %37, %38 : vector<16x128xf32>
    %40 = arith.truncf %39 : vector<16x128xf32> to vector<16x128xbf16>
    %c0_28 = arith.constant 0 : index
    %c0_29 = arith.constant 0 : index
    %41 = vector.load %arg15[%c0_28, %c0_29] : memref<128x1024xbf16, #tpu.memory_space<vmem>>, vector<128x1024xbf16>
    %cst_30 = arith.constant dense<0.000000e+00> : vector<16x1024xf32>
    %42 = tpu.matmul %40, %41, %cst_30 {dimension_numbers = #tpu.dot_dimension_numbers<[1], [0], [0], [1], [0, 0, 1, 1], [], []>} : vector<16x128xbf16>, vector<128x1024xbf16>, vector<16x1024xf32> -> vector<16x1024xf32>
    %c0_31 = arith.constant 0 : index
    %c0_32 = arith.constant 0 : index
    %43 = vector.load %arg16[%c0_31, %c0_32] : memref<1x1024xf32, #tpu.memory_space<vmem>>, vector<1x1024xf32>
    %44 = vector.broadcast %43 : vector<1x1024xf32> to vector<16x1024xf32>
    %45 = arith.addf %42, %44 : vector<16x1024xf32>
    %c0_i32 = arith.constant 0 : i32
    %46 = arith.cmpi eq, %arg1, %c0_i32 : i32
    %47 = arith.extui %46 : i1 to i32
    %c0_i32_33 = arith.constant 0 : i32
    %48 = arith.cmpi ne, %47, %c0_i32_33 : i32
    scf.if %48 {
      %cst_57 = arith.constant 0.000000e+00 : f32
      %71 = vector.broadcast %cst_57 : f32 to vector<1x1x1024xf32>
      %c0_58 = arith.constant 0 : index
      %c0_59 = arith.constant 0 : index
      %c0_60 = arith.constant 0 : index
      %72 = vector.load %arg18[%c0_58, %c0_59, %c0_60] : memref<1x1x1024xf32, #tpu.memory_space<vmem>>, vector<1x1x1024xf32>
      tpu.vector_store %arg18[%c0_58, %c0_59, %c0_60], %71 {strides = array<i32>} : memref<1x1x1024xf32, #tpu.memory_space<vmem>>, vector<1x1x1024xf32>,
      %cst_61 = arith.constant 0.000000e+00 : f32
      %73 = vector.broadcast %cst_61 : f32 to vector<1x1x1024xf32>
      %c0_62 = arith.constant 0 : index
      %c0_63 = arith.constant 0 : index
      %c0_64 = arith.constant 0 : index
      %74 = vector.load %arg19[%c0_62, %c0_63, %c0_64] : memref<1x1x1024xf32, #tpu.memory_space<vmem>>, vector<1x1x1024xf32>
      tpu.vector_store %arg19[%c0_62, %c0_63, %c0_64], %73 {strides = array<i32>} : memref<1x1x1024xf32, #tpu.memory_space<vmem>>, vector<1x1x1024xf32>,
      %cst_65 = arith.constant 0xFF800000 : f32
      %75 = vector.broadcast %cst_65 : f32 to vector<1x1x1024xf32>
      %c0_66 = arith.constant 0 : index
      %c0_67 = arith.constant 0 : index
      %c0_68 = arith.constant 0 : index
      %76 = vector.load %arg20[%c0_66, %c0_67, %c0_68] : memref<1x1x1024xf32, #tpu.memory_space<vmem>>, vector<1x1x1024xf32>
      tpu.vector_store %arg20[%c0_66, %c0_67, %c0_68], %75 {strides = array<i32>} : memref<1x1x1024xf32, #tpu.memory_space<vmem>>, vector<1x1x1024xf32>,
    } else {
    }
    %c0_34 = arith.constant 0 : index
    %c0_35 = arith.constant 0 : index
    %c0_36 = arith.constant 0 : index
    %49 = vector.load %arg18[%c0_34, %c0_35, %c0_36] : memref<1x1x1024xf32, #tpu.memory_space<vmem>>, vector<1x1x1024xf32>
    %cst_37 = arith.constant dense<0.000000e+00> : vector<1024xf32>
    %50 = vector.multi_reduction <add>, %45, %cst_37 [0] : vector<16x1024xf32> to vector<1024xf32>
    %51 = vector.shape_cast %50 : vector<1024xf32> to vector<1x1024xf32>
    %52 = vector.shape_cast %51 : vector<1x1024xf32> to vector<1x1x1024xf32>
    %53 = arith.addf %49, %52 : vector<1x1x1024xf32>
    %c0_38 = arith.constant 0 : index
    %c0_39 = arith.constant 0 : index
    %c0_40 = arith.constant 0 : index
    %54 = vector.load %arg18[%c0_38, %c0_39, %c0_40] : memref<1x1x1024xf32, #tpu.memory_space<vmem>>, vector<1x1x1024xf32>
    tpu.vector_store %arg18[%c0_38, %c0_39, %c0_40], %53 {strides = array<i32>} : memref<1x1x1024xf32, #tpu.memory_space<vmem>>, vector<1x1x1024xf32>,
    %c0_41 = arith.constant 0 : index
    %c0_42 = arith.constant 0 : index
    %c0_43 = arith.constant 0 : index
    %55 = vector.load %arg19[%c0_41, %c0_42, %c0_43] : memref<1x1x1024xf32, #tpu.memory_space<vmem>>, vector<1x1x1024xf32>
    %56 = arith.mulf %45, %45 : vector<16x1024xf32>
    %cst_44 = arith.constant dense<0.000000e+00> : vector<1024xf32>
    %57 = vector.multi_reduction <add>, %56, %cst_44 [0] : vector<16x1024xf32> to vector<1024xf32>
    %58 = vector.shape_cast %57 : vector<1024xf32> to vector<1x1024xf32>
    %59 = vector.shape_cast %58 : vector<1x1024xf32> to vector<1x1x1024xf32>
    %60 = arith.addf %55, %59 : vector<1x1x1024xf32>
    %c0_45 = arith.constant 0 : index
    %c0_46 = arith.constant 0 : index
    %c0_47 = arith.constant 0 : index
    %61 = vector.load %arg19[%c0_45, %c0_46, %c0_47] : memref<1x1x1024xf32, #tpu.memory_space<vmem>>, vector<1x1x1024xf32>
    tpu.vector_store %arg19[%c0_45, %c0_46, %c0_47], %60 {strides = array<i32>} : memref<1x1x1024xf32, #tpu.memory_space<vmem>>, vector<1x1x1024xf32>,
    %c0_48 = arith.constant 0 : index
    %c0_49 = arith.constant 0 : index
    %c0_50 = arith.constant 0 : index
    %62 = vector.load %arg20[%c0_48, %c0_49, %c0_50] : memref<1x1x1024xf32, #tpu.memory_space<vmem>>, vector<1x1x1024xf32>
    %c0_51 = arith.constant 0 : index
    %c0_52 = arith.constant 0 : index
    %63 = vector.load %arg17[%c0_51, %c0_52] : memref<1x1024xf32, #tpu.memory_space<vmem>>, vector<1x1024xf32>
    %64 = vector.broadcast %63 : vector<1x1024xf32> to vector<16x1024xf32>
    %65 = arith.mulf %45, %64 : vector<16x1024xf32>
    %cst_53 = arith.constant dense<0xFF800000> : vector<1024xf32>
    %66 = vector.multi_reduction <maximumf>, %65, %cst_53 [0] : vector<16x1024xf32> to vector<1024xf32>
    %67 = vector.shape_cast %66 : vector<1024xf32> to vector<1x1024xf32>
    %68 = vector.shape_cast %67 : vector<1x1024xf32> to vector<1x1x1024xf32>
    %69 = arith.maximumf %62, %68 : vector<1x1x1024xf32>
    %c0_54 = arith.constant 0 : index
    %c0_55 = arith.constant 0 : index
    %c0_56 = arith.constant 0 : index
    %70 = vector.load %arg20[%c0_54, %c0_55, %c0_56] : memref<1x1x1024xf32, #tpu.memory_space<vmem>>, vector<1x1x1024xf32>
    tpu.vector_store %arg20[%c0_54, %c0_55, %c0_56], %69 {strides = array<i32>} : memref<1x1x1024xf32, #tpu.memory_space<vmem>>, vector<1x1x1024xf32>,
    return
  }
  func.func @transform_0(%arg0: i32, %arg1: i32) -> (i32, i32) {
    %c1_i32 = arith.constant 1 : i32
    %0 = arith.muli %arg0, %c1_i32 : i32
    %1 = arith.addi %0, %arg1 : i32
    %c0_i32 = arith.constant 0 : i32
    %c0_i32_0 = arith.constant 0 : i32
    return %1, %c0_i32 : i32, i32
  }
  func.func @transform_1(%arg0: i32, %arg1: i32) -> (i32, i32) {
    %c0_i32 = arith.constant 0 : i32
    %c0_i32_0 = arith.constant 0 : i32
    %c0_i32_1 = arith.constant 0 : i32
    return %c0_i32, %c0_i32_0 : i32, i32
  }
  func.func @transform_2(%arg0: i32, %arg1: i32) -> (i32, i32) {
    %c0_i32 = arith.constant 0 : i32
    %c0_i32_0 = arith.constant 0 : i32
    %c0_i32_1 = arith.constant 0 : i32
    return %c0_i32, %c0_i32_0 : i32, i32
  }
  func.func @transform_3(%arg0: i32, %arg1: i32) -> (i32, i32) {
    %c0_i32 = arith.constant 0 : i32
    %c0_i32_0 = arith.constant 0 : i32
    %c0_i32_1 = arith.constant 0 : i32
    return %c0_i32, %c0_i32_0 : i32, i32
  }
  func.func @transform_4(%arg0: i32, %arg1: i32) -> (i32, i32) {
    %c0_i32 = arith.constant 0 : i32
    %c0_i32_0 = arith.constant 0 : i32
    %c0_i32_1 = arith.constant 0 : i32
    return %c0_i32, %c0_i32_0 : i32, i32
  }
  func.func @transform_5(%arg0: i32, %arg1: i32) -> (i32, i32) {
    %c0_i32 = arith.constant 0 : i32
    %c0_i32_0 = arith.constant 0 : i32
    %c0_i32_1 = arith.constant 0 : i32
    return %c0_i32, %c0_i32_0 : i32, i32
  }
  func.func @transform_6(%arg0: i32, %arg1: i32) -> (i32, i32) {
    %c0_i32 = arith.constant 0 : i32
    %c0_i32_0 = arith.constant 0 : i32
    %c0_i32_1 = arith.constant 0 : i32
    return %c0_i32, %c0_i32_0 : i32, i32
  }
  func.func @transform_7(%arg0: i32, %arg1: i32) -> (i32, i32) {
    %c0_i32 = arith.constant 0 : i32
    %c0_i32_0 = arith.constant 0 : i32
    %c0_i32_1 = arith.constant 0 : i32
    return %c0_i32, %c0_i32_0 : i32, i32
  }
  func.func @transform_8(%arg0: i32, %arg1: i32) -> (i32, i32) {
    %c0_i32 = arith.constant 0 : i32
    %c0_i32_0 = arith.constant 0 : i32
    %c0_i32_1 = arith.constant 0 : i32
    return %c0_i32, %c0_i32_0 : i32, i32
  }
  func.func @transform_9(%arg0: i32, %arg1: i32) -> (i32, i32) {
    %c0_i32 = arith.constant 0 : i32
    %c0_i32_0 = arith.constant 0 : i32
    %c0_i32_1 = arith.constant 0 : i32
    return %c0_i32, %c0_i32_0 : i32, i32
  }
  func.func @transform_10(%arg0: i32, %arg1: i32) -> (i32, i32) {
    %c0_i32 = arith.constant 0 : i32
    %c0_i32_0 = arith.constant 0 : i32
    %c0_i32_1 = arith.constant 0 : i32
    return %c0_i32, %c0_i32_0 : i32, i32
  }
  func.func @transform_11(%arg0: i32, %arg1: i32) -> (i32, i32) {
    %c0_i32 = arith.constant 0 : i32
    %c0_i32_0 = arith.constant 0 : i32
    %c0_i32_1 = arith.constant 0 : i32
    return %c0_i32, %c0_i32_0 : i32, i32
  }
  func.func @transform_12(%arg0: i32, %arg1: i32) -> (i32, i32) {
    %c0_i32 = arith.constant 0 : i32
    %c0_i32_0 = arith.constant 0 : i32
    %c0_i32_1 = arith.constant 0 : i32
    return %c0_i32, %c0_i32_0 : i32, i32
  }
  func.func @transform_13(%arg0: i32, %arg1: i32) -> (i32, i32) {
    %c0_i32 = arith.constant 0 : i32
    %c0_i32_0 = arith.constant 0 : i32
    %c0_i32_1 = arith.constant 0 : i32
    return %c0_i32, %c0_i32_0 : i32, i32
  }
  func.func @transform_14(%arg0: i32, %arg1: i32) -> (i32, i32) {
    %c0_i32 = arith.constant 0 : i32
    %c0_i32_0 = arith.constant 0 : i32
    %c0_i32_1 = arith.constant 0 : i32
    return %c0_i32, %c0_i32_0 : i32, i32
  }
  func.func @transform_15(%arg0: i32, %arg1: i32) -> (i32, i32) {
    %c0_i32 = arith.constant 0 : i32
    %c0_i32_0 = arith.constant 0 : i32
    %c0_i32_1 = arith.constant 0 : i32
    return %c0_i32, %c0_i32_0 : i32, i32
  }
  func.func @transform_16(%arg0: i32, %arg1: i32) -> (i32, i32, i32) {
    %c0_i32 = arith.constant 0 : i32
    %c0_i32_0 = arith.constant 0 : i32
    %c0_i32_1 = arith.constant 0 : i32
    return %arg0, %c0_i32, %c0_i32_0 : i32, i32, i32
  }
  func.func @transform_17(%arg0: i32, %arg1: i32) -> (i32, i32, i32) {
    %c0_i32 = arith.constant 0 : i32
    %c0_i32_0 = arith.constant 0 : i32
    %c0_i32_1 = arith.constant 0 : i32
    return %arg0, %c0_i32, %c0_i32_0 : i32, i32, i32
  }
  func.func @transform_18(%arg0: i32, %arg1: i32) -> (i32, i32, i32) {
    %c0_i32 = arith.constant 0 : i32
    %c0_i32_0 = arith.constant 0 : i32
    %c0_i32_1 = arith.constant 0 : i32
    return %arg0, %c0_i32, %c0_i32_0 : i32, i32, i32
  }
}

module attributes {stable_mosaic.version = 11 : i64} {
  func.func @_head_kernel(%arg0: memref<2x1024xf32, #tpu.memory_space<vmem>>, %arg1: memref<1x1024xf32, #tpu.memory_space<vmem>>, %arg2: memref<1x1024xf32, #tpu.memory_space<vmem>>, %arg3: memref<1x1024xf32, #tpu.memory_space<vmem>>, %arg4: memref<1x1024xf32, #tpu.memory_space<vmem>>, %arg5: memref<1x1024xf32, #tpu.memory_space<vmem>>, %arg6: memref<1024x512xbf16, #tpu.memory_space<vmem>>, %arg7: memref<1x512xf32, #tpu.memory_space<vmem>>, %arg8: memref<1x512xf32, #tpu.memory_space<vmem>>, %arg9: memref<1x512xf32, #tpu.memory_space<vmem>>, %arg10: memref<512x256xbf16, #tpu.memory_space<vmem>>, %arg11: memref<1x256xf32, #tpu.memory_space<vmem>>, %arg12: memref<1x256xf32, #tpu.memory_space<vmem>>, %arg13: memref<1x256xf32, #tpu.memory_space<vmem>>, %arg14: memref<256x128xbf16, #tpu.memory_space<vmem>>, %arg15: memref<1x128xf32, #tpu.memory_space<vmem>>, %arg16: memref<1x128xf32, #tpu.memory_space<vmem>>, %arg17: memref<2x128xf32, #tpu.memory_space<vmem>>) attributes {dimension_semantics = [], scalar_prefetch = 0 : i64, scratch_operands = 0 : i64, tpu.core_type = #tpu.core_type<tc>} {
    %c0 = arith.constant 0 : index
    %c0_0 = arith.constant 0 : index
    %0 = vector.load %arg2[%c0, %c0_0] : memref<1x1024xf32, #tpu.memory_space<vmem>>, vector<1x1024xf32>
    %c0_1 = arith.constant 0 : index
    %c0_2 = arith.constant 0 : index
    %1 = vector.load %arg0[%c0_1, %c0_2] : memref<2x1024xf32, #tpu.memory_space<vmem>>, vector<2x1024xf32>
    %c0_3 = arith.constant 0 : index
    %c0_4 = arith.constant 0 : index
    %2 = vector.load %arg1[%c0_3, %c0_4] : memref<1x1024xf32, #tpu.memory_space<vmem>>, vector<1x1024xf32>
    %3 = vector.broadcast %2 : vector<1x1024xf32> to vector<2x1024xf32>
    %4 = arith.mulf %1, %3 : vector<2x1024xf32>
    %c0_5 = arith.constant 0 : index
    %c0_6 = arith.constant 0 : index
    %5 = vector.load %arg4[%c0_5, %c0_6] : memref<1x1024xf32, #tpu.memory_space<vmem>>, vector<1x1024xf32>
    %6 = vector.broadcast %5 : vector<1x1024xf32> to vector<2x1024xf32>
    %7 = arith.subf %4, %6 : vector<2x1024xf32>
    %8 = vector.broadcast %0 : vector<1x1024xf32> to vector<2x1024xf32>
    %9 = arith.mulf %8, %7 : vector<2x1024xf32>
    %c0_7 = arith.constant 0 : index
    %c0_8 = arith.constant 0 : index
    %10 = vector.load %arg5[%c0_7, %c0_8] : memref<1x1024xf32, #tpu.memory_space<vmem>>, vector<1x1024xf32>
    %11 = vector.broadcast %10 : vector<1x1024xf32> to vector<2x1024xf32>
    %12 = arith.mulf %9, %11 : vector<2x1024xf32>
    %c0_9 = arith.constant 0 : index
    %c0_10 = arith.constant 0 : index
    %13 = vector.load %arg3[%c0_9, %c0_10] : memref<1x1024xf32, #tpu.memory_space<vmem>>, vector<1x1024xf32>
    %14 = vector.broadcast %13 : vector<1x1024xf32> to vector<2x1024xf32>
    %15 = arith.addf %12, %14 : vector<2x1024xf32>
    %cst = arith.constant 0.000000e+00 : f32
    %16 = vector.broadcast %cst : f32 to vector<2x1024xf32>
    %17 = arith.maximumf %15, %16 : vector<2x1024xf32>
    %18 = arith.truncf %17 : vector<2x1024xf32> to vector<2x1024xbf16>
    %c0_11 = arith.constant 0 : index
    %c0_12 = arith.constant 0 : index
    %19 = vector.load %arg6[%c0_11, %c0_12] : memref<1024x512xbf16, #tpu.memory_space<vmem>>, vector<1024x512xbf16>
    %cst_13 = arith.constant dense<0.000000e+00> : vector<2x512xf32>
    %20 = tpu.matmul %18, %19, %cst_13 {dimension_numbers = #tpu.dot_dimension_numbers<[1], [0], [0], [1], [0, 0, 1, 1], [], []>} : vector<2x1024xbf16>, vector<1024x512xbf16>, vector<2x512xf32> -> vector<2x512xf32>
    %c0_14 = arith.constant 0 : index
    %c0_15 = arith.constant 0 : index
    %21 = vector.load %arg7[%c0_14, %c0_15] : memref<1x512xf32, #tpu.memory_space<vmem>>, vector<1x512xf32>
    %22 = vector.broadcast %21 : vector<1x512xf32> to vector<2x512xf32>
    %23 = arith.addf %20, %22 : vector<2x512xf32>
    %c0_16 = arith.constant 0 : index
    %c0_17 = arith.constant 0 : index
    %24 = vector.load %arg8[%c0_16, %c0_17] : memref<1x512xf32, #tpu.memory_space<vmem>>, vector<1x512xf32>
    %c0_18 = arith.constant 0 : index
    %c0_19 = arith.constant 0 : index
    %25 = vector.load %arg9[%c0_18, %c0_19] : memref<1x512xf32, #tpu.memory_space<vmem>>, vector<1x512xf32>
    %cst_20 = arith.constant dense<0.000000e+00> : vector<512xf32>
    %26 = vector.multi_reduction <add>, %23, %cst_20 [0] : vector<2x512xf32> to vector<512xf32>
    %27 = vector.shape_cast %26 : vector<512xf32> to vector<1x512xf32>
    %cst_21 = arith.constant 2.000000e+00 : f32
    %28 = vector.broadcast %cst_21 : f32 to vector<1x512xf32>
    %29 = arith.divf %27, %28 : vector<1x512xf32>
    %30 = vector.broadcast %29 : vector<1x512xf32> to vector<2x512xf32>
    %31 = arith.subf %23, %30 : vector<2x512xf32>
    %32 = vector.broadcast %29 : vector<1x512xf32> to vector<2x512xf32>
    %33 = arith.subf %23, %32 : vector<2x512xf32>
    %34 = arith.mulf %31, %33 : vector<2x512xf32>
    %cst_22 = arith.constant dense<0.000000e+00> : vector<512xf32>
    %35 = vector.multi_reduction <add>, %34, %cst_22 [0] : vector<2x512xf32> to vector<512xf32>
    %36 = vector.shape_cast %35 : vector<512xf32> to vector<1x512xf32>
    %cst_23 = arith.constant 2.000000e+00 : f32
    %37 = vector.broadcast %cst_23 : f32 to vector<1x512xf32>
    %38 = arith.divf %36, %37 : vector<1x512xf32>
    %39 = vector.broadcast %29 : vector<1x512xf32> to vector<2x512xf32>
    %40 = arith.subf %23, %39 : vector<2x512xf32>
    %41 = vector.broadcast %24 : vector<1x512xf32> to vector<2x512xf32>
    %42 = arith.mulf %41, %40 : vector<2x512xf32>
    %cst_24 = arith.constant 9.99999974E-6 : f32
    %43 = vector.broadcast %cst_24 : f32 to vector<1x512xf32>
    %44 = arith.addf %38, %43 : vector<1x512xf32>
    %45 = math.rsqrt %44 : vector<1x512xf32>
    %46 = vector.broadcast %45 : vector<1x512xf32> to vector<2x512xf32>
    %47 = arith.mulf %42, %46 : vector<2x512xf32>
    %48 = vector.broadcast %25 : vector<1x512xf32> to vector<2x512xf32>
    %49 = arith.addf %47, %48 : vector<2x512xf32>
    %cst_25 = arith.constant 0.000000e+00 : f32
    %50 = vector.broadcast %cst_25 : f32 to vector<2x512xf32>
    %51 = arith.maximumf %49, %50 : vector<2x512xf32>
    %52 = arith.truncf %51 : vector<2x512xf32> to vector<2x512xbf16>
    %c0_26 = arith.constant 0 : index
    %c0_27 = arith.constant 0 : index
    %53 = vector.load %arg10[%c0_26, %c0_27] : memref<512x256xbf16, #tpu.memory_space<vmem>>, vector<512x256xbf16>
    %cst_28 = arith.constant dense<0.000000e+00> : vector<2x256xf32>
    %54 = tpu.matmul %52, %53, %cst_28 {dimension_numbers = #tpu.dot_dimension_numbers<[1], [0], [0], [1], [0, 0, 1, 1], [], []>} : vector<2x512xbf16>, vector<512x256xbf16>, vector<2x256xf32> -> vector<2x256xf32>
    %c0_29 = arith.constant 0 : index
    %c0_30 = arith.constant 0 : index
    %55 = vector.load %arg11[%c0_29, %c0_30] : memref<1x256xf32, #tpu.memory_space<vmem>>, vector<1x256xf32>
    %56 = vector.broadcast %55 : vector<1x256xf32> to vector<2x256xf32>
    %57 = arith.addf %54, %56 : vector<2x256xf32>
    %c0_31 = arith.constant 0 : index
    %c0_32 = arith.constant 0 : index
    %58 = vector.load %arg12[%c0_31, %c0_32] : memref<1x256xf32, #tpu.memory_space<vmem>>, vector<1x256xf32>
    %c0_33 = arith.constant 0 : index
    %c0_34 = arith.constant 0 : index
    %59 = vector.load %arg13[%c0_33, %c0_34] : memref<1x256xf32, #tpu.memory_space<vmem>>, vector<1x256xf32>
    %cst_35 = arith.constant dense<0.000000e+00> : vector<256xf32>
    %60 = vector.multi_reduction <add>, %57, %cst_35 [0] : vector<2x256xf32> to vector<256xf32>
    %61 = vector.shape_cast %60 : vector<256xf32> to vector<1x256xf32>
    %cst_36 = arith.constant 2.000000e+00 : f32
    %62 = vector.broadcast %cst_36 : f32 to vector<1x256xf32>
    %63 = arith.divf %61, %62 : vector<1x256xf32>
    %64 = vector.broadcast %63 : vector<1x256xf32> to vector<2x256xf32>
    %65 = arith.subf %57, %64 : vector<2x256xf32>
    %66 = vector.broadcast %63 : vector<1x256xf32> to vector<2x256xf32>
    %67 = arith.subf %57, %66 : vector<2x256xf32>
    %68 = arith.mulf %65, %67 : vector<2x256xf32>
    %cst_37 = arith.constant dense<0.000000e+00> : vector<256xf32>
    %69 = vector.multi_reduction <add>, %68, %cst_37 [0] : vector<2x256xf32> to vector<256xf32>
    %70 = vector.shape_cast %69 : vector<256xf32> to vector<1x256xf32>
    %cst_38 = arith.constant 2.000000e+00 : f32
    %71 = vector.broadcast %cst_38 : f32 to vector<1x256xf32>
    %72 = arith.divf %70, %71 : vector<1x256xf32>
    %73 = vector.broadcast %63 : vector<1x256xf32> to vector<2x256xf32>
    %74 = arith.subf %57, %73 : vector<2x256xf32>
    %75 = vector.broadcast %58 : vector<1x256xf32> to vector<2x256xf32>
    %76 = arith.mulf %75, %74 : vector<2x256xf32>
    %cst_39 = arith.constant 9.99999974E-6 : f32
    %77 = vector.broadcast %cst_39 : f32 to vector<1x256xf32>
    %78 = arith.addf %72, %77 : vector<1x256xf32>
    %79 = math.rsqrt %78 : vector<1x256xf32>
    %80 = vector.broadcast %79 : vector<1x256xf32> to vector<2x256xf32>
    %81 = arith.mulf %76, %80 : vector<2x256xf32>
    %82 = vector.broadcast %59 : vector<1x256xf32> to vector<2x256xf32>
    %83 = arith.addf %81, %82 : vector<2x256xf32>
    %cst_40 = arith.constant 0.000000e+00 : f32
    %84 = vector.broadcast %cst_40 : f32 to vector<2x256xf32>
    %85 = arith.maximumf %83, %84 : vector<2x256xf32>
    %86 = arith.truncf %85 : vector<2x256xf32> to vector<2x256xbf16>
    %c0_41 = arith.constant 0 : index
    %c0_42 = arith.constant 0 : index
    %87 = vector.load %arg14[%c0_41, %c0_42] : memref<256x128xbf16, #tpu.memory_space<vmem>>, vector<256x128xbf16>
    %cst_43 = arith.constant dense<0.000000e+00> : vector<2x128xf32>
    %88 = tpu.matmul %86, %87, %cst_43 {dimension_numbers = #tpu.dot_dimension_numbers<[1], [0], [0], [1], [0, 0, 1, 1], [], []>} : vector<2x256xbf16>, vector<256x128xbf16>, vector<2x128xf32> -> vector<2x128xf32>
    %c0_44 = arith.constant 0 : index
    %c0_45 = arith.constant 0 : index
    %89 = vector.load %arg15[%c0_44, %c0_45] : memref<1x128xf32, #tpu.memory_space<vmem>>, vector<1x128xf32>
    %90 = vector.broadcast %89 : vector<1x128xf32> to vector<2x128xf32>
    %91 = arith.addf %88, %90 : vector<2x128xf32>
    %c0_46 = arith.constant 0 : index
    %c0_47 = arith.constant 0 : index
    %92 = vector.load %arg16[%c0_46, %c0_47] : memref<1x128xf32, #tpu.memory_space<vmem>>, vector<1x128xf32>
    %93 = vector.broadcast %92 : vector<1x128xf32> to vector<2x128xf32>
    %94 = arith.addf %91, %93 : vector<2x128xf32>
    %c0_48 = arith.constant 0 : index
    %c0_49 = arith.constant 0 : index
    %95 = vector.load %arg17[%c0_48, %c0_49] : memref<2x128xf32, #tpu.memory_space<vmem>>, vector<2x128xf32>
    tpu.vector_store %arg17[%c0_48, %c0_49], %94 {strides = array<i32>} : memref<2x128xf32, #tpu.memory_space<vmem>>, vector<2x128xf32>,
    return
  }
}

</mosaic_0001>

<llo_original>
// kernel: transformation_net.4
$region0: #{transformation_net.4}
  #allocation0 [shape = 'u32[]', space=smem, size = 0x4, offset = 0x4, fixed_abs, tag = 'smem constant byte address 0x4 - core index']
  #allocation1 [shape = 'u32[144,128]{1,0:T(1,128)}', space=vmem, size = 0x12000, scoped, tag = 'internal scratch']
  %s0 = inlined_call_operand.vmem [shape: bf16[32,8], index: 0, kind: input, shape index: {}]
  %s1 = inlined_call_operand.vmem [shape: bf16[8,64], index: 1, kind: input, shape index: {}]
  %s2 = inlined_call_operand.hbm [shape: f32[1,64], index: 2, kind: input, shape index: {}]
  %s3 = inlined_call_operand.vmem [shape: f32[1,64], index: 3, kind: output, shape index: {0}]
  %s4 = inlined_call_operand.vmem [shape: f32[1,64], index: 4, kind: output, shape index: {1}]
  %5 = xla_tuple %s3, %s4
  %s6 = sld [smem:[#allocation0]]
  $region38: #{transformation_net.4} parent=0
    _
  %s8 = ssub.s32 1, %s6
  %s9 = scalar_select 0, %s8, %s6
  $region1: #{transformation_net.4} parent=0
    #allocation2 [shape = 'u8[512]{0}', space=vmem, size = 0x400, scoped, tag = 'input window, operand 2, single buffered']
    #allocation3 [shape = 's32[1]{0}', space=sflag, size = 0x4, scoped, tag = 'scoped memory for transformation_net.4']
    %10 = vsyncpa [#allocation3], 0
    // Predicated region
    $region2: #{transformation_net.4} parent=1 // pred_check
      _
    $region3: #{transformation_net.4} parent=1 // pred_check_branch
      %12 = sbr.rel (0) target = $region5
    $region4: #{transformation_net.4} parent=1 // pred_region
      _
    $region5: #{transformation_net.4} parent=1 // pred_fallthru
      _
    // Predicated region
    $region6: #{transformation_net.4} parent=1 // pred_check
      _
    $region7: #{transformation_net.4} parent=1 // pred_check_branch
      %14 = sbr.rel (0) target = $region9
    $region8: #{transformation_net.4} parent=1 // pred_region
      _
    $region9: #{transformation_net.4} parent=1 // pred_fallthru
      _
    // Predicated region
    $region10: #{transformation_net.4} parent=1 // pred_check
      _
    $region11: #{transformation_net.4} parent=1 // pred_check_branch
      %16 = sbr.rel (0) target = $region13
    $region12: #{transformation_net.4} parent=1 // pred_region
      %s18 = ssub.s32 16, 16
      %19 = vsyncadd [#allocation3], %s18
      %s21 = sshll.u32 [#allocation2], 4
      %s22 = int_to_ptr.vmem [resolvable:$true] %s21
      %24 = dma.hbm_to_vmem [thread:$0]  %s2, 16, %s22, [#allocation3]
    $region13: #{transformation_net.4} parent=1 // pred_fallthru
      _
    // Predicated region
    $region14: #{transformation_net.4} parent=1 // pred_check
      _
    $region15: #{transformation_net.4} parent=1 // pred_check_branch
      %26 = sbr.rel (0) target = $region17
    $region16: #{transformation_net.4} parent=1 // pred_region
      %27 = dma.done [#allocation3], 16
    $region17: #{transformation_net.4} parent=1 // pred_fallthru
      _
    %v29 = vld [vmem:[%s0] sm:$0xf]
    %v30 = vld [vmem:[%s0 + $0x4] sm:$0xf]
    %v31 = vld [vmem:[%s0 + $0x8] sm:$0xf]
    %v32 = vld [vmem:[%s0 + $0xc] sm:$0xf]
    %v33 = vld [vmem:[%s1] sm:$0xf]
    %v34 = vld [vmem:[#allocation2] sm:$0x1]
    %v36 = vlaneseq
    %v37 = vshrl.u32 %v36, 7
    %v38 = vsub.s32 0, %v37
    %v39 = vrot.slane %v34, %v38
    %v45 = vunpack.c.l.b16 %v29
    %v46 = vunpack.c.l.b16 %v30
    %v47 = vunpack.c.l.b16 %v31
    %v48 = vunpack.c.l.b16 %v32
    %v49 = vpack.c.b16 %v46, %v45
    %v50 = vpack.c.b16 %v48, %v47
    %vm51 = vcmask 64512
    %v53 = vsel %vm51, %v49, 0
    %v56 = vsel %vm51, %v50, 0
    %vm58 = vcmask 1043456
    %v60 = vsel %vm58, %v33, 0
    %62 = vmatprep.subr.bf16.mxu0 0
    %63 = vmatpush1.bf16.msra.mxu0 %v60
    %64 = vmatprep.subr.bf16.mxu0 0
    %65 = vmatpush1.bf16.msra.mxu0 0
    %66 = vmatprep.subr.bf16.mxu0 0
    %67 = vmatpush1.bf16.msra.mxu0 0
    %68 = vmatprep.subr.bf16.mxu0 0
    %69 = vmatpush1.bf16.msra.mxu0 0
    %70 = vmatprep.subr.bf16.mxu0 0
    %71 = vmatpush1.bf16.msra.mxu0 0
    %72 = vmatprep.subr.bf16.mxu0 0
    %73 = vmatpush1.bf16.msra.mxu0 0
    %74 = vmatprep.subr.bf16.mxu0 0
    %75 = vmatpush1.bf16.msra.mxu0 0
    %76 = vmatprep.subr.bf16.mxu0 0
    %77 = vmatpush1.bf16.msra.mxu0 0
    %78 = vmatprep.subr.bf16.mxu0 0
    %79 = vmatpush1.bf16.msra.mxu0 0
    %80 = vmatprep.subr.bf16.mxu0 0
    %81 = vmatpush1.bf16.msra.mxu0 0
    %82 = vmatprep.subr.bf16.mxu0 0
    %83 = vmatpush1.bf16.msra.mxu0 0
    %84 = vmatprep.subr.bf16.mxu0 0
    %85 = vmatpush1.bf16.msra.mxu0 0
    %86 = vmatprep.subr.bf16.mxu0 0
    %87 = vmatpush1.bf16.msra.mxu0 0
    %88 = vmatprep.subr.bf16.mxu0 0
    %89 = vmatpush1.bf16.msra.mxu0 0
    %90 = vmatprep.subr.bf16.mxu0 0
    %91 = vmatpush1.bf16.msra.mxu0 0
    %92 = vmatprep.subr.bf16.mxu0 0
    %93 = vmatpush1.bf16.msra.mxu0 0
    %94 = vmatprep.mubr.bf16.mxu0 0
    %95 = vmatmul.mubr.bf16.gmra.mrb[0].mxu0 %v53
    %v96 = vpop.f32.mrb[0].mxu0
    %v97 = vadd.f32 %v39, %v96
    %v98 = vpop.f32.mrb[0].mxu0
    %v99 = vpop.f32.mrb[0].mxu0
    %v100 = vadd.f32 %v39, %v99
    %v101 = vpop.f32.mrb[0].mxu0
    %102 = vmatprep.mubr.bf16.mxu0 0
    %103 = vmatmul.mubr.bf16.gmra.mrb[0].mxu0 %v56
    %v104 = vpop.f32.mrb[0].mxu0
    %v105 = vadd.f32 %v39, %v104
    %v106 = vpop.f32.mrb[0].mxu0
    %v107 = vpop.f32.mrb[0].mxu0
    %v108 = vadd.f32 %v39, %v107
    %v109 = vpop.f32.mrb[0].mxu0
    %110 = vdwg.mxu0
    %p111 = scmp.eq.s32.totalorder 0, 0
    // Predicated region
    $region18: #{transformation_net.4} parent=1 // pred_check
      %p112 = pneg %p111
    $region19: #{transformation_net.4} parent=1 // pred_check_branch
      %114 = sbr.rel (%p112) target = $region21
    $region20: #{transformation_net.4} parent=1 // pred_region
      %vm115 = vcmask 516096
      %116 = vst.msk [vmem:[%s3] sm:$0x1] %vm115, 0.0
      %117 = vst.msk [vmem:[%s4] sm:$0x1] %vm115, 0.0
    $region21: #{transformation_net.4} parent=1 // pred_fallthru
      _
    %v118 = vld [vmem:[%s3] sm:$0x1]
    %vm119 = vcmask 523264
    %v120 = vsel %vm119, %v97, 0.0
    %v121 = vsel %vm119, %v100, 0.0
    %v122 = vadd.f32 %v120, %v121
    %v123 = vsel %vm119, %v105, 0.0
    %v124 = vadd.f32 %v122, %v123
    %v125 = vsel %vm119, %v108, 0.0
    %v126 = vadd.f32 %v124, %v125
    %v127 = vrot.slane %v126, 4
    %v128 = vadd.f32 %v126, %v127
    %v129 = vrot.slane %v128, 2
    %v130 = vadd.f32 %v128, %v129
    %v131 = vrot.slane %v130, 1
    %v132 = vadd.f32 %v130, %v131
    %v133 = vadd.f32 %v118, %v132
    %vm134 = vcmask 516096
    %135 = vst.msk [vmem:[%s3] sm:$0x1] %vm134, %v133
    %v136 = vld [vmem:[%s4] sm:$0x1]
    %v137 = vmul.f32 %v97, %v97
    %v138 = vmul.f32 %v100, %v100
    %v139 = vmul.f32 %v105, %v105
    %v140 = vmul.f32 %v108, %v108
    %v141 = vsel %vm119, %v137, 0.0
    %v142 = vsel %vm119, %v138, 0.0
    %v143 = vadd.f32 %v141, %v142
    %v144 = vsel %vm119, %v139, 0.0
    %v145 = vadd.f32 %v143, %v144
    %v146 = vsel %vm119, %v140, 0.0
    %v147 = vadd.f32 %v145, %v146
    %v148 = vrot.slane %v147, 4
    %v149 = vadd.f32 %v147, %v148
    %v150 = vrot.slane %v149, 2
    %v151 = vadd.f32 %v149, %v150
    %v152 = vrot.slane %v151, 1
    %v153 = vadd.f32 %v151, %v152
    %v154 = vadd.f32 %v136, %v153
    %155 = vst.msk [vmem:[%s4] sm:$0x1] %vm134, %v154
    // Predicated region
    $region22: #{transformation_net.4} parent=1 // pred_check
      _
    $region23: #{transformation_net.4} parent=1 // pred_check_branch
      %157 = sbr.rel (0) target = $region25
    $region24: #{transformation_net.4} parent=1 // pred_region
      _
    $region25: #{transformation_net.4} parent=1 // pred_fallthru
      _
    // Predicated region
    $region26: #{transformation_net.4} parent=1 // pred_check
      _
    $region27: #{transformation_net.4} parent=1 // pred_check_branch
      %159 = sbr.rel (0) target = $region29
    $region28: #{transformation_net.4} parent=1 // pred_region
      _
    $region29: #{transformation_net.4} parent=1 // pred_fallthru
      _
    // Predicated region
    $region30: #{transformation_net.4} parent=1 // pred_check
      _
    $region31: #{transformation_net.4} parent=1 // pred_check_branch
      %161 = sbr.rel (0) target = $region33
    $region32: #{transformation_net.4} parent=1 // pred_region
      _
    $region33: #{transformation_net.4} parent=1 // pred_fallthru
      _
    // Predicated region
    $region34: #{transformation_net.4} parent=1 // pred_check
      _
    $region35: #{transformation_net.4} parent=1 // pred_check_branch
      %163 = sbr.rel (0) target = $region37
    $region36: #{transformation_net.4} parent=1 // pred_region
      _
    $region37: #{transformation_net.4} parent=1 // pred_fallthru
      _
    %164 = vsyncpa [#allocation3], 1

// kernel: transformation_net.5
$region0: #{transformation_net.5}
  #allocation0 [shape = 'u32[]', space=smem, size = 0x4, offset = 0x4, fixed_abs, tag = 'smem constant byte address 0x4 - core index']
  #allocation1 [shape = 'u32[144,128]{1,0:T(1,128)}', space=vmem, size = 0x12000, scoped, tag = 'internal scratch']
  %s0 = inlined_call_operand.vmem [shape: bf16[32,8], index: 0, kind: input, shape index: {}]
  %s1 = inlined_call_operand.vmem [shape: bf16[8,64], index: 1, kind: input, shape index: {}]
  %s2 = inlined_call_operand.hbm [shape: f32[1,64], index: 2, kind: input, shape index: {}]
  %s3 = inlined_call_operand.vmem [shape: f32[1,64], index: 3, kind: input, shape index: {}]
  %s4 = inlined_call_operand.vmem [shape: f32[1,64], index: 4, kind: input, shape index: {}]
  %s5 = inlined_call_operand.hbm [shape: f32[1,64], index: 5, kind: input, shape index: {}]
  %s6 = inlined_call_operand.hbm [shape: f32[1,64], index: 6, kind: input, shape index: {}]
  %s7 = inlined_call_operand.vmem [shape: bf16[64,128], index: 7, kind: input, shape index: {}]
  %s8 = inlined_call_operand.hbm [shape: f32[1,128], index: 8, kind: input, shape index: {}]
  %s9 = inlined_call_operand.vmem [shape: f32[1,128], index: 9, kind: output, shape index: {0}]
  %s10 = inlined_call_operand.vmem [shape: f32[1,128], index: 10, kind: output, shape index: {1}]
  %11 = xla_tuple %s9, %s10
  %s12 = sld [smem:[#allocation0]]
  $region74: #{transformation_net.5} parent=0
    _
  %s14 = ssub.s32 1, %s12
  %s15 = scalar_select 0, %s14, %s12
  $region1: #{transformation_net.5} parent=0
    #allocation2 [shape = 'u8[512]{0}', space=vmem, size = 0x400, scoped, tag = 'input window, operand 2, single buffered']
    #allocation3 [shape = 's32[1]{0}', space=sflag, size = 0x4, scoped, tag = 'scoped memory for transformation_net.5']
    #allocation4 [shape = 'u8[512]{0}', space=vmem, size = 0x400, scoped, tag = 'input window, operand 5, single buffered']
    #allocation5 [shape = 's32[1]{0}', space=sflag, size = 0x4, scoped, tag = 'scoped memory for transformation_net.5']
    #allocation6 [shape = 'u8[512]{0}', space=vmem, size = 0x400, scoped, tag = 'input window, operand 6, single buffered']
    #allocation7 [shape = 'u8[512]{0}', space=vmem, size = 0x400, scoped, tag = 'input window, operand 8, single buffered']
    #allocation8 [shape = 's32[1]{0}', space=sflag, size = 0x4, scoped, tag = 'scoped memory for transformation_net.5']
    %16 = vsyncpa [#allocation3], 0
    %17 = vsyncpa [#allocation5], 0
    %18 = vsyncpa [#allocation8], 0
    // Predicated region
    $region2: #{transformation_net.5} parent=1 // pred_check
      _
    $region3: #{transformation_net.5} parent=1 // pred_check_branch
      %20 = sbr.rel (0) target = $region5
    $region4: #{transformation_net.5} parent=1 // pred_region
      _
    $region5: #{transformation_net.5} parent=1 // pred_fallthru
      _
    // Predicated region
    $region6: #{transformation_net.5} parent=1 // pred_check
      _
    $region7: #{transformation_net.5} parent=1 // pred_check_branch
      %22 = sbr.rel (0) target = $region9
    $region8: #{transformation_net.5} parent=1 // pred_region
      _
    $region9: #{transformation_net.5} parent=1 // pred_fallthru
      _
    // Predicated region
    $region10: #{transformation_net.5} parent=1 // pred_check
      _
    $region11: #{transformation_net.5} parent=1 // pred_check_branch
      %24 = sbr.rel (0) target = $region13
    $region12: #{transformation_net.5} parent=1 // pred_region
      %s26 = ssub.s32 16, 16
      %27 = vsyncadd [#allocation3], %s26
      %s29 = sshll.u32 [#allocation2], 4
      %s30 = int_to_ptr.vmem [resolvable:$true] %s29
      %32 = dma.hbm_to_vmem [thread:$0]  %s2, 16, %s30, [#allocation3]
    $region13: #{transformation_net.5} parent=1 // pred_fallthru
      _
    // Predicated region
    $region14: #{transformation_net.5} parent=1 // pred_check
      _
    $region15: #{transformation_net.5} parent=1 // pred_check_branch
      %34 = sbr.rel (0) target = $region17
    $region16: #{transformation_net.5} parent=1 // pred_region
      _
    $region17: #{transformation_net.5} parent=1 // pred_fallthru
      _
    // Predicated region
    $region18: #{transformation_net.5} parent=1 // pred_check
      _
    $region19: #{transformation_net.5} parent=1 // pred_check_branch
      %36 = sbr.rel (0) target = $region21
    $region20: #{transformation_net.5} parent=1 // pred_region
      _
    $region21: #{transformation_net.5} parent=1 // pred_fallthru
      _
    // Predicated region
    $region22: #{transformation_net.5} parent=1 // pred_check
      _
    $region23: #{transformation_net.5} parent=1 // pred_check_branch
      %38 = sbr.rel (0) target = $region25
    $region24: #{transformation_net.5} parent=1 // pred_region
      %s40 = ssub.s32 16, 16
      %41 = vsyncadd [#allocation5], %s40
      %s43 = sshll.u32 [#allocation4], 4
      %s44 = int_to_ptr.vmem [resolvable:$true] %s43
      %46 = dma.hbm_to_vmem [thread:$0]  %s5, 16, %s44, [#allocation5]
    $region25: #{transformation_net.5} parent=1 // pred_fallthru
      _
    // Predicated region
    $region26: #{transformation_net.5} parent=1 // pred_check
      _
    $region27: #{transformation_net.5} parent=1 // pred_check_branch
      %48 = sbr.rel (0) target = $region29
    $region28: #{transformation_net.5} parent=1 // pred_region
      %s50 = ssub.s32 16, 16
      %51 = vsyncadd [#allocation5], %s50
      %s53 = sshll.u32 [#allocation6], 4
      %s54 = int_to_ptr.vmem [resolvable:$true] %s53
      %56 = dma.hbm_to_vmem [thread:$0]  %s6, 16, %s54, [#allocation5]
    $region29: #{transformation_net.5} parent=1 // pred_fallthru
      _
    // Predicated region
    $region30: #{transformation_net.5} parent=1 // pred_check
      _
    $region31: #{transformation_net.5} parent=1 // pred_check_branch
      %58 = sbr.rel (0) target = $region33
    $region32: #{transformation_net.5} parent=1 // pred_region
      _
    $region33: #{transformation_net.5} parent=1 // pred_fallthru
      _
    // Predicated region
    $region34: #{transformation_net.5} parent=1 // pred_check
      _
    $region35: #{transformation_net.5} parent=1 // pred_check_branch
      %60 = sbr.rel (0) target = $region37
    $region36: #{transformation_net.5} parent=1 // pred_region
      %s62 = ssub.s32 16, 16
      %63 = vsyncadd [#allocation8], %s62
      %s65 = sshll.u32 [#allocation7], 4
      %s66 = int_to_ptr.vmem [resolvable:$true] %s65
      %68 = dma.hbm_to_vmem [thread:$0]  %s8, 16, %s66, [#allocation8]
    $region37: #{transformation_net.5} parent=1 // pred_fallthru
      _
    // Predicated region
    $region38: #{transformation_net.5} parent=1 // pred_check
      _
    $region39: #{transformation_net.5} parent=1 // pred_check_branch
      %70 = sbr.rel (0) target = $region41
    $region40: #{transformation_net.5} parent=1 // pred_region
      %71 = dma.done [#allocation3], 16
    $region41: #{transformation_net.5} parent=1 // pred_fallthru
      _
    // Predicated region
    $region42: #{transformation_net.5} parent=1 // pred_check
      _
    $region43: #{transformation_net.5} parent=1 // pred_check_branch
      %73 = sbr.rel (0) target = $region45
    $region44: #{transformation_net.5} parent=1 // pred_region
      %74 = dma.done [#allocation5], 16
    $region45: #{transformation_net.5} parent=1 // pred_fallthru
      _
    // Predicated region
    $region46: #{transformation_net.5} parent=1 // pred_check
      _
    $region47: #{transformation_net.5} parent=1 // pred_check_branch
      %76 = sbr.rel (0) target = $region49
    $region48: #{transformation_net.5} parent=1 // pred_region
      %77 = dma.done [#allocation5], 16
    $region49: #{transformation_net.5} parent=1 // pred_fallthru
      _
    // Predicated region
    $region50: #{transformation_net.5} parent=1 // pred_check
      _
    $region51: #{transformation_net.5} parent=1 // pred_check_branch
      %79 = sbr.rel (0) target = $region53
    $region52: #{transformation_net.5} parent=1 // pred_region
      %80 = dma.done [#allocation8], 16
    $region53: #{transformation_net.5} parent=1 // pred_fallthru
      _
    %v82 = vld [vmem:[%s0] sm:$0xf]
    %v83 = vld [vmem:[%s0 + $0x4] sm:$0xf]
    %v84 = vld [vmem:[%s0 + $0x8] sm:$0xf]
    %v85 = vld [vmem:[%s0 + $0xc] sm:$0xf]
    %v86 = vld [vmem:[%s1] sm:$0xf]
    %v87 = vld [vmem:[#allocation2] sm:$0x1]
    %v89 = vlaneseq
    %v90 = vshrl.u32 %v89, 7
    %v91 = vsub.s32 0, %v90
    %v92 = vrot.slane %v87, %v91
    %v98 = vunpack.c.l.b16 %v82
    %v99 = vunpack.c.l.b16 %v83
    %v100 = vunpack.c.l.b16 %v84
    %v101 = vunpack.c.l.b16 %v85
    %v102 = vpack.c.b16 %v99, %v98
    %v103 = vpack.c.b16 %v101, %v100
    %vm104 = vcmask 64512
    %v106 = vsel %vm104, %v102, 0
    %v109 = vsel %vm104, %v103, 0
    %vm111 = vcmask 1043456
    %v113 = vsel %vm111, %v86, 0
    %115 = vmatprep.subr.bf16.mxu0 0
    %116 = vmatpush1.bf16.msra.mxu0 %v113
    %117 = vmatprep.subr.bf16.mxu0 0
    %118 = vmatpush1.bf16.msra.mxu0 0
    %119 = vmatprep.subr.bf16.mxu0 0
    %120 = vmatpush1.bf16.msra.mxu0 0
    %121 = vmatprep.subr.bf16.mxu0 0
    %122 = vmatpush1.bf16.msra.mxu0 0
    %123 = vmatprep.subr.bf16.mxu0 0
    %124 = vmatpush1.bf16.msra.mxu0 0
    %125 = vmatprep.subr.bf16.mxu0 0
    %126 = vmatpush1.bf16.msra.mxu0 0
    %127 = vmatprep.subr.bf16.mxu0 0
    %128 = vmatpush1.bf16.msra.mxu0 0
    %129 = vmatprep.subr.bf16.mxu0 0
    %130 = vmatpush1.bf16.msra.mxu0 0
    %131 = vmatprep.subr.bf16.mxu0 0
    %132 = vmatpush1.bf16.msra.mxu0 0
    %133 = vmatprep.subr.bf16.mxu0 0
    %134 = vmatpush1.bf16.msra.mxu0 0
    %135 = vmatprep.subr.bf16.mxu0 0
    %136 = vmatpush1.bf16.msra.mxu0 0
    %137 = vmatprep.subr.bf16.mxu0 0
    %138 = vmatpush1.bf16.msra.mxu0 0
    %139 = vmatprep.subr.bf16.mxu0 0
    %140 = vmatpush1.bf16.msra.mxu0 0
    %141 = vmatprep.subr.bf16.mxu0 0
    %142 = vmatpush1.bf16.msra.mxu0 0
    %143 = vmatprep.subr.bf16.mxu0 0
    %144 = vmatpush1.bf16.msra.mxu0 0
    %145 = vmatprep.subr.bf16.mxu0 0
    %146 = vmatpush1.bf16.msra.mxu0 0
    %147 = vmatprep.mubr.bf16.mxu0 0
    %148 = vmatmul.mubr.bf16.gmra.mrb[0].mxu0 %v106
    %v149 = vpop.f32.mrb[0].mxu0
    %v150 = vadd.f32 %v92, %v149
    %v151 = vpop.f32.mrb[0].mxu0
    %v152 = vpop.f32.mrb[0].mxu0
    %v153 = vadd.f32 %v92, %v152
    %v154 = vpop.f32.mrb[0].mxu0
    %155 = vmatprep.mubr.bf16.mxu0 0
    %156 = vmatmul.mubr.bf16.gmra.mrb[0].mxu0 %v109
    %v157 = vpop.f32.mrb[0].mxu0
    %v158 = vadd.f32 %v92, %v157
    %v159 = vpop.f32.mrb[0].mxu0
    %v160 = vpop.f32.mrb[0].mxu0
    %v161 = vadd.f32 %v92, %v160
    %v162 = vpop.f32.mrb[0].mxu0
    %163 = vdwg.mxu0
    %v164 = vld [vmem:[#allocation4] sm:$0x1]
    %v165 = vld [vmem:[%s3] sm:$0x1]
    %v167 = vlaneseq
    %v168 = vshrl.u32 %v167, 7
    %v169 = vsub.s32 0, %v168
    %v170 = vrot.slane %v165, %v169
    %v172 = vsub.f32 %v150, %v170
    %v173 = vsub.f32 %v153, %v170
    %v174 = vsub.f32 %v158, %v170
    %v175 = vsub.f32 %v161, %v170
    %v177 = vlaneseq
    %v178 = vshrl.u32 %v177, 7
    %v179 = vsub.s32 0, %v178
    %v180 = vrot.slane %v164, %v179
    %v182 = vmul.f32 %v180, %v172
    %v183 = vmul.f32 %v180, %v173
    %v184 = vmul.f32 %v180, %v174
    %v185 = vmul.f32 %v180, %v175
    %v186 = vld [vmem:[%s4] sm:$0x1]
    %v188 = vlaneseq
    %v189 = vshrl.u32 %v188, 7
    %v190 = vsub.s32 0, %v189
    %v191 = vrot.slane %v186, %v190
    %v193 = vmul.f32 %v182, %v191
    %v194 = vmul.f32 %v183, %v191
    %v195 = vmul.f32 %v184, %v191
    %v196 = vmul.f32 %v185, %v191
    %v197 = vld [vmem:[#allocation6] sm:$0x1]
    %v199 = vlaneseq
    %v200 = vshrl.u32 %v199, 7
    %v201 = vsub.s32 0, %v200
    %v202 = vrot.slane %v197, %v201
    %v204 = vadd.f32 %v193, %v202
    %v205 = vadd.f32 %v194, %v202
    %v206 = vadd.f32 %v195, %v202
    %v207 = vadd.f32 %v196, %v202
    %v208 = vmax.f32 %v204, 0.0
    %v209 = vmax.f32 %v205, 0.0
    %v210 = vmax.f32 %v206, 0.0
    %v211 = vmax.f32 %v207, 0.0
    %v212 = vpack.c.bf16 %v209, %v208
    %v213 = vpack.c.bf16 %v211, %v210
    %v214 = vld [vmem:[%s7] sm:$0xf]
    %v215 = vld [vmem:[%s7 + $0x4] sm:$0xf]
    %v216 = vld [vmem:[%s7 + $0x8] sm:$0xf]
    %v217 = vld [vmem:[%s7 + $0xc] sm:$0xf]
    %v218 = vld [vmem:[%s7 + $0x10] sm:$0xf]
    %v219 = vld [vmem:[%s7 + $0x14] sm:$0xf]
    %v220 = vld [vmem:[%s7 + $0x18] sm:$0xf]
    %v221 = vld [vmem:[%s7 + $0x1c] sm:$0xf]
    %v222 = vld [vmem:[#allocation7] sm:$0x1]
    %v224 = vlaneseq
    %v225 = vshrl.u32 %v224, 7
    %v226 = vsub.s32 0, %v225
    %v227 = vrot.slane %v222, %v226
    %v237 = vunpack.c.l.b16 %v214
    %v238 = vunpack.c.l.b16 %v215
    %v239 = vunpack.c.l.b16 %v216
    %v240 = vunpack.c.l.b16 %v217
    %v241 = vunpack.c.l.b16 %v218
    %v242 = vunpack.c.l.b16 %v219
    %v243 = vunpack.c.l.b16 %v220
    %v244 = vunpack.c.l.b16 %v221
    %v245 = vpack.c.b16 %v238, %v237
    %v246 = vpack.c.b16 %v240, %v239
    %v247 = vpack.c.b16 %v242, %v241
    %v248 = vpack.c.b16 %v244, %v243
    %vm253 = vcmask 523264
    %v255 = vsel %vm253, %v212, 0
    %v258 = vsel %vm253, %v213, 0
    %260 = vmatprep.subr.bf16.mxu0 0
    %261 = vmatpush1.bf16.msra.mxu0 %v245
    %262 = vmatprep.subr.bf16.mxu0 0
    %263 = vmatpush1.bf16.msra.mxu0 %v246
    %264 = vmatprep.subr.bf16.mxu0 0
    %265 = vmatpush1.bf16.msra.mxu0 %v247
    %266 = vmatprep.subr.bf16.mxu0 0
    %267 = vmatpush1.bf16.msra.mxu0 %v248
    %268 = vmatprep.subr.bf16.mxu0 0
    %269 = vmatpush1.bf16.msra.mxu0 0
    %270 = vmatprep.subr.bf16.mxu0 0
    %271 = vmatpush1.bf16.msra.mxu0 0
    %272 = vmatprep.subr.bf16.mxu0 0
    %273 = vmatpush1.bf16.msra.mxu0 0
    %274 = vmatprep.subr.bf16.mxu0 0
    %275 = vmatpush1.bf16.msra.mxu0 0
    %276 = vmatprep.subr.bf16.mxu0 0
    %277 = vmatpush1.bf16.msra.mxu0 0
    %278 = vmatprep.subr.bf16.mxu0 0
    %279 = vmatpush1.bf16.msra.mxu0 0
    %280 = vmatprep.subr.bf16.mxu0 0
    %281 = vmatpush1.bf16.msra.mxu0 0
    %282 = vmatprep.subr.bf16.mxu0 0
    %283 = vmatpush1.bf16.msra.mxu0 0
    %284 = vmatprep.subr.bf16.mxu0 0
    %285 = vmatpush1.bf16.msra.mxu0 0
    %286 = vmatprep.subr.bf16.mxu0 0
    %287 = vmatpush1.bf16.msra.mxu0 0
    %288 = vmatprep.subr.bf16.mxu0 0
    %289 = vmatpush1.bf16.msra.mxu0 0
    %290 = vmatprep.subr.bf16.mxu0 0
    %291 = vmatpush1.bf16.msra.mxu0 0
    %292 = vmatprep.mubr.bf16.mxu0 0
    %293 = vmatmul.mubr.bf16.gmra.mrb[0].mxu0 %v255
    %v294 = vpop.f32.mrb[0].mxu0
    %v295 = vadd.f32 %v227, %v294
    %v296 = vpop.f32.mrb[0].mxu0
    %v297 = vpop.f32.mrb[0].mxu0
    %v298 = vadd.f32 %v227, %v297
    %v299 = vpop.f32.mrb[0].mxu0
    %300 = vmatprep.mubr.bf16.mxu0 0
    %301 = vmatmul.mubr.bf16.gmra.mrb[0].mxu0 %v258
    %v302 = vpop.f32.mrb[0].mxu0
    %v303 = vadd.f32 %v227, %v302
    %v304 = vpop.f32.mrb[0].mxu0
    %v305 = vpop.f32.mrb[0].mxu0
    %v306 = vadd.f32 %v227, %v305
    %v307 = vpop.f32.mrb[0].mxu0
    %308 = vdwg.mxu0
    %p309 = scmp.eq.s32.totalorder 0, 0
    // Predicated region
    $region54: #{transformation_net.5} parent=1 // pred_check
      %p310 = pneg %p309
    $region55: #{transformation_net.5} parent=1 // pred_check_branch
      %312 = sbr.rel (%p310) target = $region57
    $region56: #{transformation_net.5} parent=1 // pred_region
      %313 = vst [vmem:[%s9] sm:$0x1] 0.0
      %314 = vst [vmem:[%s10] sm:$0x1] 0.0
    $region57: #{transformation_net.5} parent=1 // pred_fallthru
      _
    %v315 = vld [vmem:[%s9] sm:$0x1]
    %v316 = vadd.f32 %v295, %v298
    %v317 = vadd.f32 %v316, %v303
    %v318 = vadd.f32 %v317, %v306
    %v319 = vrot.slane %v318, 4
    %v320 = vadd.f32 %v318, %v319
    %v321 = vrot.slane %v320, 2
    %v322 = vadd.f32 %v320, %v321
    %v323 = vrot.slane %v322, 1
    %v324 = vadd.f32 %v322, %v323
    %v325 = vadd.f32 %v315, %v324
    %326 = vst [vmem:[%s9] sm:$0x1] %v325
    %v327 = vld [vmem:[%s10] sm:$0x1]
    %v328 = vmul.f32 %v295, %v295
    %v329 = vmul.f32 %v298, %v298
    %v330 = vmul.f32 %v303, %v303
    %v331 = vmul.f32 %v306, %v306
    %v332 = vadd.f32 %v328, %v329
    %v333 = vadd.f32 %v332, %v330
    %v334 = vadd.f32 %v333, %v331
    %v335 = vrot.slane %v334, 4
    %v336 = vadd.f32 %v334, %v335
    %v337 = vrot.slane %v336, 2
    %v338 = vadd.f32 %v336, %v337
    %v339 = vrot.slane %v338, 1
    %v340 = vadd.f32 %v338, %v339
    %v341 = vadd.f32 %v327, %v340
    %342 = vst [vmem:[%s10] sm:$0x1] %v341
    // Predicated region
    $region58: #{transformation_net.5} parent=1 // pred_check
      _
    $region59: #{transformation_net.5} parent=1 // pred_check_branch
      %344 = sbr.rel (0) target = $region61
    $region60: #{transformation_net.5} parent=1 // pred_region
      _
    $region61: #{transformation_net.5} parent=1 // pred_fallthru
      _
    // Predicated region
    $region62: #{transformation_net.5} parent=1 // pred_check
      _
    $region63: #{transformation_net.5} parent=1 // pred_check_branch
      %346 = sbr.rel (0) target = $region65
    $region64: #{transformation_net.5} parent=1 // pred_region
      _
    $region65: #{transformation_net.5} parent=1 // pred_fallthru
      _
    // Predicated region
    $region66: #{transformation_net.5} parent=1 // pred_check
      _
    $region67: #{transformation_net.5} parent=1 // pred_check_branch
      %348 = sbr.rel (0) target = $region69
    $region68: #{transformation_net.5} parent=1 // pred_region
      _
    $region69: #{transformation_net.5} parent=1 // pred_fallthru
      _
    // Predicated region
    $region70: #{transformation_net.5} parent=1 // pred_check
      _
    $region71: #{transformation_net.5} parent=1 // pred_check_branch
      %350 = sbr.rel (0) target = $region73
    $region72: #{transformation_net.5} parent=1 // pred_region
      _
    $region73: #{transformation_net.5} parent=1 // pred_fallthru
      _
    %351 = vsyncpa [#allocation3], 1
    %352 = vsyncpa [#allocation5], 1
    %353 = vsyncpa [#allocation8], 1

// kernel: transformation_net.6
$region0: #{transformation_net.6}
  #allocation0 [shape = 'u32[]', space=smem, size = 0x4, offset = 0x4, fixed_abs, tag = 'smem constant byte address 0x4 - core index']
  #allocation1 [shape = 'u32[144,128]{1,0:T(1,128)}', space=vmem, size = 0x12000, scoped, tag = 'internal scratch']
  %s0 = inlined_call_operand.vmem [shape: bf16[32,8], index: 0, kind: input, shape index: {}]
  %s1 = inlined_call_operand.vmem [shape: bf16[8,64], index: 1, kind: input, shape index: {}]
  %s2 = inlined_call_operand.hbm [shape: f32[1,64], index: 2, kind: input, shape index: {}]
  %s3 = inlined_call_operand.vmem [shape: f32[1,64], index: 3, kind: input, shape index: {}]
  %s4 = inlined_call_operand.vmem [shape: f32[1,64], index: 4, kind: input, shape index: {}]
  %s5 = inlined_call_operand.hbm [shape: f32[1,64], index: 5, kind: input, shape index: {}]
  %s6 = inlined_call_operand.hbm [shape: f32[1,64], index: 6, kind: input, shape index: {}]
  %s7 = inlined_call_operand.vmem [shape: bf16[64,128], index: 7, kind: input, shape index: {}]
  %s8 = inlined_call_operand.hbm [shape: f32[1,128], index: 8, kind: input, shape index: {}]
  %s9 = inlined_call_operand.vmem [shape: f32[1,128], index: 9, kind: input, shape index: {}]
  %s10 = inlined_call_operand.vmem [shape: f32[1,128], index: 10, kind: input, shape index: {}]
  %s11 = inlined_call_operand.hbm [shape: f32[1,128], index: 11, kind: input, shape index: {}]
  %s12 = inlined_call_operand.hbm [shape: f32[1,128], index: 12, kind: input, shape index: {}]
  %s13 = inlined_call_operand.vmem [shape: bf16[128,1024], index: 13, kind: input, shape index: {}]
  %s14 = inlined_call_operand.hbm [shape: f32[1,1024], index: 14, kind: input, shape index: {}]
  %s15 = inlined_call_operand.vmem [shape: f32[1,1024], index: 15, kind: input, shape index: {}]
  %s16 = inlined_call_operand.vmem [shape: f32[2,1,1024], index: 16, kind: output, shape index: {0}]
  %s17 = inlined_call_operand.vmem [shape: f32[2,1,1024], index: 17, kind: output, shape index: {1}]
  %s18 = inlined_call_operand.vmem [shape: f32[2,1,1024], index: 18, kind: output, shape index: {2}]
  %19 = xla_tuple %s16, %s17, %s18
  %s20 = sld [smem:[#allocation0]]
  $region145: #{transformation_net.6} parent=0
    _
  %s22 = ssub.s32 1, %s20
  %s23 = scalar_select 0, %s22, %s20
  $region1: #{transformation_net.6} parent=0
    #allocation2 [shape = 'u8[512]{0}', space=vmem, size = 0x400, scoped, tag = 'input window, operand 2, single buffered']
    #allocation3 [shape = 's32[2]{0}', space=sflag, size = 0x8, scoped, tag = 'scoped memory for transformation_net.6']
    #allocation4 [shape = 'u8[512]{0}', space=vmem, size = 0x400, scoped, tag = 'input window, operand 5, single buffered']
    #allocation5 [shape = 's32[1]{0}', space=sflag, size = 0x4, scoped, tag = 'scoped memory for transformation_net.6']
    #allocation6 [shape = 'u8[512]{0}', space=vmem, size = 0x400, scoped, tag = 'input window, operand 6, single buffered']
    #allocation7 [shape = 'u8[512]{0}', space=vmem, size = 0x400, scoped, tag = 'input window, operand 8, single buffered']
    #allocation8 [shape = 's32[1]{0}', space=sflag, size = 0x4, scoped, tag = 'scoped memory for transformation_net.6']
    #allocation9 [shape = 'u8[512]{0}', space=vmem, size = 0x400, scoped, tag = 'input window, operand 11, single buffered']
    #allocation10 [shape = 'u8[512]{0}', space=vmem, size = 0x400, scoped, tag = 'input window, operand 12, single buffered']
    #allocation11 [shape = 's32[1]{0}', space=sflag, size = 0x4, scoped, tag = 'scoped memory for transformation_net.6']
    #allocation12 [shape = 'u8[4096]{0}', space=vmem, size = 0x1000, scoped, tag = 'input window, operand 14, single buffered']
    %24 = vsyncpa [#allocation3], 0
    %25 = vsyncpa [#allocation5], 0
    %26 = vsyncpa [#allocation8], 0
    %27 = vsyncpa [#allocation11], 0
    loop: start=0, step=1, limit=4
    $region2: #{transformation_net.6} parent=1 // loop_pre_header
      _
    $region3: #{transformation_net.6} parent=1 // loop_header
      %s29 = sphi 0, %s33
      %p30 = scmp.ge.s32.totalorder %s29, 4
      %s36 = sphi 0, %s48
      %s37 = sphi 0, %s44
      %s38 = sphi 0, %s36
      %s39 = sphi 0, %s37
      %s40 = sphi 0, %s38
      %s41 = sphi 0, %s39
      %s53 = sphi 0, %s55
      %s56 = sphi 0, %s53
      %s57 = sphi 0, %s56
      %s73 = sphi 0, %s57
      %s77 = sphi 0, %s77
      %s79 = sphi 0, %s77
      %s80 = sphi 0, %s79
      %s94 = sphi 0, %s80
      %s98 = sphi 0, %s98
      %s100 = sphi 0, %s98
      %s101 = sphi 0, %s100
      %s115 = sphi 0, %s101
      %s119 = sphi 0, %s119
      %s121 = sphi 0, %s119
      %s122 = sphi 0, %s121
      %s136 = sphi 0, %s122
      %s140 = sphi 0, %s140
      %s142 = sphi 0, %s140
      %s143 = sphi 0, %s142
      %s157 = sphi 0, %s143
      %s161 = sphi 0, %s161
      %s163 = sphi 0, %s161
      %s164 = sphi 0, %s163
      %s178 = sphi 0, %s164
      %s182 = sphi 0, %s182
      %s184 = sphi 0, %s182
      %s185 = sphi 0, %s184
      %s199 = sphi 0, %s185
      %s203 = sphi 0, %s203
      %s205 = sphi 0, %s203
      %s206 = sphi 0, %s205
      %s220 = sphi 0, %s206
      %s224 = sphi 0, %s224
      %s226 = sphi 0, %s224
      %s227 = sphi 0, %s226
      %s241 = sphi 0, %s227
      %s245 = sphi 0, %s245
      %s247 = sphi 0, %s245
      %s248 = sphi 0, %s247
      %s262 = sphi 0, %s248
      %s266 = sphi 0, %s266
      %s268 = sphi 0, %s266
      %s269 = sphi 0, %s268
      %s283 = sphi 0, %s269
      %s287 = sphi 0, %s287
      %s289 = sphi 0, %s287
      %s290 = sphi 0, %s289
      %s304 = sphi 0, %s290
      %s308 = sphi 0, %s308
      %s310 = sphi 0, %s308
      %s311 = sphi 0, %s310
      %s325 = sphi 0, %s311
      %s329 = sphi 0, %s329
      %s331 = sphi 0, %s329
      %s332 = sphi 0, %s331
      %s346 = sphi 0, %s332
      %s350 = sphi 0, %s350
      %s352 = sphi 0, %s350
      %s353 = sphi 0, %s352
      %s367 = sphi 0, %s353
      %s371 = sphi 0, %s371
      %s373 = sphi 0, %s371
      %s374 = sphi 0, %s373
      %s388 = sphi 0, %s374
      %s394 = sphi 0, %s396
      %s397 = sphi 0, %s394
      %s398 = sphi 0, %s397
      %s414 = sphi 0, %s398
      %s420 = sphi 0, %s422
      %s423 = sphi 0, %s420
      %s424 = sphi 0, %s423
      %s440 = sphi 0, %s424
      %s446 = sphi 0, %s448
      %s449 = sphi 0, %s446
      %s450 = sphi 0, %s449
      %s466 = sphi 0, %s450
    $region4: #{transformation_net.6} parent=1 // loop_header_branch
      %32 = sbr.rel (%p30) target = $region8
    $region5: #{transformation_net.6} parent=1 // loop_body
      %s34 = ssub.s32 %s29, 1
      %s35 = ssub.s32 %s29, 2
      %s42 = sadd.s32 1, %s37
      %p43 = scmp.ge.s32.totalorder %s42, 1
      %s44 = scalar_select %p43, 0, %s42
      %s45 = sadd.s32 1, %s36
      %s46 = scalar_select %p43, %s45, %s36
      %p47 = scmp.ge.s32.totalorder %s46, 2
      %s48 = scalar_select %p47, 0, %s46
      %s49 = sadd.s32 %s36, %s37
      %s50 = sadd.s32 %s48, %s44
      %s51 = ssub.s32 %s49, %s50
      %p52 = scmp.eq.s32.totalorder %s51, 0
      %s54 = sadd.s32 %s53, 1
      %s55 = scalar_select %p52, %s53, %s54
      %p58 = pneg %p52
      %p59 = scmp.eq.s32.totalorder %s29, 1
      %p60 = por %p58, %p59
      %p61 = scmp.ne.s32.totalorder %s53, %s56
      %p62 = scmp.eq.s32.totalorder %s29, 0
      %p63 = por %p61, %p62
      %p64 = scmp.ne.s32.totalorder %s53, %s56
      %p65 = scmp.eq.s32.totalorder %s34, 1
      %p66 = por %p64, %p65
      %p67 = scmp.ne.s32.totalorder %s56, %s57
      %p68 = scmp.eq.s32.totalorder %s34, 0
      %p69 = por %p67, %p68
      %p70 = scmp.ne.s32.totalorder %s56, %s57
      %p71 = scmp.eq.s32.totalorder %s35, 1
      %p72 = por %p70, %p71
      %p74 = scmp.ne.s32.totalorder %s57, %s73
      %p75 = scmp.eq.s32.totalorder %s35, 0
      %p76 = por %p74, %p75
      %s78 = sadd.s32 %s77, 1
      %p81 = scmp.eq.s32.totalorder %s29, 1
      %p82 = scmp.ne.s32.totalorder %s77, %s79
      %p83 = scmp.eq.s32.totalorder %s29, 0
      %p84 = por %p82, %p83
      %p85 = scmp.ne.s32.totalorder %s77, %s79
      %p86 = scmp.eq.s32.totalorder %s34, 1
      %p87 = por %p85, %p86
      %p88 = scmp.ne.s32.totalorder %s79, %s80
      %p89 = scmp.eq.s32.totalorder %s34, 0
      %p90 = por %p88, %p89
      %p91 = scmp.ne.s32.totalorder %s79, %s80
      %p92 = scmp.eq.s32.totalorder %s35, 1
      %p93 = por %p91, %p92
      %p95 = scmp.ne.s32.totalorder %s80, %s94
      %p96 = scmp.eq.s32.totalorder %s35, 0
      %p97 = por %p95, %p96
      %s99 = sadd.s32 %s98, 1
      %p102 = scmp.eq.s32.totalorder %s29, 1
      %p103 = scmp.ne.s32.totalorder %s98, %s100
      %p104 = scmp.eq.s32.totalorder %s29, 0
      %p105 = por %p103, %p104
      %p106 = scmp.ne.s32.totalorder %s98, %s100
      %p107 = scmp.eq.s32.totalorder %s34, 1
      %p108 = por %p106, %p107
      %p109 = scmp.ne.s32.totalorder %s100, %s101
      %p110 = scmp.eq.s32.totalorder %s34, 0
      %p111 = por %p109, %p110
      %p112 = scmp.ne.s32.totalorder %s100, %s101
      %p113 = scmp.eq.s32.totalorder %s35, 1
      %p114 = por %p112, %p113
      %p116 = scmp.ne.s32.totalorder %s101, %s115
      %p117 = scmp.eq.s32.totalorder %s35, 0
      %p118 = por %p116, %p117
      %s120 = sadd.s32 %s119, 1
      %p123 = scmp.eq.s32.totalorder %s29, 1
      %p124 = scmp.ne.s32.totalorder %s119, %s121
      %p125 = scmp.eq.s32.totalorder %s29, 0
      %p126 = por %p124, %p125
      %p127 = scmp.ne.s32.totalorder %s119, %s121
      %p128 = scmp.eq.s32.totalorder %s34, 1
      %p129 = por %p127, %p128
      %p130 = scmp.ne.s32.totalorder %s121, %s122
      %p131 = scmp.eq.s32.totalorder %s34, 0
      %p132 = por %p130, %p131
      %p133 = scmp.ne.s32.totalorder %s121, %s122
      %p134 = scmp.eq.s32.totalorder %s35, 1
      %p135 = por %p133, %p134
      %p137 = scmp.ne.s32.totalorder %s122, %s136
      %p138 = scmp.eq.s32.totalorder %s35, 0
      %p139 = por %p137, %p138
      %s141 = sadd.s32 %s140, 1
      %p144 = scmp.eq.s32.totalorder %s29, 1
      %p145 = scmp.ne.s32.totalorder %s140, %s142
      %p146 = scmp.eq.s32.totalorder %s29, 0
      %p147 = por %p145, %p146
      %p148 = scmp.ne.s32.totalorder %s140, %s142
      %p149 = scmp.eq.s32.totalorder %s34, 1
      %p150 = por %p148, %p149
      %p151 = scmp.ne.s32.totalorder %s142, %s143
      %p152 = scmp.eq.s32.totalorder %s34, 0
      %p153 = por %p151, %p152
      %p154 = scmp.ne.s32.totalorder %s142, %s143
      %p155 = scmp.eq.s32.totalorder %s35, 1
      %p156 = por %p154, %p155
      %p158 = scmp.ne.s32.totalorder %s143, %s157
      %p159 = scmp.eq.s32.totalorder %s35, 0
      %p160 = por %p158, %p159
      %s162 = sadd.s32 %s161, 1
      %p165 = scmp.eq.s32.totalorder %s29, 1
      %p166 = scmp.ne.s32.totalorder %s161, %s163
      %p167 = scmp.eq.s32.totalorder %s29, 0
      %p168 = por %p166, %p167
      %p169 = scmp.ne.s32.totalorder %s161, %s163
      %p170 = scmp.eq.s32.totalorder %s34, 1
      %p171 = por %p169, %p170
      %p172 = scmp.ne.s32.totalorder %s163, %s164
      %p173 = scmp.eq.s32.totalorder %s34, 0
      %p174 = por %p172, %p173
      %p175 = scmp.ne.s32.totalorder %s163, %s164
      %p176 = scmp.eq.s32.totalorder %s35, 1
      %p177 = por %p175, %p176
      %p179 = scmp.ne.s32.totalorder %s164, %s178
      %p180 = scmp.eq.s32.totalorder %s35, 0
      %p181 = por %p179, %p180
      %s183 = sadd.s32 %s182, 1
      %p186 = scmp.eq.s32.totalorder %s29, 1
      %p187 = scmp.ne.s32.totalorder %s182, %s184
      %p188 = scmp.eq.s32.totalorder %s29, 0
      %p189 = por %p187, %p188
      %p190 = scmp.ne.s32.totalorder %s182, %s184
      %p191 = scmp.eq.s32.totalorder %s34, 1
      %p192 = por %p190, %p191
      %p193 = scmp.ne.s32.totalorder %s184, %s185
      %p194 = scmp.eq.s32.totalorder %s34, 0
      %p195 = por %p193, %p194
      %p196 = scmp.ne.s32.totalorder %s184, %s185
      %p197 = scmp.eq.s32.totalorder %s35, 1
      %p198 = por %p196, %p197
      %p200 = scmp.ne.s32.totalorder %s185, %s199
      %p201 = scmp.eq.s32.totalorder %s35, 0
      %p202 = por %p200, %p201
      %s204 = sadd.s32 %s203, 1
      %p207 = scmp.eq.s32.totalorder %s29, 1
      %p208 = scmp.ne.s32.totalorder %s203, %s205
      %p209 = scmp.eq.s32.totalorder %s29, 0
      %p210 = por %p208, %p209
      %p211 = scmp.ne.s32.totalorder %s203, %s205
      %p212 = scmp.eq.s32.totalorder %s34, 1
      %p213 = por %p211, %p212
      %p214 = scmp.ne.s32.totalorder %s205, %s206
      %p215 = scmp.eq.s32.totalorder %s34, 0
      %p216 = por %p214, %p215
      %p217 = scmp.ne.s32.totalorder %s205, %s206
      %p218 = scmp.eq.s32.totalorder %s35, 1
      %p219 = por %p217, %p218
      %p221 = scmp.ne.s32.totalorder %s206, %s220
      %p222 = scmp.eq.s32.totalorder %s35, 0
      %p223 = por %p221, %p222
      %s225 = sadd.s32 %s224, 1
      %p228 = scmp.eq.s32.totalorder %s29, 1
      %p229 = scmp.ne.s32.totalorder %s224, %s226
      %p230 = scmp.eq.s32.totalorder %s29, 0
      %p231 = por %p229, %p230
      %p232 = scmp.ne.s32.totalorder %s224, %s226
      %p233 = scmp.eq.s32.totalorder %s34, 1
      %p234 = por %p232, %p233
      %p235 = scmp.ne.s32.totalorder %s226, %s227
      %p236 = scmp.eq.s32.totalorder %s34, 0
      %p237 = por %p235, %p236
      %p238 = scmp.ne.s32.totalorder %s226, %s227
      %p239 = scmp.eq.s32.totalorder %s35, 1
      %p240 = por %p238, %p239
      %p242 = scmp.ne.s32.totalorder %s227, %s241
      %p243 = scmp.eq.s32.totalorder %s35, 0
      %p244 = por %p242, %p243
      %s246 = sadd.s32 %s245, 1
      %p249 = scmp.eq.s32.totalorder %s29, 1
      %p250 = scmp.ne.s32.totalorder %s245, %s247
      %p251 = scmp.eq.s32.totalorder %s29, 0
      %p252 = por %p250, %p251
      %p253 = scmp.ne.s32.totalorder %s245, %s247
      %p254 = scmp.eq.s32.totalorder %s34, 1
      %p255 = por %p253, %p254
      %p256 = scmp.ne.s32.totalorder %s247, %s248
      %p257 = scmp.eq.s32.totalorder %s34, 0
      %p258 = por %p256, %p257
      %p259 = scmp.ne.s32.totalorder %s247, %s248
      %p260 = scmp.eq.s32.totalorder %s35, 1
      %p261 = por %p259, %p260
      %p263 = scmp.ne.s32.totalorder %s248, %s262
      %p264 = scmp.eq.s32.totalorder %s35, 0
      %p265 = por %p263, %p264
      %s267 = sadd.s32 %s266, 1
      %p270 = scmp.eq.s32.totalorder %s29, 1
      %p271 = scmp.ne.s32.totalorder %s266, %s268
      %p272 = scmp.eq.s32.totalorder %s29, 0
      %p273 = por %p271, %p272
      %p274 = scmp.ne.s32.totalorder %s266, %s268
      %p275 = scmp.eq.s32.totalorder %s34, 1
      %p276 = por %p274, %p275
      %p277 = scmp.ne.s32.totalorder %s268, %s269
      %p278 = scmp.eq.s32.totalorder %s34, 0
      %p279 = por %p277, %p278
      %p280 = scmp.ne.s32.totalorder %s268, %s269
      %p281 = scmp.eq.s32.totalorder %s35, 1
      %p282 = por %p280, %p281
      %p284 = scmp.ne.s32.totalorder %s269, %s283
      %p285 = scmp.eq.s32.totalorder %s35, 0
      %p286 = por %p284, %p285
      %s288 = sadd.s32 %s287, 1
      %p291 = scmp.eq.s32.totalorder %s29, 1
      %p292 = scmp.ne.s32.totalorder %s287, %s289
      %p293 = scmp.eq.s32.totalorder %s29, 0
      %p294 = por %p292, %p293
      %p295 = scmp.ne.s32.totalorder %s287, %s289
      %p296 = scmp.eq.s32.totalorder %s34, 1
      %p297 = por %p295, %p296
      %p298 = scmp.ne.s32.totalorder %s289, %s290
      %p299 = scmp.eq.s32.totalorder %s34, 0
      %p300 = por %p298, %p299
      %p301 = scmp.ne.s32.totalorder %s289, %s290
      %p302 = scmp.eq.s32.totalorder %s35, 1
      %p303 = por %p301, %p302
      %p305 = scmp.ne.s32.totalorder %s290, %s304
      %p306 = scmp.eq.s32.totalorder %s35, 0
      %p307 = por %p305, %p306
      %s309 = sadd.s32 %s308, 1
      %p312 = scmp.eq.s32.totalorder %s29, 1
      %p313 = scmp.ne.s32.totalorder %s308, %s310
      %p314 = scmp.eq.s32.totalorder %s29, 0
      %p315 = por %p313, %p314
      %p316 = scmp.ne.s32.totalorder %s308, %s310
      %p317 = scmp.eq.s32.totalorder %s34, 1
      %p318 = por %p316, %p317
      %p319 = scmp.ne.s32.totalorder %s310, %s311
      %p320 = scmp.eq.s32.totalorder %s34, 0
      %p321 = por %p319, %p320
      %p322 = scmp.ne.s32.totalorder %s310, %s311
      %p323 = scmp.eq.s32.totalorder %s35, 1
      %p324 = por %p322, %p323
      %p326 = scmp.ne.s32.totalorder %s311, %s325
      %p327 = scmp.eq.s32.totalorder %s35, 0
      %p328 = por %p326, %p327
      %s330 = sadd.s32 %s329, 1
      %p333 = scmp.eq.s32.totalorder %s29, 1
      %p334 = scmp.ne.s32.totalorder %s329, %s331
      %p335 = scmp.eq.s32.totalorder %s29, 0
      %p336 = por %p334, %p335
      %p337 = scmp.ne.s32.totalorder %s329, %s331
      %p338 = scmp.eq.s32.totalorder %s34, 1
      %p339 = por %p337, %p338
      %p340 = scmp.ne.s32.totalorder %s331, %s332
      %p341 = scmp.eq.s32.totalorder %s34, 0
      %p342 = por %p340, %p341
      %p343 = scmp.ne.s32.totalorder %s331, %s332
      %p344 = scmp.eq.s32.totalorder %s35, 1
      %p345 = por %p343, %p344
      %p347 = scmp.ne.s32.totalorder %s332, %s346
      %p348 = scmp.eq.s32.totalorder %s35, 0
      %p349 = por %p347, %p348
      %s351 = sadd.s32 %s350, 1
      %p354 = scmp.eq.s32.totalorder %s29, 1
      %p355 = scmp.ne.s32.totalorder %s350, %s352
      %p356 = scmp.eq.s32.totalorder %s29, 0
      %p357 = por %p355, %p356
      %p358 = scmp.ne.s32.totalorder %s350, %s352
      %p359 = scmp.eq.s32.totalorder %s34, 1
      %p360 = por %p358, %p359
      %p361 = scmp.ne.s32.totalorder %s352, %s353
      %p362 = scmp.eq.s32.totalorder %s34, 0
      %p363 = por %p361, %p362
      %p364 = scmp.ne.s32.totalorder %s352, %s353
      %p365 = scmp.eq.s32.totalorder %s35, 1
      %p366 = por %p364, %p365
      %p368 = scmp.ne.s32.totalorder %s353, %s367
      %p369 = scmp.eq.s32.totalorder %s35, 0
      %p370 = por %p368, %p369
      %s372 = sadd.s32 %s371, 1
      %p375 = scmp.eq.s32.totalorder %s29, 1
      %p376 = scmp.ne.s32.totalorder %s371, %s373
      %p377 = scmp.eq.s32.totalorder %s29, 0
      %p378 = por %p376, %p377
      %p379 = scmp.ne.s32.totalorder %s371, %s373
      %p380 = scmp.eq.s32.totalorder %s34, 1
      %p381 = por %p379, %p380
      %p382 = scmp.ne.s32.totalorder %s373, %s374
      %p383 = scmp.eq.s32.totalorder %s34, 0
      %p384 = por %p382, %p383
      %p385 = scmp.ne.s32.totalorder %s373, %s374
      %p386 = scmp.eq.s32.totalorder %s35, 1
      %p387 = por %p385, %p386
      %p389 = scmp.ne.s32.totalorder %s374, %s388
      %p390 = scmp.eq.s32.totalorder %s35, 0
      %p391 = por %p389, %p390
      %s392 = ssub.s32 %s36, %s48
      %p393 = scmp.eq.s32.totalorder %s392, 0
      %s395 = sadd.s32 %s394, 1
      %s396 = scalar_select %p393, %s394, %s395
      %p399 = pneg %p393
      %p400 = scmp.eq.s32.totalorder %s29, 1
      %p401 = por %p399, %p400
      %p402 = scmp.ne.s32.totalorder %s394, %s397
      %p403 = scmp.eq.s32.totalorder %s29, 0
      %p404 = por %p402, %p403
      %p405 = scmp.ne.s32.totalorder %s394, %s397
      %p406 = scmp.eq.s32.totalorder %s34, 1
      %p407 = por %p405, %p406
      %p408 = scmp.ne.s32.totalorder %s397, %s398
      %p409 = scmp.eq.s32.totalorder %s34, 0
      %p410 = por %p408, %p409
      %p411 = scmp.ne.s32.totalorder %s397, %s398
      %p412 = scmp.eq.s32.totalorder %s35, 1
      %p413 = por %p411, %p412
      %p415 = scmp.ne.s32.totalorder %s398, %s414
      %p416 = scmp.eq.s32.totalorder %s35, 0
      %p417 = por %p415, %p416
      %s418 = ssub.s32 %s36, %s48
      %p419 = scmp.eq.s32.totalorder %s418, 0
      %s421 = sadd.s32 %s420, 1
      %s422 = scalar_select %p419, %s420, %s421
      %p425 = pneg %p419
      %p426 = scmp.eq.s32.totalorder %s29, 1
      %p427 = por %p425, %p426
      %p428 = scmp.ne.s32.totalorder %s420, %s423
      %p429 = scmp.eq.s32.totalorder %s29, 0
      %p430 = por %p428, %p429
      %p431 = scmp.ne.s32.totalorder %s420, %s423
      %p432 = scmp.eq.s32.totalorder %s34, 1
      %p433 = por %p431, %p432
      %p434 = scmp.ne.s32.totalorder %s423, %s424
      %p435 = scmp.eq.s32.totalorder %s34, 0
      %p436 = por %p434, %p435
      %p437 = scmp.ne.s32.totalorder %s423, %s424
      %p438 = scmp.eq.s32.totalorder %s35, 1
      %p439 = por %p437, %p438
      %p441 = scmp.ne.s32.totalorder %s424, %s440
      %p442 = scmp.eq.s32.totalorder %s35, 0
      %p443 = por %p441, %p442
      %s444 = ssub.s32 %s36, %s48
      %p445 = scmp.eq.s32.totalorder %s444, 0
      %s447 = sadd.s32 %s446, 1
      %s448 = scalar_select %p445, %s446, %s447
      %p451 = pneg %p445
      %p452 = scmp.eq.s32.totalorder %s29, 1
      %p453 = por %p451, %p452
      %p454 = scmp.ne.s32.totalorder %s446, %s449
      %p455 = scmp.eq.s32.totalorder %s29, 0
      %p456 = por %p454, %p455
      %p457 = scmp.ne.s32.totalorder %s446, %s449
      %p458 = scmp.eq.s32.totalorder %s34, 1
      %p459 = por %p457, %p458
      %p460 = scmp.ne.s32.totalorder %s449, %s450
      %p461 = scmp.eq.s32.totalorder %s34, 0
      %p462 = por %p460, %p461
      %p463 = scmp.ne.s32.totalorder %s449, %s450
      %p464 = scmp.eq.s32.totalorder %s35, 1
      %p465 = por %p463, %p464
      %p467 = scmp.ne.s32.totalorder %s450, %s466
      %p468 = scmp.eq.s32.totalorder %s35, 0
      %p469 = por %p467, %p468
      %p470 = scmp.le.s32.totalorder 1, %s29
      %p471 = scmp.lt.s32.totalorder %s29, 3
      %p472 = pnand %p470, %p471
      %p473 = pneg %p472
      // Predicated region
      $region9: #{transformation_net.6} parent=5 // pred_check
        _
      $region10: #{transformation_net.6} parent=5 // pred_check_branch
        %475 = sbr.rel (%p472) target = $region12
      $region11: #{transformation_net.6} parent=5 // pred_region
        %s476 = ssub.s32 %s29, 1
        // Predicated region
        $region13: #{transformation_net.6} parent=11 // pred_check
          %p477 = pneg %p90
        $region14: #{transformation_net.6} parent=11 // pred_check_branch
          %479 = sbr.rel (%p477) target = $region16
        $region15: #{transformation_net.6} parent=11 // pred_region
          _
        $region16: #{transformation_net.6} parent=11 // pred_fallthru
          _
        // Predicated region
        $region17: #{transformation_net.6} parent=11 // pred_check
          %p480 = pneg %p111
        $region18: #{transformation_net.6} parent=11 // pred_check_branch
          %482 = sbr.rel (%p480) target = $region20
        $region19: #{transformation_net.6} parent=11 // pred_region
          %s484 = ssub.s32 16, 16
          %485 = vsyncadd [#allocation3], %s484
          %s487 = sshll.u32 [#allocation2], 4
          %s488 = int_to_ptr.vmem [resolvable:$true] %s487
          %490 = dma.hbm_to_vmem [thread:$0]  %s2, 16, %s488, [#allocation3]
        $region20: #{transformation_net.6} parent=11 // pred_fallthru
          _
        // Predicated region
        $region21: #{transformation_net.6} parent=11 // pred_check
          %p491 = pneg %p132
        $region22: #{transformation_net.6} parent=11 // pred_check_branch
          %493 = sbr.rel (%p491) target = $region24
        $region23: #{transformation_net.6} parent=11 // pred_region
          _
        $region24: #{transformation_net.6} parent=11 // pred_fallthru
          _
        // Predicated region
        $region25: #{transformation_net.6} parent=11 // pred_check
          %p494 = pneg %p153
        $region26: #{transformation_net.6} parent=11 // pred_check_branch
          %496 = sbr.rel (%p494) target = $region28
        $region27: #{transformation_net.6} parent=11 // pred_region
          _
        $region28: #{transformation_net.6} parent=11 // pred_fallthru
          _
        // Predicated region
        $region29: #{transformation_net.6} parent=11 // pred_check
          %p497 = pneg %p174
        $region30: #{transformation_net.6} parent=11 // pred_check_branch
          %499 = sbr.rel (%p497) target = $region32
        $region31: #{transformation_net.6} parent=11 // pred_region
          %s501 = ssub.s32 16, 16
          %502 = vsyncadd [#allocation5], %s501
          %s504 = sshll.u32 [#allocation4], 4
          %s505 = int_to_ptr.vmem [resolvable:$true] %s504
          %507 = dma.hbm_to_vmem [thread:$0]  %s5, 16, %s505, [#allocation5]
        $region32: #{transformation_net.6} parent=11 // pred_fallthru
          _
        // Predicated region
        $region33: #{transformation_net.6} parent=11 // pred_check
          %p508 = pneg %p195
        $region34: #{transformation_net.6} parent=11 // pred_check_branch
          %510 = sbr.rel (%p508) target = $region36
        $region35: #{transformation_net.6} parent=11 // pred_region
          %s512 = ssub.s32 16, 16
          %513 = vsyncadd [#allocation5], %s512
          %s515 = sshll.u32 [#allocation6], 4
          %s516 = int_to_ptr.vmem [resolvable:$true] %s515
          %518 = dma.hbm_to_vmem [thread:$0]  %s6, 16, %s516, [#allocation5]
        $region36: #{transformation_net.6} parent=11 // pred_fallthru
          _
        // Predicated region
        $region37: #{transformation_net.6} parent=11 // pred_check
          %p519 = pneg %p216
        $region38: #{transformation_net.6} parent=11 // pred_check_branch
          %521 = sbr.rel (%p519) target = $region40
        $region39: #{transformation_net.6} parent=11 // pred_region
          _
        $region40: #{transformation_net.6} parent=11 // pred_fallthru
          _
        // Predicated region
        $region41: #{transformation_net.6} parent=11 // pred_check
          %p522 = pneg %p237
        $region42: #{transformation_net.6} parent=11 // pred_check_branch
          %524 = sbr.rel (%p522) target = $region44
        $region43: #{transformation_net.6} parent=11 // pred_region
          %s526 = ssub.s32 16, 16
          %527 = vsyncadd [#allocation8], %s526
          %s529 = sshll.u32 [#allocation7], 4
          %s530 = int_to_ptr.vmem [resolvable:$true] %s529
          %532 = dma.hbm_to_vmem [thread:$0]  %s8, 16, %s530, [#allocation8]
        $region44: #{transformation_net.6} parent=11 // pred_fallthru
          _
        // Predicated region
        $region45: #{transformation_net.6} parent=11 // pred_check
          %p533 = pneg %p258
        $region46: #{transformation_net.6} parent=11 // pred_check_branch
          %535 = sbr.rel (%p533) target = $region48
        $region47: #{transformation_net.6} parent=11 // pred_region
          _
        $region48: #{transformation_net.6} parent=11 // pred_fallthru
          _
        // Predicated region
        $region49: #{transformation_net.6} parent=11 // pred_check
          %p536 = pneg %p279
        $region50: #{transformation_net.6} parent=11 // pred_check_branch
          %538 = sbr.rel (%p536) target = $region52
        $region51: #{transformation_net.6} parent=11 // pred_region
          _
        $region52: #{transformation_net.6} parent=11 // pred_fallthru
          _
        // Predicated region
        $region53: #{transformation_net.6} parent=11 // pred_check
          %p539 = pneg %p300
        $region54: #{transformation_net.6} parent=11 // pred_check_branch
          %541 = sbr.rel (%p539) target = $region56
        $region55: #{transformation_net.6} parent=11 // pred_region
          %s543 = ssub.s32 16, 16
          %544 = vsyncadd [#allocation8], %s543
          %s546 = sshll.u32 [#allocation9], 4
          %s547 = int_to_ptr.vmem [resolvable:$true] %s546
          %549 = dma.hbm_to_vmem [thread:$0]  %s11, 16, %s547, [#allocation8]
        $region56: #{transformation_net.6} parent=11 // pred_fallthru
          _
        // Predicated region
        $region57: #{transformation_net.6} parent=11 // pred_check
          %p550 = pneg %p321
        $region58: #{transformation_net.6} parent=11 // pred_check_branch
          %552 = sbr.rel (%p550) target = $region60
        $region59: #{transformation_net.6} parent=11 // pred_region
          %s554 = ssub.s32 16, 16
          %555 = vsyncadd [#allocation11], %s554
          %s557 = sshll.u32 [#allocation10], 4
          %s558 = int_to_ptr.vmem [resolvable:$true] %s557
          %560 = dma.hbm_to_vmem [thread:$0]  %s12, 16, %s558, [#allocation11]
        $region60: #{transformation_net.6} parent=11 // pred_fallthru
          _
        // Predicated region
        $region61: #{transformation_net.6} parent=11 // pred_check
          %p561 = pneg %p342
        $region62: #{transformation_net.6} parent=11 // pred_check_branch
          %563 = sbr.rel (%p561) target = $region64
        $region63: #{transformation_net.6} parent=11 // pred_region
          _
        $region64: #{transformation_net.6} parent=11 // pred_fallthru
          _
        // Predicated region
        $region65: #{transformation_net.6} parent=11 // pred_check
          %p564 = pneg %p363
        $region66: #{transformation_net.6} parent=11 // pred_check_branch
          %566 = sbr.rel (%p564) target = $region68
        $region67: #{transformation_net.6} parent=11 // pred_region
          %s568 = ssub.s32 128, 128
          %569 = vsyncadd [#allocation11], %s568
          %s571 = sshll.u32 [#allocation12], 4
          %s572 = int_to_ptr.vmem [resolvable:$true] %s571
          %574 = dma.hbm_to_vmem [thread:$0]  %s14, 128, %s572, [#allocation11]
        $region68: #{transformation_net.6} parent=11 // pred_fallthru
          _
        // Predicated region
        $region69: #{transformation_net.6} parent=11 // pred_check
          %p575 = pneg %p384
        $region70: #{transformation_net.6} parent=11 // pred_check_branch
          %577 = sbr.rel (%p575) target = $region72
        $region71: #{transformation_net.6} parent=11 // pred_region
          _
        $region72: #{transformation_net.6} parent=11 // pred_fallthru
          _
      $region12: #{transformation_net.6} parent=5 // pred_fallthru
        _
      %p578 = scmp.lt.s32.totalorder %s29, 2
      // Predicated region
      $region73: #{transformation_net.6} parent=5 // pred_check
        %p579 = pneg %p578
      $region74: #{transformation_net.6} parent=5 // pred_check_branch
        %581 = sbr.rel (%p579) target = $region76
      $region75: #{transformation_net.6} parent=5 // pred_region
        // Predicated region
        $region77: #{transformation_net.6} parent=75 // pred_check
          %p582 = pneg %p63
        $region78: #{transformation_net.6} parent=75 // pred_check_branch
          %584 = sbr.rel (%p582) target = $region80
        $region79: #{transformation_net.6} parent=75 // pred_region
          %s585 = sadd.s32 %s36, %s37
          %s586 = smul.u32 2, %s585
          %p587 = scmp.lt.s32.totalorder %s586, 3
          %s588 = scalar_select %p587, %s586, 3
          %s589 = smul.addr %s588, 4
          %s590 = scalar_lea.vmem %s0, %s589
          %s591 = sadd.s32 %s36, %s37
          %s592 = smul.u32 2, %s591
        $region80: #{transformation_net.6} parent=75 // pred_fallthru
          _
      $region76: #{transformation_net.6} parent=5 // pred_fallthru
        _
      %p593 = scmp.le.s32.totalorder 1, %s29
      %p594 = scmp.lt.s32.totalorder %s29, 3
      %p595 = pnand %p593, %p594
      %p596 = pneg %p595
      // Predicated region
      $region81: #{transformation_net.6} parent=5 // pred_check
        _
      $region82: #{transformation_net.6} parent=5 // pred_check_branch
        %598 = sbr.rel (%p595) target = $region84
      $region83: #{transformation_net.6} parent=5 // pred_region
        %s599 = ssub.s32 %s29, 1
        // Predicated region
        $region85: #{transformation_net.6} parent=83 // pred_check
          %p600 = pneg %p111
        $region86: #{transformation_net.6} parent=83 // pred_check_branch
          %602 = sbr.rel (%p600) target = $region88
        $region87: #{transformation_net.6} parent=83 // pred_region
          %603 = dma.done [#allocation3], 16
        $region88: #{transformation_net.6} parent=83 // pred_fallthru
          _
        // Predicated region
        $region89: #{transformation_net.6} parent=83 // pred_check
          %p604 = pneg %p174
        $region90: #{transformation_net.6} parent=83 // pred_check_branch
          %606 = sbr.rel (%p604) target = $region92
        $region91: #{transformation_net.6} parent=83 // pred_region
          %607 = dma.done [#allocation5], 16
        $region92: #{transformation_net.6} parent=83 // pred_fallthru
          _
        // Predicated region
        $region93: #{transformation_net.6} parent=83 // pred_check
          %p608 = pneg %p195
        $region94: #{transformation_net.6} parent=83 // pred_check_branch
          %610 = sbr.rel (%p608) target = $region96
        $region95: #{transformation_net.6} parent=83 // pred_region
          %611 = dma.done [#allocation5], 16
        $region96: #{transformation_net.6} parent=83 // pred_fallthru
          _
        // Predicated region
        $region97: #{transformation_net.6} parent=83 // pred_check
          %p612 = pneg %p237
        $region98: #{transformation_net.6} parent=83 // pred_check_branch
          %614 = sbr.rel (%p612) target = $region100
        $region99: #{transformation_net.6} parent=83 // pred_region
          %615 = dma.done [#allocation8], 16
        $region100: #{transformation_net.6} parent=83 // pred_fallthru
          _
        // Predicated region
        $region101: #{transformation_net.6} parent=83 // pred_check
          %p616 = pneg %p300
        $region102: #{transformation_net.6} parent=83 // pred_check_branch
          %618 = sbr.rel (%p616) target = $region104
        $region103: #{transformation_net.6} parent=83 // pred_region
          %619 = dma.done [#allocation8], 16
        $region104: #{transformation_net.6} parent=83 // pred_fallthru
          _
        // Predicated region
        $region105: #{transformation_net.6} parent=83 // pred_check
          %p620 = pneg %p321
        $region106: #{transformation_net.6} parent=83 // pred_check_branch
          %622 = sbr.rel (%p620) target = $region108
        $region107: #{transformation_net.6} parent=83 // pred_region
          %623 = dma.done [#allocation11], 16
        $region108: #{transformation_net.6} parent=83 // pred_fallthru
          _
        // Predicated region
        $region109: #{transformation_net.6} parent=83 // pred_check
          %p624 = pneg %p363
        $region110: #{transformation_net.6} parent=83 // pred_check_branch
          %626 = sbr.rel (%p624) target = $region112
        $region111: #{transformation_net.6} parent=83 // pred_region
          %627 = dma.done [#allocation11], 128
        $region112: #{transformation_net.6} parent=83 // pred_fallthru
          _
        %s628 = sadd.s32 %s38, %s39
        %s629 = smul.u32 2, %s628
        %p630 = scmp.lt.s32.totalorder %s629, 3
        %s631 = scalar_select %p630, %s629, 3
        %s632 = smul.addr %s631, 4
        %s633 = scalar_lea.vmem %s0, %s632
        %p634 = pneg %p69
        %p635 = pneg %p66
        %p636 = pneg %p90
        %p637 = pneg %p87
        %p638 = pneg %p111
        %p639 = pneg %p108
        %p640 = pneg %p132
        %p641 = pneg %p129
        %p642 = pneg %p153
        %p643 = pneg %p150
        %p644 = pneg %p174
        %p645 = pneg %p171
        %p646 = pneg %p195
        %p647 = pneg %p192
        %p648 = pneg %p216
        %p649 = pneg %p213
        %p650 = pneg %p237
        %p651 = pneg %p234
        %p652 = pneg %p258
        %p653 = pneg %p255
        %p654 = pneg %p279
        %p655 = pneg %p276
        %p656 = pneg %p300
        %p657 = pneg %p297
        %p658 = pneg %p321
        %p659 = pneg %p318
        %p660 = pneg %p342
        %p661 = pneg %p339
        %p662 = pneg %p363
        %p663 = pneg %p360
        %p664 = pneg %p384
        %p665 = pneg %p381
        %p666 = pneg %p410
        %p667 = pneg %p407
        %p668 = scmp.lt.s32.totalorder %s38, 1
        %s669 = scalar_select %p668, %s38, 1
        %s670 = smul.addr %s669, 8
        %s671 = scalar_lea.vmem %s16, %s670
        %p672 = pneg %p436
        %p673 = pneg %p433
        %p674 = scmp.lt.s32.totalorder %s38, 1
        %s675 = scalar_select %p674, %s38, 1
        %s676 = smul.addr %s675, 8
        %s677 = scalar_lea.vmem %s17, %s676
        %p678 = pneg %p462
        %p679 = pneg %p459
        %p680 = scmp.lt.s32.totalorder %s38, 1
        %s681 = scalar_select %p680, %s38, 1
        %s682 = smul.addr %s681, 8
        %s683 = scalar_lea.vmem %s18, %s682
        %s684 = sadd.s32 %s38, %s39
        %s685 = smul.u32 2, %s684
        %p686 = scmp.lt.s32.totalorder %s685, 3
        %s687 = scalar_select %p686, %s685, 3
        %s688 = smul.addr %s687, 4
        %s689 = scalar_lea.vmem %s0, %s688
        %s690 = sadd.s32 %s38, %s39
        %s691 = smul.u32 2, %s690
        %p692 = scmp.lt.s32.totalorder %s38, 1
        %s693 = scalar_select %p692, %s38, 1
        %s694 = smul.addr %s693, 8
        %s695 = scalar_lea.vmem %s16, %s694
        %p696 = scmp.lt.s32.totalorder %s38, 1
        %s697 = scalar_select %p696, %s38, 1
        %s698 = smul.addr %s697, 8
        %s699 = scalar_lea.vmem %s17, %s698
        %p700 = scmp.lt.s32.totalorder %s38, 1
        %s701 = scalar_select %p700, %s38, 1
        %s702 = smul.addr %s701, 8
        %s703 = scalar_lea.vmem %s18, %s702
        %v705 = vld [vmem:[%s689] sm:$0xf]
        %v706 = vld [vmem:[%s689 + $0x4] sm:$0xf]
        %v707 = vld [vmem:[%s1] sm:$0xf]
        %v708 = vld [vmem:[#allocation2] sm:$0x1]
        %v710 = vlaneseq
        %v711 = vshrl.u32 %v710, 7
        %v712 = vsub.s32 0, %v711
        %v713 = vrot.slane %v708, %v712
        %v717 = vunpack.c.l.b16 %v705
        %v718 = vunpack.c.l.b16 %v706
        %v719 = vpack.c.b16 %v718, %v717
        %vm720 = vcmask 64512
        %v722 = vsel %vm720, %v719, 0
        %vm724 = vcmask 1043456
        %v726 = vsel %vm724, %v707, 0
        %728 = vmatprep.subr.bf16.mxu0 0
        %729 = vmatpush1.bf16.msra.mxu0 %v726
        %730 = vmatprep.subr.bf16.mxu0 0
        %731 = vmatpush1.bf16.msra.mxu0 0
        %732 = vmatprep.subr.bf16.mxu0 0
        %733 = vmatpush1.bf16.msra.mxu0 0
        %734 = vmatprep.subr.bf16.mxu0 0
        %735 = vmatpush1.bf16.msra.mxu0 0
        %736 = vmatprep.subr.bf16.mxu0 0
        %737 = vmatpush1.bf16.msra.mxu0 0
        %738 = vmatprep.subr.bf16.mxu0 0
        %739 = vmatpush1.bf16.msra.mxu0 0
        %740 = vmatprep.subr.bf16.mxu0 0
        %741 = vmatpush1.bf16.msra.mxu0 0
        %742 = vmatprep.subr.bf16.mxu0 0
        %743 = vmatpush1.bf16.msra.mxu0 0
        %744 = vmatprep.subr.bf16.mxu0 0
        %745 = vmatpush1.bf16.msra.mxu0 0
        %746 = vmatprep.subr.bf16.mxu0 0
        %747 = vmatpush1.bf16.msra.mxu0 0
        %748 = vmatprep.subr.bf16.mxu0 0
        %749 = vmatpush1.bf16.msra.mxu0 0
        %750 = vmatprep.subr.bf16.mxu0 0
        %751 = vmatpush1.bf16.msra.mxu0 0
        %752 = vmatprep.subr.bf16.mxu0 0
        %753 = vmatpush1.bf16.msra.mxu0 0
        %754 = vmatprep.subr.bf16.mxu0 0
        %755 = vmatpush1.bf16.msra.mxu0 0
        %756 = vmatprep.subr.bf16.mxu0 0
        %757 = vmatpush1.bf16.msra.mxu0 0
        %758 = vmatprep.subr.bf16.mxu0 0
        %759 = vmatpush1.bf16.msra.mxu0 0
        %760 = vmatprep.mubr.bf16.mxu0 0
        %761 = vmatmul.mubr.bf16.gmra.mrb[0].mxu0 %v722
        %v762 = vpop.f32.mrb[0].mxu0
        %v763 = vadd.f32 %v713, %v762
        %v764 = vpop.f32.mrb[0].mxu0
        %v765 = vpop.f32.mrb[0].mxu0
        %v766 = vadd.f32 %v713, %v765
        %v767 = vpop.f32.mrb[0].mxu0
        %768 = vdwg.mxu0
        %v769 = vld [vmem:[#allocation4] sm:$0x1]
        %v770 = vld [vmem:[%s3] sm:$0x1]
        %v772 = vlaneseq
        %v773 = vshrl.u32 %v772, 7
        %v774 = vsub.s32 0, %v773
        %v775 = vrot.slane %v770, %v774
        %v777 = vsub.f32 %v763, %v775
        %v778 = vsub.f32 %v766, %v775
        %v780 = vlaneseq
        %v781 = vshrl.u32 %v780, 7
        %v782 = vsub.s32 0, %v781
        %v783 = vrot.slane %v769, %v782
        %v785 = vmul.f32 %v783, %v777
        %v786 = vmul.f32 %v783, %v778
        %v787 = vld [vmem:[%s4] sm:$0x1]
        %v789 = vlaneseq
        %v790 = vshrl.u32 %v789, 7
        %v791 = vsub.s32 0, %v790
        %v792 = vrot.slane %v787, %v791
        %v794 = vmul.f32 %v785, %v792
        %v795 = vmul.f32 %v786, %v792
        %v796 = vld [vmem:[#allocation6] sm:$0x1]
        %v798 = vlaneseq
        %v799 = vshrl.u32 %v798, 7
        %v800 = vsub.s32 0, %v799
        %v801 = vrot.slane %v796, %v800
        %v803 = vadd.f32 %v794, %v801
        %v804 = vadd.f32 %v795, %v801
        %v805 = vmax.f32 %v803, 0.0
        %v806 = vmax.f32 %v804, 0.0
        %v807 = vpack.c.bf16 %v806, %v805
        %v808 = vld [vmem:[%s7] sm:$0xf]
        %v809 = vld [vmem:[%s7 + $0x4] sm:$0xf]
        %v810 = vld [vmem:[%s7 + $0x8] sm:$0xf]
        %v811 = vld [vmem:[%s7 + $0xc] sm:$0xf]
        %v812 = vld [vmem:[%s7 + $0x10] sm:$0xf]
        %v813 = vld [vmem:[%s7 + $0x14] sm:$0xf]
        %v814 = vld [vmem:[%s7 + $0x18] sm:$0xf]
        %v815 = vld [vmem:[%s7 + $0x1c] sm:$0xf]
        %v816 = vld [vmem:[#allocation7] sm:$0x1]
        %v818 = vlaneseq
        %v819 = vshrl.u32 %v818, 7
        %v820 = vsub.s32 0, %v819
        %v821 = vrot.slane %v816, %v820
        %v831 = vunpack.c.l.b16 %v808
        %v832 = vunpack.c.l.b16 %v809
        %v833 = vunpack.c.l.b16 %v810
        %v834 = vunpack.c.l.b16 %v811
        %v835 = vunpack.c.l.b16 %v812
        %v836 = vunpack.c.l.b16 %v813
        %v837 = vunpack.c.l.b16 %v814
        %v838 = vunpack.c.l.b16 %v815
        %v839 = vpack.c.b16 %v832, %v831
        %v840 = vpack.c.b16 %v834, %v833
        %v841 = vpack.c.b16 %v836, %v835
        %v842 = vpack.c.b16 %v838, %v837
        %vm847 = vcmask 523264
        %v849 = vsel %vm847, %v807, 0
        %851 = vmatprep.subr.bf16.mxu0 0
        %852 = vmatpush1.bf16.msra.mxu0 %v839
        %853 = vmatprep.subr.bf16.mxu0 0
        %854 = vmatpush1.bf16.msra.mxu0 %v840
        %855 = vmatprep.subr.bf16.mxu0 0
        %856 = vmatpush1.bf16.msra.mxu0 %v841
        %857 = vmatprep.subr.bf16.mxu0 0
        %858 = vmatpush1.bf16.msra.mxu0 %v842
        %859 = vmatprep.subr.bf16.mxu0 0
        %860 = vmatpush1.bf16.msra.mxu0 0
        %861 = vmatprep.subr.bf16.mxu0 0
        %862 = vmatpush1.bf16.msra.mxu0 0
        %863 = vmatprep.subr.bf16.mxu0 0
        %864 = vmatpush1.bf16.msra.mxu0 0
        %865 = vmatprep.subr.bf16.mxu0 0
        %866 = vmatpush1.bf16.msra.mxu0 0
        %867 = vmatprep.subr.bf16.mxu0 0
        %868 = vmatpush1.bf16.msra.mxu0 0
        %869 = vmatprep.subr.bf16.mxu0 0
        %870 = vmatpush1.bf16.msra.mxu0 0
        %871 = vmatprep.subr.bf16.mxu0 0
        %872 = vmatpush1.bf16.msra.mxu0 0
        %873 = vmatprep.subr.bf16.mxu0 0
        %874 = vmatpush1.bf16.msra.mxu0 0
        %875 = vmatprep.subr.bf16.mxu0 0
        %876 = vmatpush1.bf16.msra.mxu0 0
        %877 = vmatprep.subr.bf16.mxu0 0
        %878 = vmatpush1.bf16.msra.mxu0 0
        %879 = vmatprep.subr.bf16.mxu0 0
        %880 = vmatpush1.bf16.msra.mxu0 0
        %881 = vmatprep.subr.bf16.mxu0 0
        %882 = vmatpush1.bf16.msra.mxu0 0
        %883 = vmatprep.mubr.bf16.mxu0 0
        %884 = vmatmul.mubr.bf16.gmra.mrb[0].mxu0 %v849
        %v885 = vpop.f32.mrb[0].mxu0
        %v886 = vadd.f32 %v821, %v885
        %v887 = vpop.f32.mrb[0].mxu0
        %v888 = vpop.f32.mrb[0].mxu0
        %v889 = vadd.f32 %v821, %v888
        %v890 = vpop.f32.mrb[0].mxu0
        %891 = vdwg.mxu0
        %v892 = vld [vmem:[#allocation9] sm:$0x1]
        %v893 = vld [vmem:[%s9] sm:$0x1]
        %v895 = vlaneseq
        %v896 = vshrl.u32 %v895, 7
        %v897 = vsub.s32 0, %v896
        %v898 = vrot.slane %v893, %v897
        %v900 = vsub.f32 %v886, %v898
        %v901 = vsub.f32 %v889, %v898
        %v903 = vlaneseq
        %v904 = vshrl.u32 %v903, 7
        %v905 = vsub.s32 0, %v904
        %v906 = vrot.slane %v892, %v905
        %v908 = vmul.f32 %v906, %v900
        %v909 = vmul.f32 %v906, %v901
        %v910 = vld [vmem:[%s10] sm:$0x1]
        %v912 = vlaneseq
        %v913 = vshrl.u32 %v912, 7
        %v914 = vsub.s32 0, %v913
        %v915 = vrot.slane %v910, %v914
        %v917 = vmul.f32 %v908, %v915
        %v918 = vmul.f32 %v909, %v915
        %v919 = vld [vmem:[#allocation10] sm:$0x1]
        %v921 = vlaneseq
        %v922 = vshrl.u32 %v921, 7
        %v923 = vsub.s32 0, %v922
        %v924 = vrot.slane %v919, %v923
        %v926 = vadd.f32 %v917, %v924
        %v927 = vadd.f32 %v918, %v924
        %v928 = vmax.f32 %v926, 0.0
        %v929 = vmax.f32 %v927, 0.0
        %v930 = vpack.c.bf16 %v929, %v928
        %v931 = vld [vmem:[%s13] sm:$0xff]
        %v932 = vld [vmem:[%s13 + $0x8] sm:$0xff]
        %v933 = vld [vmem:[%s13 + $0x10] sm:$0xff]
        %v934 = vld [vmem:[%s13 + $0x18] sm:$0xff]
        %v935 = vld [vmem:[%s13 + $0x20] sm:$0xff]
        %v936 = vld [vmem:[%s13 + $0x28] sm:$0xff]
        %v937 = vld [vmem:[%s13 + $0x30] sm:$0xff]
        %v938 = vld [vmem:[%s13 + $0x38] sm:$0xff]
        %v939 = vld [vmem:[%s13 + $0x40] sm:$0xff]
        %v940 = vld [vmem:[%s13 + $0x48] sm:$0xff]
        %v941 = vld [vmem:[%s13 + $0x50] sm:$0xff]
        %v942 = vld [vmem:[%s13 + $0x58] sm:$0xff]
        %v943 = vld [vmem:[%s13 + $0x60] sm:$0xff]
        %v944 = vld [vmem:[%s13 + $0x68] sm:$0xff]
        %v945 = vld [vmem:[%s13 + $0x70] sm:$0xff]
        %v946 = vld [vmem:[%s13 + $0x78] sm:$0xff]
        %v947 = vld [vmem:[%s13 + $0x80] sm:$0xff]
        %v948 = vld [vmem:[%s13 + $0x88] sm:$0xff]
        %v949 = vld [vmem:[%s13 + $0x90] sm:$0xff]
        %v950 = vld [vmem:[%s13 + $0x98] sm:$0xff]
        %v951 = vld [vmem:[%s13 + $0xa0] sm:$0xff]
        %v952 = vld [vmem:[%s13 + $0xa8] sm:$0xff]
        %v953 = vld [vmem:[%s13 + $0xb0] sm:$0xff]
        %v954 = vld [vmem:[%s13 + $0xb8] sm:$0xff]
        %v955 = vld [vmem:[%s13 + $0xc0] sm:$0xff]
        %v956 = vld [vmem:[%s13 + $0xc8] sm:$0xff]
        %v957 = vld [vmem:[%s13 + $0xd0] sm:$0xff]
        %v958 = vld [vmem:[%s13 + $0xd8] sm:$0xff]
        %v959 = vld [vmem:[%s13 + $0xe0] sm:$0xff]
        %v960 = vld [vmem:[%s13 + $0xe8] sm:$0xff]
        %v961 = vld [vmem:[%s13 + $0xf0] sm:$0xff]
        %v962 = vld [vmem:[%s13 + $0xf8] sm:$0xff]
        %v963 = vld [vmem:[%s13 + $0x100] sm:$0xff]
        %v964 = vld [vmem:[%s13 + $0x108] sm:$0xff]
        %v965 = vld [vmem:[%s13 + $0x110] sm:$0xff]
        %v966 = vld [vmem:[%s13 + $0x118] sm:$0xff]
        %v967 = vld [vmem:[%s13 + $0x120] sm:$0xff]
        %v968 = vld [vmem:[%s13 + $0x128] sm:$0xff]
        %v969 = vld [vmem:[%s13 + $0x130] sm:$0xff]
        %v970 = vld [vmem:[%s13 + $0x138] sm:$0xff]
        %v971 = vld [vmem:[%s13 + $0x140] sm:$0xff]
        %v972 = vld [vmem:[%s13 + $0x148] sm:$0xff]
        %v973 = vld [vmem:[%s13 + $0x150] sm:$0xff]
        %v974 = vld [vmem:[%s13 + $0x158] sm:$0xff]
        %v975 = vld [vmem:[%s13 + $0x160] sm:$0xff]
        %v976 = vld [vmem:[%s13 + $0x168] sm:$0xff]
        %v977 = vld [vmem:[%s13 + $0x170] sm:$0xff]
        %v978 = vld [vmem:[%s13 + $0x178] sm:$0xff]
        %v979 = vld [vmem:[%s13 + $0x180] sm:$0xff]
        %v980 = vld [vmem:[%s13 + $0x188] sm:$0xff]
        %v981 = vld [vmem:[%s13 + $0x190] sm:$0xff]
        %v982 = vld [vmem:[%s13 + $0x198] sm:$0xff]
        %v983 = vld [vmem:[%s13 + $0x1a0] sm:$0xff]
        %v984 = vld [vmem:[%s13 + $0x1a8] sm:$0xff]
        %v985 = vld [vmem:[%s13 + $0x1b0] sm:$0xff]
        %v986 = vld [vmem:[%s13 + $0x1b8] sm:$0xff]
        %v987 = vld [vmem:[%s13 + $0x1c0] sm:$0xff]
        %v988 = vld [vmem:[%s13 + $0x1c8] sm:$0xff]
        %v989 = vld [vmem:[%s13 + $0x1d0] sm:$0xff]
        %v990 = vld [vmem:[%s13 + $0x1d8] sm:$0xff]
        %v991 = vld [vmem:[%s13 + $0x1e0] sm:$0xff]
        %v992 = vld [vmem:[%s13 + $0x1e8] sm:$0xff]
        %v993 = vld [vmem:[%s13 + $0x1f0] sm:$0xff]
        %v994 = vld [vmem:[%s13 + $0x1f8] sm:$0xff]
        %v995 = vld [vmem:[#allocation12] sm:$0xff]
        %v997 = vlaneseq
        %v998 = vshrl.u32 %v997, 7
        %v999 = vsub.s32 0, %v998
        %v1000 = vrot.slane %v995, %v999
        %v1001 = vlaneseq
        %v1002 = vshrl.u32 %v1001, 7
        %v1003 = vsub.s32 1, %v1002
        %v1004 = vrot.slane %v995, %v1003
        %v1005 = vlaneseq
        %v1006 = vshrl.u32 %v1005, 7
        %v1007 = vsub.s32 2, %v1006
        %v1008 = vrot.slane %v995, %v1007
        %v1009 = vlaneseq
        %v1010 = vshrl.u32 %v1009, 7
        %v1011 = vsub.s32 3, %v1010
        %v1012 = vrot.slane %v995, %v1011
        %v1013 = vlaneseq
        %v1014 = vshrl.u32 %v1013, 7
        %v1015 = vsub.s32 4, %v1014
        %v1016 = vrot.slane %v995, %v1015
        %v1017 = vlaneseq
        %v1018 = vshrl.u32 %v1017, 7
        %v1019 = vsub.s32 5, %v1018
        %v1020 = vrot.slane %v995, %v1019
        %v1021 = vlaneseq
        %v1022 = vshrl.u32 %v1021, 7
        %v1023 = vsub.s32 6, %v1022
        %v1024 = vrot.slane %v995, %v1023
        %v1025 = vlaneseq
        %v1026 = vshrl.u32 %v1025, 7
        %v1027 = vsub.s32 7, %v1026
        %v1028 = vrot.slane %v995, %v1027
        %v1101 = vunpack.c.l.b16 %v931
        %v1102 = vunpack.c.h.b16 %v931
        %v1103 = vunpack.c.l.b16 %v932
        %v1104 = vunpack.c.h.b16 %v932
        %v1105 = vunpack.c.l.b16 %v933
        %v1106 = vunpack.c.h.b16 %v933
        %v1107 = vunpack.c.l.b16 %v934
        %v1108 = vunpack.c.h.b16 %v934
        %v1109 = vunpack.c.l.b16 %v935
        %v1110 = vunpack.c.h.b16 %v935
        %v1111 = vunpack.c.l.b16 %v936
        %v1112 = vunpack.c.h.b16 %v936
        %v1113 = vunpack.c.l.b16 %v937
        %v1114 = vunpack.c.h.b16 %v937
        %v1115 = vunpack.c.l.b16 %v938
        %v1116 = vunpack.c.h.b16 %v938
        %v1117 = vunpack.c.l.b16 %v939
        %v1118 = vunpack.c.h.b16 %v939
        %v1119 = vunpack.c.l.b16 %v940
        %v1120 = vunpack.c.h.b16 %v940
        %v1121 = vunpack.c.l.b16 %v941
        %v1122 = vunpack.c.h.b16 %v941
        %v1123 = vunpack.c.l.b16 %v942
        %v1124 = vunpack.c.h.b16 %v942
        %v1125 = vunpack.c.l.b16 %v943
        %v1126 = vunpack.c.h.b16 %v943
        %v1127 = vunpack.c.l.b16 %v944
        %v1128 = vunpack.c.h.b16 %v944
        %v1129 = vunpack.c.l.b16 %v945
        %v1130 = vunpack.c.h.b16 %v945
        %v1131 = vunpack.c.l.b16 %v946
        %v1132 = vunpack.c.h.b16 %v946
        %v1133 = vunpack.c.l.b16 %v947
        %v1134 = vunpack.c.h.b16 %v947
        %v1135 = vunpack.c.l.b16 %v948
        %v1136 = vunpack.c.h.b16 %v948
        %v1137 = vunpack.c.l.b16 %v949
        %v1138 = vunpack.c.h.b16 %v949
        %v1139 = vunpack.c.l.b16 %v950
        %v1140 = vunpack.c.h.b16 %v950
        %v1141 = vunpack.c.l.b16 %v951
        %v1142 = vunpack.c.h.b16 %v951
        %v1143 = vunpack.c.l.b16 %v952
        %v1144 = vunpack.c.h.b16 %v952
        %v1145 = vunpack.c.l.b16 %v953
        %v1146 = vunpack.c.h.b16 %v953
        %v1147 = vunpack.c.l.b16 %v954
        %v1148 = vunpack.c.h.b16 %v954
        %v1149 = vunpack.c.l.b16 %v955
        %v1150 = vunpack.c.h.b16 %v955
        %v1151 = vunpack.c.l.b16 %v956
        %v1152 = vunpack.c.h.b16 %v956
        %v1153 = vunpack.c.l.b16 %v957
        %v1154 = vunpack.c.h.b16 %v957
        %v1155 = vunpack.c.l.b16 %v958
        %v1156 = vunpack.c.h.b16 %v958
        %v1157 = vunpack.c.l.b16 %v959
        %v1158 = vunpack.c.h.b16 %v959
        %v1159 = vunpack.c.l.b16 %v960
        %v1160 = vunpack.c.h.b16 %v960
        %v1161 = vunpack.c.l.b16 %v961
        %v1162 = vunpack.c.h.b16 %v961
        %v1163 = vunpack.c.l.b16 %v962
        %v1164 = vunpack.c.h.b16 %v962
        %v1165 = vunpack.c.l.b16 %v963
        %v1166 = vunpack.c.h.b16 %v963
        %v1167 = vunpack.c.l.b16 %v964
        %v1168 = vunpack.c.h.b16 %v964
        %v1169 = vunpack.c.l.b16 %v965
        %v1170 = vunpack.c.h.b16 %v965
        %v1171 = vunpack.c.l.b16 %v966
        %v1172 = vunpack.c.h.b16 %v966
        %v1173 = vunpack.c.l.b16 %v967
        %v1174 = vunpack.c.h.b16 %v967
        %v1175 = vunpack.c.l.b16 %v968
        %v1176 = vunpack.c.h.b16 %v968
        %v1177 = vunpack.c.l.b16 %v969
        %v1178 = vunpack.c.h.b16 %v969
        %v1179 = vunpack.c.l.b16 %v970
        %v1180 = vunpack.c.h.b16 %v970
        %v1181 = vunpack.c.l.b16 %v971
        %v1182 = vunpack.c.h.b16 %v971
        %v1183 = vunpack.c.l.b16 %v972
        %v1184 = vunpack.c.h.b16 %v972
        %v1185 = vunpack.c.l.b16 %v973
        %v1186 = vunpack.c.h.b16 %v973
        %v1187 = vunpack.c.l.b16 %v974
        %v1188 = vunpack.c.h.b16 %v974
        %v1189 = vunpack.c.l.b16 %v975
        %v1190 = vunpack.c.h.b16 %v975
        %v1191 = vunpack.c.l.b16 %v976
        %v1192 = vunpack.c.h.b16 %v976
        %v1193 = vunpack.c.l.b16 %v977
        %v1194 = vunpack.c.h.b16 %v977
        %v1195 = vunpack.c.l.b16 %v978
        %v1196 = vunpack.c.h.b16 %v978
        %v1197 = vunpack.c.l.b16 %v979
        %v1198 = vunpack.c.h.b16 %v979
        %v1199 = vunpack.c.l.b16 %v980
        %v1200 = vunpack.c.h.b16 %v980
        %v1201 = vunpack.c.l.b16 %v981
        %v1202 = vunpack.c.h.b16 %v981
        %v1203 = vunpack.c.l.b16 %v982
        %v1204 = vunpack.c.h.b16 %v982
        %v1205 = vunpack.c.l.b16 %v983
        %v1206 = vunpack.c.h.b16 %v983
        %v1207 = vunpack.c.l.b16 %v984
        %v1208 = vunpack.c.h.b16 %v984
        %v1209 = vunpack.c.l.b16 %v985
        %v1210 = vunpack.c.h.b16 %v985
        %v1211 = vunpack.c.l.b16 %v986
        %v1212 = vunpack.c.h.b16 %v986
        %v1213 = vunpack.c.l.b16 %v987
        %v1214 = vunpack.c.h.b16 %v987
        %v1215 = vunpack.c.l.b16 %v988
        %v1216 = vunpack.c.h.b16 %v988
        %v1217 = vunpack.c.l.b16 %v989
        %v1218 = vunpack.c.h.b16 %v989
        %v1219 = vunpack.c.l.b16 %v990
        %v1220 = vunpack.c.h.b16 %v990
        %v1221 = vunpack.c.l.b16 %v991
        %v1222 = vunpack.c.h.b16 %v991
        %v1223 = vunpack.c.l.b16 %v992
        %v1224 = vunpack.c.h.b16 %v992
        %v1225 = vunpack.c.l.b16 %v993
        %v1226 = vunpack.c.h.b16 %v993
        %v1227 = vunpack.c.l.b16 %v994
        %v1228 = vunpack.c.h.b16 %v994
        %v1229 = vpack.c.b16 %v1109, %v1101
        %v1230 = vpack.c.b16 %v1110, %v1102
        %v1231 = vpack.c.b16 %v1111, %v1103
        %v1232 = vpack.c.b16 %v1112, %v1104
        %v1233 = vpack.c.b16 %v1113, %v1105
        %v1234 = vpack.c.b16 %v1114, %v1106
        %v1235 = vpack.c.b16 %v1115, %v1107
        %v1236 = vpack.c.b16 %v1116, %v1108
        %v1237 = vpack.c.b16 %v1125, %v1117
        %v1238 = vpack.c.b16 %v1126, %v1118
        %v1239 = vpack.c.b16 %v1127, %v1119
        %v1240 = vpack.c.b16 %v1128, %v1120
        %v1241 = vpack.c.b16 %v1129, %v1121
        %v1242 = vpack.c.b16 %v1130, %v1122
        %v1243 = vpack.c.b16 %v1131, %v1123
        %v1244 = vpack.c.b16 %v1132, %v1124
        %v1245 = vpack.c.b16 %v1141, %v1133
        %v1246 = vpack.c.b16 %v1142, %v1134
        %v1247 = vpack.c.b16 %v1143, %v1135
        %v1248 = vpack.c.b16 %v1144, %v1136
        %v1249 = vpack.c.b16 %v1145, %v1137
        %v1250 = vpack.c.b16 %v1146, %v1138
        %v1251 = vpack.c.b16 %v1147, %v1139
        %v1252 = vpack.c.b16 %v1148, %v1140
        %v1253 = vpack.c.b16 %v1157, %v1149
        %v1254 = vpack.c.b16 %v1158, %v1150
        %v1255 = vpack.c.b16 %v1159, %v1151
        %v1256 = vpack.c.b16 %v1160, %v1152
        %v1257 = vpack.c.b16 %v1161, %v1153
        %v1258 = vpack.c.b16 %v1162, %v1154
        %v1259 = vpack.c.b16 %v1163, %v1155
        %v1260 = vpack.c.b16 %v1164, %v1156
        %v1261 = vpack.c.b16 %v1173, %v1165
        %v1262 = vpack.c.b16 %v1174, %v1166
        %v1263 = vpack.c.b16 %v1175, %v1167
        %v1264 = vpack.c.b16 %v1176, %v1168
        %v1265 = vpack.c.b16 %v1177, %v1169
        %v1266 = vpack.c.b16 %v1178, %v1170
        %v1267 = vpack.c.b16 %v1179, %v1171
        %v1268 = vpack.c.b16 %v1180, %v1172
        %v1269 = vpack.c.b16 %v1189, %v1181
        %v1270 = vpack.c.b16 %v1190, %v1182
        %v1271 = vpack.c.b16 %v1191, %v1183
        %v1272 = vpack.c.b16 %v1192, %v1184
        %v1273 = vpack.c.b16 %v1193, %v1185
        %v1274 = vpack.c.b16 %v1194, %v1186
        %v1275 = vpack.c.b16 %v1195, %v1187
        %v1276 = vpack.c.b16 %v1196, %v1188
        %v1277 = vpack.c.b16 %v1205, %v1197
        %v1278 = vpack.c.b16 %v1206, %v1198
        %v1279 = vpack.c.b16 %v1207, %v1199
        %v1280 = vpack.c.b16 %v1208, %v1200
        %v1281 = vpack.c.b16 %v1209, %v1201
        %v1282 = vpack.c.b16 %v1210, %v1202
        %v1283 = vpack.c.b16 %v1211, %v1203
        %v1284 = vpack.c.b16 %v1212, %v1204
        %v1285 = vpack.c.b16 %v1221, %v1213
        %v1286 = vpack.c.b16 %v1222, %v1214
        %v1287 = vpack.c.b16 %v1223, %v1215
        %v1288 = vpack.c.b16 %v1224, %v1216
        %v1289 = vpack.c.b16 %v1225, %v1217
        %v1290 = vpack.c.b16 %v1226, %v1218
        %v1291 = vpack.c.b16 %v1227, %v1219
        %v1292 = vpack.c.b16 %v1228, %v1220
        %1357 = vmatprep.subr.bf16.mxu0 %v1230
        %1358 = vmatpush1.bf16.msra.mxu0 %v1229
        %1359 = vmatprep.subr.bf16.mxu0 %v1238
        %1360 = vmatpush1.bf16.msra.mxu0 %v1237
        %1361 = vmatprep.subr.bf16.mxu0 %v1246
        %1362 = vmatpush1.bf16.msra.mxu0 %v1245
        %1363 = vmatprep.subr.bf16.mxu0 %v1254
        %1364 = vmatpush1.bf16.msra.mxu0 %v1253
        %1365 = vmatprep.subr.bf16.mxu0 %v1262
        %1366 = vmatpush1.bf16.msra.mxu0 %v1261
        %1367 = vmatprep.subr.bf16.mxu0 %v1270
        %1368 = vmatpush1.bf16.msra.mxu0 %v1269
        %1369 = vmatprep.subr.bf16.mxu0 %v1278
        %1370 = vmatpush1.bf16.msra.mxu0 %v1277
        %1371 = vmatprep.subr.bf16.mxu0 %v1286
        %1372 = vmatpush1.bf16.msra.mxu0 %v1285
        %1373 = vmatprep.subr.bf16.mxu0 0
        %1374 = vmatpush1.bf16.msra.mxu0 0
        %1375 = vmatprep.subr.bf16.mxu0 0
        %1376 = vmatpush1.bf16.msra.mxu0 0
        %1377 = vmatprep.subr.bf16.mxu0 0
        %1378 = vmatpush1.bf16.msra.mxu0 0
        %1379 = vmatprep.subr.bf16.mxu0 0
        %1380 = vmatpush1.bf16.msra.mxu0 0
        %1381 = vmatprep.subr.bf16.mxu0 0
        %1382 = vmatpush1.bf16.msra.mxu0 0
        %1383 = vmatprep.subr.bf16.mxu0 0
        %1384 = vmatpush1.bf16.msra.mxu0 0
        %1385 = vmatprep.subr.bf16.mxu0 0
        %1386 = vmatpush1.bf16.msra.mxu0 0
        %1387 = vmatprep.subr.bf16.mxu0 0
        %1388 = vmatpush1.bf16.msra.mxu0 0
        %1389 = vmatprep.mubr.bf16.mxu0 0
        %1390 = vmatmul.mubr.bf16.gmra.mrb[0].mxu0 %v930
        %v1391 = vpop.f32.mrb[0].mxu0
        %v1392 = vadd.f32 %v1000, %v1391
        %v1393 = vpop.f32.mrb[0].mxu0
        %v1394 = vadd.f32 %v1004, %v1393
        %v1395 = vpop.f32.mrb[0].mxu0
        %v1396 = vadd.f32 %v1000, %v1395
        %v1397 = vpop.f32.mrb[0].mxu0
        %v1398 = vadd.f32 %v1004, %v1397
        %1399 = vdwg.mxu0
        %1400 = vmatprep.subr.bf16.mxu0 %v1232
        %1401 = vmatpush1.bf16.msra.mxu0 %v1231
        %1402 = vmatprep.subr.bf16.mxu0 %v1240
        %1403 = vmatpush1.bf16.msra.mxu0 %v1239
        %1404 = vmatprep.subr.bf16.mxu0 %v1248
        %1405 = vmatpush1.bf16.msra.mxu0 %v1247
        %1406 = vmatprep.subr.bf16.mxu0 %v1256
        %1407 = vmatpush1.bf16.msra.mxu0 %v1255
        %1408 = vmatprep.subr.bf16.mxu0 %v1264
        %1409 = vmatpush1.bf16.msra.mxu0 %v1263
        %1410 = vmatprep.subr.bf16.mxu0 %v1272
        %1411 = vmatpush1.bf16.msra.mxu0 %v1271
        %1412 = vmatprep.subr.bf16.mxu0 %v1280
        %1413 = vmatpush1.bf16.msra.mxu0 %v1279
        %1414 = vmatprep.subr.bf16.mxu0 %v1288
        %1415 = vmatpush1.bf16.msra.mxu0 %v1287
        %1416 = vmatprep.subr.bf16.mxu0 0
        %1417 = vmatpush1.bf16.msra.mxu0 0
        %1418 = vmatprep.subr.bf16.mxu0 0
        %1419 = vmatpush1.bf16.msra.mxu0 0
        %1420 = vmatprep.subr.bf16.mxu0 0
        %1421 = vmatpush1.bf16.msra.mxu0 0
        %1422 = vmatprep.subr.bf16.mxu0 0
        %1423 = vmatpush1.bf16.msra.mxu0 0
        %1424 = vmatprep.subr.bf16.mxu0 0
        %1425 = vmatpush1.bf16.msra.mxu0 0
        %1426 = vmatprep.subr.bf16.mxu0 0
        %1427 = vmatpush1.bf16.msra.mxu0 0
        %1428 = vmatprep.subr.bf16.mxu0 0
        %1429 = vmatpush1.bf16.msra.mxu0 0
        %1430 = vmatprep.subr.bf16.mxu0 0
        %1431 = vmatpush1.bf16.msra.mxu0 0
        %1432 = vmatprep.mubr.bf16.mxu0 0
        %1433 = vmatmul.mubr.bf16.gmra.mrb[0].mxu0 %v930
        %v1434 = vpop.f32.mrb[0].mxu0
        %v1435 = vadd.f32 %v1008, %v1434
        %v1436 = vpop.f32.mrb[0].mxu0
        %v1437 = vadd.f32 %v1012, %v1436
        %v1438 = vpop.f32.mrb[0].mxu0
        %v1439 = vadd.f32 %v1008, %v1438
        %v1440 = vpop.f32.mrb[0].mxu0
        %v1441 = vadd.f32 %v1012, %v1440
        %1442 = vdwg.mxu0
        %1443 = vmatprep.subr.bf16.mxu0 %v1234
        %1444 = vmatpush1.bf16.msra.mxu0 %v1233
        %1445 = vmatprep.subr.bf16.mxu0 %v1242
        %1446 = vmatpush1.bf16.msra.mxu0 %v1241
        %1447 = vmatprep.subr.bf16.mxu0 %v1250
        %1448 = vmatpush1.bf16.msra.mxu0 %v1249
        %1449 = vmatprep.subr.bf16.mxu0 %v1258
        %1450 = vmatpush1.bf16.msra.mxu0 %v1257
        %1451 = vmatprep.subr.bf16.mxu0 %v1266
        %1452 = vmatpush1.bf16.msra.mxu0 %v1265
        %1453 = vmatprep.subr.bf16.mxu0 %v1274
        %1454 = vmatpush1.bf16.msra.mxu0 %v1273
        %1455 = vmatprep.subr.bf16.mxu0 %v1282
        %1456 = vmatpush1.bf16.msra.mxu0 %v1281
        %1457 = vmatprep.subr.bf16.mxu0 %v1290
        %1458 = vmatpush1.bf16.msra.mxu0 %v1289
        %1459 = vmatprep.subr.bf16.mxu0 0
        %1460 = vmatpush1.bf16.msra.mxu0 0
        %1461 = vmatprep.subr.bf16.mxu0 0
        %1462 = vmatpush1.bf16.msra.mxu0 0
        %1463 = vmatprep.subr.bf16.mxu0 0
        %1464 = vmatpush1.bf16.msra.mxu0 0
        %1465 = vmatprep.subr.bf16.mxu0 0
        %1466 = vmatpush1.bf16.msra.mxu0 0
        %1467 = vmatprep.subr.bf16.mxu0 0
        %1468 = vmatpush1.bf16.msra.mxu0 0
        %1469 = vmatprep.subr.bf16.mxu0 0
        %1470 = vmatpush1.bf16.msra.mxu0 0
        %1471 = vmatprep.subr.bf16.mxu0 0
        %1472 = vmatpush1.bf16.msra.mxu0 0
        %1473 = vmatprep.subr.bf16.mxu0 0
        %1474 = vmatpush1.bf16.msra.mxu0 0
        %1475 = vmatprep.mubr.bf16.mxu0 0
        %1476 = vmatmul.mubr.bf16.gmra.mrb[0].mxu0 %v930
        %v1477 = vpop.f32.mrb[0].mxu0
        %v1478 = vadd.f32 %v1016, %v1477
        %v1479 = vpop.f32.mrb[0].mxu0
        %v1480 = vadd.f32 %v1020, %v1479
        %v1481 = vpop.f32.mrb[0].mxu0
        %v1482 = vadd.f32 %v1016, %v1481
        %v1483 = vpop.f32.mrb[0].mxu0
        %v1484 = vadd.f32 %v1020, %v1483
        %1485 = vdwg.mxu0
        %1486 = vmatprep.subr.bf16.mxu0 %v1236
        %1487 = vmatpush1.bf16.msra.mxu0 %v1235
        %1488 = vmatprep.subr.bf16.mxu0 %v1244
        %1489 = vmatpush1.bf16.msra.mxu0 %v1243
        %1490 = vmatprep.subr.bf16.mxu0 %v1252
        %1491 = vmatpush1.bf16.msra.mxu0 %v1251
        %1492 = vmatprep.subr.bf16.mxu0 %v1260
        %1493 = vmatpush1.bf16.msra.mxu0 %v1259
        %1494 = vmatprep.subr.bf16.mxu0 %v1268
        %1495 = vmatpush1.bf16.msra.mxu0 %v1267
        %1496 = vmatprep.subr.bf16.mxu0 %v1276
        %1497 = vmatpush1.bf16.msra.mxu0 %v1275
        %1498 = vmatprep.subr.bf16.mxu0 %v1284
        %1499 = vmatpush1.bf16.msra.mxu0 %v1283
        %1500 = vmatprep.subr.bf16.mxu0 %v1292
        %1501 = vmatpush1.bf16.msra.mxu0 %v1291
        %1502 = vmatprep.subr.bf16.mxu0 0
        %1503 = vmatpush1.bf16.msra.mxu0 0
        %1504 = vmatprep.subr.bf16.mxu0 0
        %1505 = vmatpush1.bf16.msra.mxu0 0
        %1506 = vmatprep.subr.bf16.mxu0 0
        %1507 = vmatpush1.bf16.msra.mxu0 0
        %1508 = vmatprep.subr.bf16.mxu0 0
        %1509 = vmatpush1.bf16.msra.mxu0 0
        %1510 = vmatprep.subr.bf16.mxu0 0
        %1511 = vmatpush1.bf16.msra.mxu0 0
        %1512 = vmatprep.subr.bf16.mxu0 0
        %1513 = vmatpush1.bf16.msra.mxu0 0
        %1514 = vmatprep.subr.bf16.mxu0 0
        %1515 = vmatpush1.bf16.msra.mxu0 0
        %1516 = vmatprep.subr.bf16.mxu0 0
        %1517 = vmatpush1.bf16.msra.mxu0 0
        %1518 = vmatprep.mubr.bf16.mxu0 0
        %1519 = vmatmul.mubr.bf16.gmra.mrb[0].mxu0 %v930
        %v1520 = vpop.f32.mrb[0].mxu0
        %v1521 = vadd.f32 %v1024, %v1520
        %v1522 = vpop.f32.mrb[0].mxu0
        %v1523 = vadd.f32 %v1028, %v1522
        %v1524 = vpop.f32.mrb[0].mxu0
        %v1525 = vadd.f32 %v1024, %v1524
        %v1526 = vpop.f32.mrb[0].mxu0
        %v1527 = vadd.f32 %v1028, %v1526
        %1528 = vdwg.mxu0
        %p1529 = scmp.eq.s32.totalorder %s39, 0
        // Predicated region
        $region113: #{transformation_net.6} parent=83 // pred_check
          %p1530 = pneg %p1529
        $region114: #{transformation_net.6} parent=83 // pred_check_branch
          %1532 = sbr.rel (%p1530) target = $region116
        $region115: #{transformation_net.6} parent=83 // pred_region
          %1533 = vst [vmem:[%s695] sm:$0xff] 0.0
          %1534 = vst [vmem:[%s699] sm:$0xff] 0.0
          %1535 = vst [vmem:[%s703] sm:$0xff] -inf
        $region116: #{transformation_net.6} parent=83 // pred_fallthru
          _
        %v1536 = vld [vmem:[%s695] sm:$0xff]
        %v1537 = vadd.f32 %v1392, %v1396
        %v1538 = vrot.slane %v1537, 4
        %v1539 = vadd.f32 %v1537, %v1538
        %v1540 = vrot.slane %v1539, 2
        %v1541 = vadd.f32 %v1539, %v1540
        %v1542 = vrot.slane %v1541, 1
        %v1543 = vadd.f32 %v1541, %v1542
        %v1544 = vadd.f32 %v1394, %v1398
        %v1545 = vrot.slane %v1544, 4
        %v1546 = vadd.f32 %v1544, %v1545
        %v1547 = vrot.slane %v1546, 2
        %v1548 = vadd.f32 %v1546, %v1547
        %v1549 = vrot.slane %v1548, 1
        %v1550 = vadd.f32 %v1548, %v1549
        %v1551 = vadd.f32 %v1435, %v1439
        %v1552 = vrot.slane %v1551, 4
        %v1553 = vadd.f32 %v1551, %v1552
        %v1554 = vrot.slane %v1553, 2
        %v1555 = vadd.f32 %v1553, %v1554
        %v1556 = vrot.slane %v1555, 1
        %v1557 = vadd.f32 %v1555, %v1556
        %v1558 = vadd.f32 %v1437, %v1441
        %v1559 = vrot.slane %v1558, 4
        %v1560 = vadd.f32 %v1558, %v1559
        %v1561 = vrot.slane %v1560, 2
        %v1562 = vadd.f32 %v1560, %v1561
        %v1563 = vrot.slane %v1562, 1
        %v1564 = vadd.f32 %v1562, %v1563
        %v1565 = vadd.f32 %v1478, %v1482
        %v1566 = vrot.slane %v1565, 4
        %v1567 = vadd.f32 %v1565, %v1566
        %v1568 = vrot.slane %v1567, 2
        %v1569 = vadd.f32 %v1567, %v1568
        %v1570 = vrot.slane %v1569, 1
        %v1571 = vadd.f32 %v1569, %v1570
        %v1572 = vadd.f32 %v1480, %v1484
        %v1573 = vrot.slane %v1572, 4
        %v1574 = vadd.f32 %v1572, %v1573
        %v1575 = vrot.slane %v1574, 2
        %v1576 = vadd.f32 %v1574, %v1575
        %v1577 = vrot.slane %v1576, 1
        %v1578 = vadd.f32 %v1576, %v1577
        %v1579 = vadd.f32 %v1521, %v1525
        %v1580 = vrot.slane %v1579, 4
        %v1581 = vadd.f32 %v1579, %v1580
        %v1582 = vrot.slane %v1581, 2
        %v1583 = vadd.f32 %v1581, %v1582
        %v1584 = vrot.slane %v1583, 1
        %v1585 = vadd.f32 %v1583, %v1584
        %v1586 = vadd.f32 %v1523, %v1527
        %v1587 = vrot.slane %v1586, 4
        %v1588 = vadd.f32 %v1586, %v1587
        %v1589 = vrot.slane %v1588, 2
        %v1590 = vadd.f32 %v1588, %v1589
        %v1591 = vrot.slane %v1590, 1
        %v1592 = vadd.f32 %v1590, %v1591
        %v1601 = vcombine.low %v1543, %v1550
        %v1602 = vcombine.low %v1557, %v1564
        %v1603 = vcombine.low %v1571, %v1578
        %v1604 = vcombine.low %v1585, %v1592
        %v1606 = vunpack.c.l.s4 1966171168
        %v1607 = vunpack.c.0.s8 %v1606
        %v1608 = vlaneseq
        %v1609 = vshrl.u32 %v1608, 7
        %v1610 = vsub.s32 %v1607, %v1609
        %v1611 = vrot.slane %v1601, %v1610
        %v1613 = vunpack.c.l.s4 1966171168
        %v1614 = vunpack.c.0.s8 %v1613
        %v1615 = vlaneseq
        %v1616 = vshrl.u32 %v1615, 7
        %v1617 = vsub.s32 %v1614, %v1616
        %v1618 = vrot.slane %v1602, %v1617
        %v1620 = vunpack.c.l.s4 1966171168
        %v1621 = vunpack.c.0.s8 %v1620
        %v1622 = vlaneseq
        %v1623 = vshrl.u32 %v1622, 7
        %v1624 = vsub.s32 %v1621, %v1623
        %v1625 = vrot.slane %v1603, %v1624
        %v1627 = vunpack.c.l.s4 1966171168
        %v1628 = vunpack.c.0.s8 %v1627
        %v1629 = vlaneseq
        %v1630 = vshrl.u32 %v1629, 7
        %v1631 = vsub.s32 %v1628, %v1630
        %v1632 = vrot.slane %v1604, %v1631
        %v1633 = vcombine.low %v1611, %v1618
        %v1634 = vcombine.low %v1625, %v1632
        %v1636 = vunpack.c.l.s4 1966171168
        %v1637 = vunpack.c.0.s8 %v1636
        %v1638 = vlaneseq
        %v1639 = vshrl.u32 %v1638, 7
        %v1640 = vsub.s32 %v1637, %v1639
        %v1641 = vrot.slane %v1633, %v1640
        %v1643 = vunpack.c.l.s4 1966171168
        %v1644 = vunpack.c.0.s8 %v1643
        %v1645 = vlaneseq
        %v1646 = vshrl.u32 %v1645, 7
        %v1647 = vsub.s32 %v1644, %v1646
        %v1648 = vrot.slane %v1634, %v1647
        %v1649 = vcombine.low %v1641, %v1648
        %v1651 = vadd.f32 %v1536, %v1649
        %1652 = vst [vmem:[%s695] sm:$0xff] %v1651
        %v1653 = vld [vmem:[%s699] sm:$0xff]
        %v1654 = vmul.f32 %v1392, %v1392
        %v1655 = vmul.f32 %v1394, %v1394
        %v1656 = vmul.f32 %v1435, %v1435
        %v1657 = vmul.f32 %v1437, %v1437
        %v1658 = vmul.f32 %v1478, %v1478
        %v1659 = vmul.f32 %v1480, %v1480
        %v1660 = vmul.f32 %v1521, %v1521
        %v1661 = vmul.f32 %v1523, %v1523
        %v1662 = vmul.f32 %v1396, %v1396
        %v1663 = vmul.f32 %v1398, %v1398
        %v1664 = vmul.f32 %v1439, %v1439
        %v1665 = vmul.f32 %v1441, %v1441
        %v1666 = vmul.f32 %v1482, %v1482
        %v1667 = vmul.f32 %v1484, %v1484
        %v1668 = vmul.f32 %v1525, %v1525
        %v1669 = vmul.f32 %v1527, %v1527
        %v1670 = vadd.f32 %v1654, %v1662
        %v1671 = vrot.slane %v1670, 4
        %v1672 = vadd.f32 %v1670, %v1671
        %v1673 = vrot.slane %v1672, 2
        %v1674 = vadd.f32 %v1672, %v1673
        %v1675 = vrot.slane %v1674, 1
        %v1676 = vadd.f32 %v1674, %v1675
        %v1677 = vadd.f32 %v1655, %v1663
        %v1678 = vrot.slane %v1677, 4
        %v1679 = vadd.f32 %v1677, %v1678
        %v1680 = vrot.slane %v1679, 2
        %v1681 = vadd.f32 %v1679, %v1680
        %v1682 = vrot.slane %v1681, 1
        %v1683 = vadd.f32 %v1681, %v1682
        %v1684 = vadd.f32 %v1656, %v1664
        %v1685 = vrot.slane %v1684, 4
        %v1686 = vadd.f32 %v1684, %v1685
        %v1687 = vrot.slane %v1686, 2
        %v1688 = vadd.f32 %v1686, %v1687
        %v1689 = vrot.slane %v1688, 1
        %v1690 = vadd.f32 %v1688, %v1689
        %v1691 = vadd.f32 %v1657, %v1665
        %v1692 = vrot.slane %v1691, 4
        %v1693 = vadd.f32 %v1691, %v1692
        %v1694 = vrot.slane %v1693, 2
        %v1695 = vadd.f32 %v1693, %v1694
        %v1696 = vrot.slane %v1695, 1
        %v1697 = vadd.f32 %v1695, %v1696
        %v1698 = vadd.f32 %v1658, %v1666
        %v1699 = vrot.slane %v1698, 4
        %v1700 = vadd.f32 %v1698, %v1699
        %v1701 = vrot.slane %v1700, 2
        %v1702 = vadd.f32 %v1700, %v1701
        %v1703 = vrot.slane %v1702, 1
        %v1704 = vadd.f32 %v1702, %v1703
        %v1705 = vadd.f32 %v1659, %v1667
        %v1706 = vrot.slane %v1705, 4
        %v1707 = vadd.f32 %v1705, %v1706
        %v1708 = vrot.slane %v1707, 2
        %v1709 = vadd.f32 %v1707, %v1708
        %v1710 = vrot.slane %v1709, 1
        %v1711 = vadd.f32 %v1709, %v1710
        %v1712 = vadd.f32 %v1660, %v1668
        %v1713 = vrot.slane %v1712, 4
        %v1714 = vadd.f32 %v1712, %v1713
        %v1715 = vrot.slane %v1714, 2
        %v1716 = vadd.f32 %v1714, %v1715
        %v1717 = vrot.slane %v1716, 1
        %v1718 = vadd.f32 %v1716, %v1717
        %v1719 = vadd.f32 %v1661, %v1669
        %v1720 = vrot.slane %v1719, 4
        %v1721 = vadd.f32 %v1719, %v1720
        %v1722 = vrot.slane %v1721, 2
        %v1723 = vadd.f32 %v1721, %v1722
        %v1724 = vrot.slane %v1723, 1
        %v1725 = vadd.f32 %v1723, %v1724
        %v1734 = vcombine.low %v1676, %v1683
        %v1735 = vcombine.low %v1690, %v1697
        %v1736 = vcombine.low %v1704, %v1711
        %v1737 = vcombine.low %v1718, %v1725
        %v1739 = vunpack.c.l.s4 1966171168
        %v1740 = vunpack.c.0.s8 %v1739
        %v1741 = vlaneseq
        %v1742 = vshrl.u32 %v1741, 7
        %v1743 = vsub.s32 %v1740, %v1742
        %v1744 = vrot.slane %v1734, %v1743
        %v1746 = vunpack.c.l.s4 1966171168
        %v1747 = vunpack.c.0.s8 %v1746
        %v1748 = vlaneseq
        %v1749 = vshrl.u32 %v1748, 7
        %v1750 = vsub.s32 %v1747, %v1749
        %v1751 = vrot.slane %v1735, %v1750
        %v1753 = vunpack.c.l.s4 1966171168
        %v1754 = vunpack.c.0.s8 %v1753
        %v1755 = vlaneseq
        %v1756 = vshrl.u32 %v1755, 7
        %v1757 = vsub.s32 %v1754, %v1756
        %v1758 = vrot.slane %v1736, %v1757
        %v1760 = vunpack.c.l.s4 1966171168
        %v1761 = vunpack.c.0.s8 %v1760
        %v1762 = vlaneseq
        %v1763 = vshrl.u32 %v1762, 7
        %v1764 = vsub.s32 %v1761, %v1763
        %v1765 = vrot.slane %v1737, %v1764
        %v1766 = vcombine.low %v1744, %v1751
        %v1767 = vcombine.low %v1758, %v1765
        %v1769 = vunpack.c.l.s4 1966171168
        %v1770 = vunpack.c.0.s8 %v1769
        %v1771 = vlaneseq
        %v1772 = vshrl.u32 %v1771, 7
        %v1773 = vsub.s32 %v1770, %v1772
        %v1774 = vrot.slane %v1766, %v1773
        %v1776 = vunpack.c.l.s4 1966171168
        %v1777 = vunpack.c.0.s8 %v1776
        %v1778 = vlaneseq
        %v1779 = vshrl.u32 %v1778, 7
        %v1780 = vsub.s32 %v1777, %v1779
        %v1781 = vrot.slane %v1767, %v1780
        %v1782 = vcombine.low %v1774, %v1781
        %v1784 = vadd.f32 %v1653, %v1782
        %1785 = vst [vmem:[%s699] sm:$0xff] %v1784
        %v1786 = vld [vmem:[%s703] sm:$0xff]
        %v1787 = vld [vmem:[%s15] sm:$0xff]
        %v1789 = vlaneseq
        %v1790 = vshrl.u32 %v1789, 7
        %v1791 = vsub.s32 0, %v1790
        %v1792 = vrot.slane %v1787, %v1791
        %v1793 = vlaneseq
        %v1794 = vshrl.u32 %v1793, 7
        %v1795 = vsub.s32 1, %v1794
        %v1796 = vrot.slane %v1787, %v1795
        %v1797 = vlaneseq
        %v1798 = vshrl.u32 %v1797, 7
        %v1799 = vsub.s32 2, %v1798
        %v1800 = vrot.slane %v1787, %v1799
        %v1801 = vlaneseq
        %v1802 = vshrl.u32 %v1801, 7
        %v1803 = vsub.s32 3, %v1802
        %v1804 = vrot.slane %v1787, %v1803
        %v1805 = vlaneseq
        %v1806 = vshrl.u32 %v1805, 7
        %v1807 = vsub.s32 4, %v1806
        %v1808 = vrot.slane %v1787, %v1807
        %v1809 = vlaneseq
        %v1810 = vshrl.u32 %v1809, 7
        %v1811 = vsub.s32 5, %v1810
        %v1812 = vrot.slane %v1787, %v1811
        %v1813 = vlaneseq
        %v1814 = vshrl.u32 %v1813, 7
        %v1815 = vsub.s32 6, %v1814
        %v1816 = vrot.slane %v1787, %v1815
        %v1817 = vlaneseq
        %v1818 = vshrl.u32 %v1817, 7
        %v1819 = vsub.s32 7, %v1818
        %v1820 = vrot.slane %v1787, %v1819
        %v1829 = vmul.f32 %v1392, %v1792
        %v1830 = vmul.f32 %v1394, %v1796
        %v1831 = vmul.f32 %v1435, %v1800
        %v1832 = vmul.f32 %v1437, %v1804
        %v1833 = vmul.f32 %v1478, %v1808
        %v1834 = vmul.f32 %v1480, %v1812
        %v1835 = vmul.f32 %v1521, %v1816
        %v1836 = vmul.f32 %v1523, %v1820
        %v1837 = vmul.f32 %v1396, %v1792
        %v1838 = vmul.f32 %v1398, %v1796
        %v1839 = vmul.f32 %v1439, %v1800
        %v1840 = vmul.f32 %v1441, %v1804
        %v1841 = vmul.f32 %v1482, %v1808
        %v1842 = vmul.f32 %v1484, %v1812
        %v1843 = vmul.f32 %v1525, %v1816
        %v1844 = vmul.f32 %v1527, %v1820
        %v1845 = vmax.f32 %v1829, %v1837
        %v1846 = vrot.slane %v1845, 4
        %v1847 = vmax.f32 %v1845, %v1846
        %v1848 = vrot.slane %v1847, 2
        %v1849 = vmax.f32 %v1847, %v1848
        %v1850 = vrot.slane %v1849, 1
        %v1851 = vmax.f32 %v1849, %v1850
        %v1852 = vmax.f32 %v1830, %v1838
        %v1853 = vrot.slane %v1852, 4
        %v1854 = vmax.f32 %v1852, %v1853
        %v1855 = vrot.slane %v1854, 2
        %v1856 = vmax.f32 %v1854, %v1855
        %v1857 = vrot.slane %v1856, 1
        %v1858 = vmax.f32 %v1856, %v1857
        %v1859 = vmax.f32 %v1831, %v1839
        %v1860 = vrot.slane %v1859, 4
        %v1861 = vmax.f32 %v1859, %v1860
        %v1862 = vrot.slane %v1861, 2
        %v1863 = vmax.f32 %v1861, %v1862
        %v1864 = vrot.slane %v1863, 1
        %v1865 = vmax.f32 %v1863, %v1864
        %v1866 = vmax.f32 %v1832, %v1840
        %v1867 = vrot.slane %v1866, 4
        %v1868 = vmax.f32 %v1866, %v1867
        %v1869 = vrot.slane %v1868, 2
        %v1870 = vmax.f32 %v1868, %v1869
        %v1871 = vrot.slane %v1870, 1
        %v1872 = vmax.f32 %v1870, %v1871
        %v1873 = vmax.f32 %v1833, %v1841
        %v1874 = vrot.slane %v1873, 4
        %v1875 = vmax.f32 %v1873, %v1874
        %v1876 = vrot.slane %v1875, 2
        %v1877 = vmax.f32 %v1875, %v1876
        %v1878 = vrot.slane %v1877, 1
        %v1879 = vmax.f32 %v1877, %v1878
        %v1880 = vmax.f32 %v1834, %v1842
        %v1881 = vrot.slane %v1880, 4
        %v1882 = vmax.f32 %v1880, %v1881
        %v1883 = vrot.slane %v1882, 2
        %v1884 = vmax.f32 %v1882, %v1883
        %v1885 = vrot.slane %v1884, 1
        %v1886 = vmax.f32 %v1884, %v1885
        %v1887 = vmax.f32 %v1835, %v1843
        %v1888 = vrot.slane %v1887, 4
        %v1889 = vmax.f32 %v1887, %v1888
        %v1890 = vrot.slane %v1889, 2
        %v1891 = vmax.f32 %v1889, %v1890
        %v1892 = vrot.slane %v1891, 1
        %v1893 = vmax.f32 %v1891, %v1892
        %v1894 = vmax.f32 %v1836, %v1844
        %v1895 = vrot.slane %v1894, 4
        %v1896 = vmax.f32 %v1894, %v1895
        %v1897 = vrot.slane %v1896, 2
        %v1898 = vmax.f32 %v1896, %v1897
        %v1899 = vrot.slane %v1898, 1
        %v1900 = vmax.f32 %v1898, %v1899
        %v1909 = vcombine.low %v1851, %v1858
        %v1910 = vcombine.low %v1865, %v1872
        %v1911 = vcombine.low %v1879, %v1886
        %v1912 = vcombine.low %v1893, %v1900
        %v1914 = vunpack.c.l.s4 1966171168
        %v1915 = vunpack.c.0.s8 %v1914
        %v1916 = vlaneseq
        %v1917 = vshrl.u32 %v1916, 7
        %v1918 = vsub.s32 %v1915, %v1917
        %v1919 = vrot.slane %v1909, %v1918
        %v1921 = vunpack.c.l.s4 1966171168
        %v1922 = vunpack.c.0.s8 %v1921
        %v1923 = vlaneseq
        %v1924 = vshrl.u32 %v1923, 7
        %v1925 = vsub.s32 %v1922, %v1924
        %v1926 = vrot.slane %v1910, %v1925
        %v1928 = vunpack.c.l.s4 1966171168
        %v1929 = vunpack.c.0.s8 %v1928
        %v1930 = vlaneseq
        %v1931 = vshrl.u32 %v1930, 7
        %v1932 = vsub.s32 %v1929, %v1931
        %v1933 = vrot.slane %v1911, %v1932
        %v1935 = vunpack.c.l.s4 1966171168
        %v1936 = vunpack.c.0.s8 %v1935
        %v1937 = vlaneseq
        %v1938 = vshrl.u32 %v1937, 7
        %v1939 = vsub.s32 %v1936, %v1938
        %v1940 = vrot.slane %v1912, %v1939
        %v1941 = vcombine.low %v1919, %v1926
        %v1942 = vcombine.low %v1933, %v1940
        %v1944 = vunpack.c.l.s4 1966171168
        %v1945 = vunpack.c.0.s8 %v1944
        %v1946 = vlaneseq
        %v1947 = vshrl.u32 %v1946, 7
        %v1948 = vsub.s32 %v1945, %v1947
        %v1949 = vrot.slane %v1941, %v1948
        %v1951 = vunpack.c.l.s4 1966171168
        %v1952 = vunpack.c.0.s8 %v1951
        %v1953 = vlaneseq
        %v1954 = vshrl.u32 %v1953, 7
        %v1955 = vsub.s32 %v1952, %v1954
        %v1956 = vrot.slane %v1942, %v1955
        %v1957 = vcombine.low %v1949, %v1956
        %v1959 = vmax.f32 %v1786, %v1957
        %1960 = vst [vmem:[%s703] sm:$0xff] %v1959
        %p1961 = scmp.lt.s32.totalorder %s38, 1
        %s1962 = scalar_select %p1961, %s38, 1
        %s1963 = smul.addr %s1962, 8
        %s1964 = scalar_lea.vmem %s16, %s1963
        %p1965 = scmp.lt.s32.totalorder %s38, 1
        %s1966 = scalar_select %p1965, %s38, 1
        %s1967 = smul.addr %s1966, 8
        %s1968 = scalar_lea.vmem %s17, %s1967
        %p1969 = scmp.lt.s32.totalorder %s38, 1
        %s1970 = scalar_select %p1969, %s38, 1
        %s1971 = smul.addr %s1970, 8
        %s1972 = scalar_lea.vmem %s18, %s1971
        // Predicated region
        $region117: #{transformation_net.6} parent=83 // pred_check
          %p1973 = pneg %p407
        $region118: #{transformation_net.6} parent=83 // pred_check_branch
          %1975 = sbr.rel (%p1973) target = $region120
        $region119: #{transformation_net.6} parent=83 // pred_region
          _
        $region120: #{transformation_net.6} parent=83 // pred_fallthru
          _
        // Predicated region
        $region121: #{transformation_net.6} parent=83 // pred_check
          %p1976 = pneg %p433
        $region122: #{transformation_net.6} parent=83 // pred_check_branch
          %1978 = sbr.rel (%p1976) target = $region124
        $region123: #{transformation_net.6} parent=83 // pred_region
          _
        $region124: #{transformation_net.6} parent=83 // pred_fallthru
          _
        // Predicated region
        $region125: #{transformation_net.6} parent=83 // pred_check
          %p1979 = pneg %p459
        $region126: #{transformation_net.6} parent=83 // pred_check_branch
          %1981 = sbr.rel (%p1979) target = $region128
        $region127: #{transformation_net.6} parent=83 // pred_region
          _
        $region128: #{transformation_net.6} parent=83 // pred_fallthru
          _
      $region84: #{transformation_net.6} parent=5 // pred_fallthru
        _
      %p1982 = scmp.le.s32.totalorder 2, %s29
      // Predicated region
      $region129: #{transformation_net.6} parent=5 // pred_check
        %p1983 = pneg %p1982
      $region130: #{transformation_net.6} parent=5 // pred_check_branch
        %1985 = sbr.rel (%p1983) target = $region132
      $region131: #{transformation_net.6} parent=5 // pred_region
        %s1986 = ssub.s32 %s29, 2
        // Predicated region
        $region133: #{transformation_net.6} parent=131 // pred_check
          %p1987 = pneg %p413
        $region134: #{transformation_net.6} parent=131 // pred_check_branch
          %1989 = sbr.rel (%p1987) target = $region136
        $region135: #{transformation_net.6} parent=131 // pred_region
          %p1990 = scmp.lt.s32.totalorder %s40, 1
          %s1991 = scalar_select %p1990, %s40, 1
          %s1992 = smul.addr %s1991, 8
          %s1993 = scalar_lea.vmem %s16, %s1992
        $region136: #{transformation_net.6} parent=131 // pred_fallthru
          _
        // Predicated region
        $region137: #{transformation_net.6} parent=131 // pred_check
          %p1994 = pneg %p439
        $region138: #{transformation_net.6} parent=131 // pred_check_branch
          %1996 = sbr.rel (%p1994) target = $region140
        $region139: #{transformation_net.6} parent=131 // pred_region
          %p1997 = scmp.lt.s32.totalorder %s40, 1
          %s1998 = scalar_select %p1997, %s40, 1
          %s1999 = smul.addr %s1998, 8
          %s2000 = scalar_lea.vmem %s17, %s1999
        $region140: #{transformation_net.6} parent=131 // pred_fallthru
          _
        // Predicated region
        $region141: #{transformation_net.6} parent=131 // pred_check
          %p2001 = pneg %p465
        $region142: #{transformation_net.6} parent=131 // pred_check_branch
          %2003 = sbr.rel (%p2001) target = $region144
        $region143: #{transformation_net.6} parent=131 // pred_region
          %p2004 = scmp.lt.s32.totalorder %s40, 1
          %s2005 = scalar_select %p2004, %s40, 1
          %s2006 = smul.addr %s2005, 8
          %s2007 = scalar_lea.vmem %s18, %s2006
        $region144: #{transformation_net.6} parent=131 // pred_fallthru
          _
      $region132: #{transformation_net.6} parent=5 // pred_fallthru
        _
    $region6: #{transformation_net.6} parent=1 // loop_footer
      %s33 = sadd.s32 1, %s29
    $region7: #{transformation_net.6} parent=1 // loop_footer_branch
      %28 = sbr.rel target = $region3
    $region8: #{transformation_net.6} parent=1 // loop_exit
      _
    %2008 = vsyncpa [#allocation3], 1
    %s2009 = scalar_lea.sflag [#allocation3], 1
    %2010 = vsyncpa %s2009, 1
    %2011 = vsyncpa [#allocation5], 1
    %2012 = vsyncpa [#allocation8], 1
    %2013 = vsyncpa [#allocation11], 1

// kernel: transformation_net.7
$region0: #{transformation_net.7}
  #allocation0 [shape = 'u32[]', space=smem, size = 0x4, offset = 0x4, fixed_abs, tag = 'smem constant byte address 0x4 - core index']
  #allocation1 [shape = 'u32[144,128]{1,0:T(1,128)}', space=vmem, size = 0x12000, scoped, tag = 'internal scratch']
  %s0 = inlined_call_operand.vmem [shape: f32[2,1024], index: 0, kind: input, shape index: {}]
  %s1 = inlined_call_operand.vmem [shape: f32[1,1024], index: 1, kind: input, shape index: {}]
  %s2 = inlined_call_operand.vmem [shape: f32[1,1024], index: 2, kind: input, shape index: {}]
  %s3 = inlined_call_operand.vmem [shape: f32[1,1024], index: 3, kind: input, shape index: {}]
  %s4 = inlined_call_operand.vmem [shape: f32[1,1024], index: 4, kind: input, shape index: {}]
  %s5 = inlined_call_operand.vmem [shape: f32[1,1024], index: 5, kind: input, shape index: {}]
  %s6 = inlined_call_operand.vmem [shape: bf16[1024,512], index: 6, kind: input, shape index: {}]
  %s7 = inlined_call_operand.vmem [shape: f32[1,512], index: 7, kind: input, shape index: {}]
  %s8 = inlined_call_operand.vmem [shape: f32[1,512], index: 8, kind: input, shape index: {}]
  %s9 = inlined_call_operand.vmem [shape: f32[1,512], index: 9, kind: input, shape index: {}]
  %s10 = inlined_call_operand.vmem [shape: bf16[512,256], index: 10, kind: input, shape index: {}]
  %s11 = inlined_call_operand.vmem [shape: f32[1,256], index: 11, kind: input, shape index: {}]
  %s12 = inlined_call_operand.vmem [shape: f32[1,256], index: 12, kind: input, shape index: {}]
  %s13 = inlined_call_operand.vmem [shape: f32[1,256], index: 13, kind: input, shape index: {}]
  %s14 = inlined_call_operand.vmem [shape: bf16[256,128], index: 14, kind: input, shape index: {}]
  %s15 = inlined_call_operand.vmem [shape: f32[1,128], index: 15, kind: input, shape index: {}]
  %s16 = inlined_call_operand.vmem [shape: f32[1,128], index: 16, kind: input, shape index: {}]
  %s17 = inlined_call_operand.vmem [shape: f32[2,128], index: 17, kind: output, shape index: {}]
  %s18 = sld [smem:[#allocation0]]
  $region78: #{transformation_net.7} parent=0
    _
  %s20 = ssub.s32 1, %s18
  %s21 = scalar_select 0, %s20, %s18
  // Predicated region
  $region2: #{transformation_net.7} parent=0 // pred_check
    _
  $region3: #{transformation_net.7} parent=0 // pred_check_branch
    %23 = sbr.rel (0) target = $region5
  $region4: #{transformation_net.7} parent=0 // pred_region
    _
  $region5: #{transformation_net.7} parent=0 // pred_fallthru
    _
  // Predicated region
  $region6: #{transformation_net.7} parent=0 // pred_check
    _
  $region7: #{transformation_net.7} parent=0 // pred_check_branch
    %25 = sbr.rel (0) target = $region9
  $region8: #{transformation_net.7} parent=0 // pred_region
    _
  $region9: #{transformation_net.7} parent=0 // pred_fallthru
    _
  // Predicated region
  $region10: #{transformation_net.7} parent=0 // pred_check
    _
  $region11: #{transformation_net.7} parent=0 // pred_check_branch
    %27 = sbr.rel (0) target = $region13
  $region12: #{transformation_net.7} parent=0 // pred_region
    _
  $region13: #{transformation_net.7} parent=0 // pred_fallthru
    _
  // Predicated region
  $region14: #{transformation_net.7} parent=0 // pred_check
    _
  $region15: #{transformation_net.7} parent=0 // pred_check_branch
    %29 = sbr.rel (0) target = $region17
  $region16: #{transformation_net.7} parent=0 // pred_region
    _
  $region17: #{transformation_net.7} parent=0 // pred_fallthru
    _
  // Predicated region
  $region18: #{transformation_net.7} parent=0 // pred_check
    _
  $region19: #{transformation_net.7} parent=0 // pred_check_branch
    %31 = sbr.rel (0) target = $region21
  $region20: #{transformation_net.7} parent=0 // pred_region
    _
  $region21: #{transformation_net.7} parent=0 // pred_fallthru
    _
  // Predicated region
  $region22: #{transformation_net.7} parent=0 // pred_check
    _
  $region23: #{transformation_net.7} parent=0 // pred_check_branch
    %33 = sbr.rel (0) target = $region25
  $region24: #{transformation_net.7} parent=0 // pred_region
    _
  $region25: #{transformation_net.7} parent=0 // pred_fallthru
    _
  // Predicated region
  $region26: #{transformation_net.7} parent=0 // pred_check
    _
  $region27: #{transformation_net.7} parent=0 // pred_check_branch
    %35 = sbr.rel (0) target = $region29
  $region28: #{transformation_net.7} parent=0 // pred_region
    _
  $region29: #{transformation_net.7} parent=0 // pred_fallthru
    _
  // Predicated region
  $region30: #{transformation_net.7} parent=0 // pred_check
    _
  $region31: #{transformation_net.7} parent=0 // pred_check_branch
    %37 = sbr.rel (0) target = $region33
  $region32: #{transformation_net.7} parent=0 // pred_region
    _
  $region33: #{transformation_net.7} parent=0 // pred_fallthru
    _
  // Predicated region
  $region34: #{transformation_net.7} parent=0 // pred_check
    _
  $region35: #{transformation_net.7} parent=0 // pred_check_branch
    %39 = sbr.rel (0) target = $region37
  $region36: #{transformation_net.7} parent=0 // pred_region
    _
  $region37: #{transformation_net.7} parent=0 // pred_fallthru
    _
  // Predicated region
  $region38: #{transformation_net.7} parent=0 // pred_check
    _
  $region39: #{transformation_net.7} parent=0 // pred_check_branch
    %41 = sbr.rel (0) target = $region41
  $region40: #{transformation_net.7} parent=0 // pred_region
    _
  $region41: #{transformation_net.7} parent=0 // pred_fallthru
    _
  // Predicated region
  $region42: #{transformation_net.7} parent=0 // pred_check
    _
  $region43: #{transformation_net.7} parent=0 // pred_check_branch
    %43 = sbr.rel (0) target = $region45
  $region44: #{transformation_net.7} parent=0 // pred_region
    _
  $region45: #{transformation_net.7} parent=0 // pred_fallthru
    _
  // Predicated region
  $region46: #{transformation_net.7} parent=0 // pred_check
    _
  $region47: #{transformation_net.7} parent=0 // pred_check_branch
    %45 = sbr.rel (0) target = $region49
  $region48: #{transformation_net.7} parent=0 // pred_region
    _
  $region49: #{transformation_net.7} parent=0 // pred_fallthru
    _
  // Predicated region
  $region50: #{transformation_net.7} parent=0 // pred_check
    _
  $region51: #{transformation_net.7} parent=0 // pred_check_branch
    %47 = sbr.rel (0) target = $region53
  $region52: #{transformation_net.7} parent=0 // pred_region
    _
  $region53: #{transformation_net.7} parent=0 // pred_fallthru
    _
  // Predicated region
  $region54: #{transformation_net.7} parent=0 // pred_check
    _
  $region55: #{transformation_net.7} parent=0 // pred_check_branch
    %49 = sbr.rel (0) target = $region57
  $region56: #{transformation_net.7} parent=0 // pred_region
    _
  $region57: #{transformation_net.7} parent=0 // pred_fallthru
    _
  // Predicated region
  $region58: #{transformation_net.7} parent=0 // pred_check
    _
  $region59: #{transformation_net.7} parent=0 // pred_check_branch
    %51 = sbr.rel (0) target = $region61
  $region60: #{transformation_net.7} parent=0 // pred_region
    _
  $region61: #{transformation_net.7} parent=0 // pred_fallthru
    _
  // Predicated region
  $region62: #{transformation_net.7} parent=0 // pred_check
    _
  $region63: #{transformation_net.7} parent=0 // pred_check_branch
    %53 = sbr.rel (0) target = $region65
  $region64: #{transformation_net.7} parent=0 // pred_region
    _
  $region65: #{transformation_net.7} parent=0 // pred_fallthru
    _
  // Predicated region
  $region66: #{transformation_net.7} parent=0 // pred_check
    _
  $region67: #{transformation_net.7} parent=0 // pred_check_branch
    %55 = sbr.rel (0) target = $region69
  $region68: #{transformation_net.7} parent=0 // pred_region
    _
  $region69: #{transformation_net.7} parent=0 // pred_fallthru
    _
  %v57 = vld [vmem:[%s2] sm:$0xff]
  %v58 = vld [vmem:[%s0] sm:$0xff]
  %v59 = vld [vmem:[%s0 + $0x8] sm:$0xff]
  %v60 = vld [vmem:[%s1] sm:$0xff]
  %v62 = vlaneseq
  %v63 = vshrl.u32 %v62, 7
  %v64 = vsub.s32 0, %v63
  %v65 = vrot.slane %v60, %v64
  %v66 = vlaneseq
  %v67 = vshrl.u32 %v66, 7
  %v68 = vsub.s32 1, %v67
  %v69 = vrot.slane %v60, %v68
  %v70 = vlaneseq
  %v71 = vshrl.u32 %v70, 7
  %v72 = vsub.s32 2, %v71
  %v73 = vrot.slane %v60, %v72
  %v74 = vlaneseq
  %v75 = vshrl.u32 %v74, 7
  %v76 = vsub.s32 3, %v75
  %v77 = vrot.slane %v60, %v76
  %v78 = vlaneseq
  %v79 = vshrl.u32 %v78, 7
  %v80 = vsub.s32 4, %v79
  %v81 = vrot.slane %v60, %v80
  %v82 = vlaneseq
  %v83 = vshrl.u32 %v82, 7
  %v84 = vsub.s32 5, %v83
  %v85 = vrot.slane %v60, %v84
  %v86 = vlaneseq
  %v87 = vshrl.u32 %v86, 7
  %v88 = vsub.s32 6, %v87
  %v89 = vrot.slane %v60, %v88
  %v90 = vlaneseq
  %v91 = vshrl.u32 %v90, 7
  %v92 = vsub.s32 7, %v91
  %v93 = vrot.slane %v60, %v92
  %v94 = vcombine.low %v65, %v69
  %v95 = vcombine.low %v73, %v77
  %v97 = vunpack.c.l.s4 1983009808
  %v98 = vunpack.c.0.s8 %v97
  %v99 = vlaneseq
  %v100 = vshrl.u32 %v99, 7
  %v101 = vsub.s32 %v98, %v100
  %v102 = vrot.slane %v94, %v101
  %v104 = vunpack.c.l.s4 1983009808
  %v105 = vunpack.c.0.s8 %v104
  %v106 = vlaneseq
  %v107 = vshrl.u32 %v106, 7
  %v108 = vsub.s32 %v105, %v107
  %v109 = vrot.slane %v95, %v108
  %v110 = vcombine.low %v102, %v109
  %v111 = vcombine.low %v81, %v85
  %v112 = vcombine.low %v89, %v93
  %v114 = vunpack.c.l.s4 1983009808
  %v115 = vunpack.c.0.s8 %v114
  %v116 = vlaneseq
  %v117 = vshrl.u32 %v116, 7
  %v118 = vsub.s32 %v115, %v117
  %v119 = vrot.slane %v111, %v118
  %v121 = vunpack.c.l.s4 1983009808
  %v122 = vunpack.c.0.s8 %v121
  %v123 = vlaneseq
  %v124 = vshrl.u32 %v123, 7
  %v125 = vsub.s32 %v122, %v124
  %v126 = vrot.slane %v112, %v125
  %v127 = vcombine.low %v119, %v126
  %v130 = vmul.f32 %v58, %v110
  %v131 = vmul.f32 %v59, %v127
  %v132 = vld [vmem:[%s4] sm:$0xff]
  %v134 = vlaneseq
  %v135 = vshrl.u32 %v134, 7
  %v136 = vsub.s32 0, %v135
  %v137 = vrot.slane %v132, %v136
  %v138 = vlaneseq
  %v139 = vshrl.u32 %v138, 7
  %v140 = vsub.s32 1, %v139
  %v141 = vrot.slane %v132, %v140
  %v142 = vlaneseq
  %v143 = vshrl.u32 %v142, 7
  %v144 = vsub.s32 2, %v143
  %v145 = vrot.slane %v132, %v144
  %v146 = vlaneseq
  %v147 = vshrl.u32 %v146, 7
  %v148 = vsub.s32 3, %v147
  %v149 = vrot.slane %v132, %v148
  %v150 = vlaneseq
  %v151 = vshrl.u32 %v150, 7
  %v152 = vsub.s32 4, %v151
  %v153 = vrot.slane %v132, %v152
  %v154 = vlaneseq
  %v155 = vshrl.u32 %v154, 7
  %v156 = vsub.s32 5, %v155
  %v157 = vrot.slane %v132, %v156
  %v158 = vlaneseq
  %v159 = vshrl.u32 %v158, 7
  %v160 = vsub.s32 6, %v159
  %v161 = vrot.slane %v132, %v160
  %v162 = vlaneseq
  %v163 = vshrl.u32 %v162, 7
  %v164 = vsub.s32 7, %v163
  %v165 = vrot.slane %v132, %v164
  %v166 = vcombine.low %v137, %v141
  %v167 = vcombine.low %v145, %v149
  %v169 = vunpack.c.l.s4 1983009808
  %v170 = vunpack.c.0.s8 %v169
  %v171 = vlaneseq
  %v172 = vshrl.u32 %v171, 7
  %v173 = vsub.s32 %v170, %v172
  %v174 = vrot.slane %v166, %v173
  %v176 = vunpack.c.l.s4 1983009808
  %v177 = vunpack.c.0.s8 %v176
  %v178 = vlaneseq
  %v179 = vshrl.u32 %v178, 7
  %v180 = vsub.s32 %v177, %v179
  %v181 = vrot.slane %v167, %v180
  %v182 = vcombine.low %v174, %v181
  %v183 = vcombine.low %v153, %v157
  %v184 = vcombine.low %v161, %v165
  %v186 = vunpack.c.l.s4 1983009808
  %v187 = vunpack.c.0.s8 %v186
  %v188 = vlaneseq
  %v189 = vshrl.u32 %v188, 7
  %v190 = vsub.s32 %v187, %v189
  %v191 = vrot.slane %v183, %v190
  %v193 = vunpack.c.l.s4 1983009808
  %v194 = vunpack.c.0.s8 %v193
  %v195 = vlaneseq
  %v196 = vshrl.u32 %v195, 7
  %v197 = vsub.s32 %v194, %v196
  %v198 = vrot.slane %v184, %v197
  %v199 = vcombine.low %v191, %v198
  %v202 = vsub.f32 %v130, %v182
  %v203 = vsub.f32 %v131, %v199
  %v205 = vlaneseq
  %v206 = vshrl.u32 %v205, 7
  %v207 = vsub.s32 0, %v206
  %v208 = vrot.slane %v57, %v207
  %v209 = vlaneseq
  %v210 = vshrl.u32 %v209, 7
  %v211 = vsub.s32 1, %v210
  %v212 = vrot.slane %v57, %v211
  %v213 = vlaneseq
  %v214 = vshrl.u32 %v213, 7
  %v215 = vsub.s32 2, %v214
  %v216 = vrot.slane %v57, %v215
  %v217 = vlaneseq
  %v218 = vshrl.u32 %v217, 7
  %v219 = vsub.s32 3, %v218
  %v220 = vrot.slane %v57, %v219
  %v221 = vlaneseq
  %v222 = vshrl.u32 %v221, 7
  %v223 = vsub.s32 4, %v222
  %v224 = vrot.slane %v57, %v223
  %v225 = vlaneseq
  %v226 = vshrl.u32 %v225, 7
  %v227 = vsub.s32 5, %v226
  %v228 = vrot.slane %v57, %v227
  %v229 = vlaneseq
  %v230 = vshrl.u32 %v229, 7
  %v231 = vsub.s32 6, %v230
  %v232 = vrot.slane %v57, %v231
  %v233 = vlaneseq
  %v234 = vshrl.u32 %v233, 7
  %v235 = vsub.s32 7, %v234
  %v236 = vrot.slane %v57, %v235
  %v247 = vcombine.high %v202, %v202
  %v249 = vunpack.c.l.s4 1983009808
  %v250 = vunpack.c.0.s8 %v249
  %v251 = vlaneseq
  %v252 = vshrl.u32 %v251, 7
  %v253 = vsub.s32 %v250, %v252
  %v254 = vrot.slane %v202, %v253
  %v256 = vunpack.c.l.s4 1983009808
  %v257 = vunpack.c.0.s8 %v256
  %v258 = vlaneseq
  %v259 = vshrl.u32 %v258, 7
  %v260 = vsub.s32 %v257, %v259
  %v261 = vrot.slane %v247, %v260
  %v262 = vcombine.high %v254, %v254
  %v263 = vcombine.high %v261, %v261
  %v264 = vcombine.high %v203, %v203
  %v266 = vunpack.c.l.s4 1983009808
  %v267 = vunpack.c.0.s8 %v266
  %v268 = vlaneseq
  %v269 = vshrl.u32 %v268, 7
  %v270 = vsub.s32 %v267, %v269
  %v271 = vrot.slane %v203, %v270
  %v273 = vunpack.c.l.s4 1983009808
  %v274 = vunpack.c.0.s8 %v273
  %v275 = vlaneseq
  %v276 = vshrl.u32 %v275, 7
  %v277 = vsub.s32 %v274, %v276
  %v278 = vrot.slane %v264, %v277
  %v279 = vcombine.high %v271, %v271
  %v280 = vcombine.high %v278, %v278
  %v289 = vmul.f32 %v208, %v254
  %v290 = vmul.f32 %v212, %v262
  %v291 = vmul.f32 %v216, %v261
  %v292 = vmul.f32 %v220, %v263
  %v293 = vmul.f32 %v224, %v271
  %v294 = vmul.f32 %v228, %v279
  %v295 = vmul.f32 %v232, %v278
  %v296 = vmul.f32 %v236, %v280
  %v297 = vld [vmem:[%s5] sm:$0xff]
  %v299 = vlaneseq
  %v300 = vshrl.u32 %v299, 7
  %v301 = vsub.s32 0, %v300
  %v302 = vrot.slane %v297, %v301
  %v303 = vlaneseq
  %v304 = vshrl.u32 %v303, 7
  %v305 = vsub.s32 1, %v304
  %v306 = vrot.slane %v297, %v305
  %v307 = vlaneseq
  %v308 = vshrl.u32 %v307, 7
  %v309 = vsub.s32 2, %v308
  %v310 = vrot.slane %v297, %v309
  %v311 = vlaneseq
  %v312 = vshrl.u32 %v311, 7
  %v313 = vsub.s32 3, %v312
  %v314 = vrot.slane %v297, %v313
  %v315 = vlaneseq
  %v316 = vshrl.u32 %v315, 7
  %v317 = vsub.s32 4, %v316
  %v318 = vrot.slane %v297, %v317
  %v319 = vlaneseq
  %v320 = vshrl.u32 %v319, 7
  %v321 = vsub.s32 5, %v320
  %v322 = vrot.slane %v297, %v321
  %v323 = vlaneseq
  %v324 = vshrl.u32 %v323, 7
  %v325 = vsub.s32 6, %v324
  %v326 = vrot.slane %v297, %v325
  %v327 = vlaneseq
  %v328 = vshrl.u32 %v327, 7
  %v329 = vsub.s32 7, %v328
  %v330 = vrot.slane %v297, %v329
  %v339 = vmul.f32 %v289, %v302
  %v340 = vmul.f32 %v290, %v306
  %v341 = vmul.f32 %v291, %v310
  %v342 = vmul.f32 %v292, %v314
  %v343 = vmul.f32 %v293, %v318
  %v344 = vmul.f32 %v294, %v322
  %v345 = vmul.f32 %v295, %v326
  %v346 = vmul.f32 %v296, %v330
  %v347 = vld [vmem:[%s3] sm:$0xff]
  %v349 = vlaneseq
  %v350 = vshrl.u32 %v349, 7
  %v351 = vsub.s32 0, %v350
  %v352 = vrot.slane %v347, %v351
  %v353 = vlaneseq
  %v354 = vshrl.u32 %v353, 7
  %v355 = vsub.s32 1, %v354
  %v356 = vrot.slane %v347, %v355
  %v357 = vlaneseq
  %v358 = vshrl.u32 %v357, 7
  %v359 = vsub.s32 2, %v358
  %v360 = vrot.slane %v347, %v359
  %v361 = vlaneseq
  %v362 = vshrl.u32 %v361, 7
  %v363 = vsub.s32 3, %v362
  %v364 = vrot.slane %v347, %v363
  %v365 = vlaneseq
  %v366 = vshrl.u32 %v365, 7
  %v367 = vsub.s32 4, %v366
  %v368 = vrot.slane %v347, %v367
  %v369 = vlaneseq
  %v370 = vshrl.u32 %v369, 7
  %v371 = vsub.s32 5, %v370
  %v372 = vrot.slane %v347, %v371
  %v373 = vlaneseq
  %v374 = vshrl.u32 %v373, 7
  %v375 = vsub.s32 6, %v374
  %v376 = vrot.slane %v347, %v375
  %v377 = vlaneseq
  %v378 = vshrl.u32 %v377, 7
  %v379 = vsub.s32 7, %v378
  %v380 = vrot.slane %v347, %v379
  %v389 = vadd.f32 %v339, %v352
  %v390 = vadd.f32 %v340, %v356
  %v391 = vadd.f32 %v341, %v360
  %v392 = vadd.f32 %v342, %v364
  %v393 = vadd.f32 %v343, %v368
  %v394 = vadd.f32 %v344, %v372
  %v395 = vadd.f32 %v345, %v376
  %v396 = vadd.f32 %v346, %v380
  %v397 = vmax.f32 %v389, 0.0
  %v398 = vmax.f32 %v390, 0.0
  %v399 = vmax.f32 %v391, 0.0
  %v400 = vmax.f32 %v392, 0.0
  %v401 = vmax.f32 %v393, 0.0
  %v402 = vmax.f32 %v394, 0.0
  %v403 = vmax.f32 %v395, 0.0
  %v404 = vmax.f32 %v396, 0.0
  %v405 = vpack.c.bf16 %v397, %v397
  %v406 = vpack.c.bf16 %v398, %v398
  %v407 = vpack.c.bf16 %v399, %v399
  %v408 = vpack.c.bf16 %v400, %v400
  %v409 = vpack.c.bf16 %v401, %v401
  %v410 = vpack.c.bf16 %v402, %v402
  %v411 = vpack.c.bf16 %v403, %v403
  %v412 = vpack.c.bf16 %v404, %v404
  %v413 = vld [vmem:[%s6] sm:$0xff]
  %v414 = vld [vmem:[%s6 + $0x8] sm:$0xff]
  %v415 = vld [vmem:[%s6 + $0x10] sm:$0xff]
  %v416 = vld [vmem:[%s6 + $0x18] sm:$0xff]
  %v417 = vld [vmem:[%s6 + $0x20] sm:$0xff]
  %v418 = vld [vmem:[%s6 + $0x28] sm:$0xff]
  %v419 = vld [vmem:[%s6 + $0x30] sm:$0xff]
  %v420 = vld [vmem:[%s6 + $0x38] sm:$0xff]
  %v421 = vld [vmem:[%s6 + $0x40] sm:$0xff]
  %v422 = vld [vmem:[%s6 + $0x48] sm:$0xff]
  %v423 = vld [vmem:[%s6 + $0x50] sm:$0xff]
  %v424 = vld [vmem:[%s6 + $0x58] sm:$0xff]
  %v425 = vld [vmem:[%s6 + $0x60] sm:$0xff]
  %v426 = vld [vmem:[%s6 + $0x68] sm:$0xff]
  %v427 = vld [vmem:[%s6 + $0x70] sm:$0xff]
  %v428 = vld [vmem:[%s6 + $0x78] sm:$0xff]
  %v429 = vld [vmem:[%s6 + $0x80] sm:$0xff]
  %v430 = vld [vmem:[%s6 + $0x88] sm:$0xff]
  %v431 = vld [vmem:[%s6 + $0x90] sm:$0xff]
  %v432 = vld [vmem:[%s6 + $0x98] sm:$0xff]
  %v433 = vld [vmem:[%s6 + $0xa0] sm:$0xff]
  %v434 = vld [vmem:[%s6 + $0xa8] sm:$0xff]
  %v435 = vld [vmem:[%s6 + $0xb0] sm:$0xff]
  %v436 = vld [vmem:[%s6 + $0xb8] sm:$0xff]
  %v437 = vld [vmem:[%s6 + $0xc0] sm:$0xff]
  %v438 = vld [vmem:[%s6 + $0xc8] sm:$0xff]
  %v439 = vld [vmem:[%s6 + $0xd0] sm:$0xff]
  %v440 = vld [vmem:[%s6 + $0xd8] sm:$0xff]
  %v441 = vld [vmem:[%s6 + $0xe0] sm:$0xff]
  %v442 = vld [vmem:[%s6 + $0xe8] sm:$0xff]
  %v443 = vld [vmem:[%s6 + $0xf0] sm:$0xff]
  %v444 = vld [vmem:[%s6 + $0xf8] sm:$0xff]
  %v445 = vld [vmem:[%s6 + $0x100] sm:$0xff]
  %v446 = vld [vmem:[%s6 + $0x108] sm:$0xff]
  %v447 = vld [vmem:[%s6 + $0x110] sm:$0xff]
  %v448 = vld [vmem:[%s6 + $0x118] sm:$0xff]
  %v449 = vld [vmem:[%s6 + $0x120] sm:$0xff]
  %v450 = vld [vmem:[%s6 + $0x128] sm:$0xff]
  %v451 = vld [vmem:[%s6 + $0x130] sm:$0xff]
  %v452 = vld [vmem:[%s6 + $0x138] sm:$0xff]
  %v453 = vld [vmem:[%s6 + $0x140] sm:$0xff]
  %v454 = vld [vmem:[%s6 + $0x148] sm:$0xff]
  %v455 = vld [vmem:[%s6 + $0x150] sm:$0xff]
  %v456 = vld [vmem:[%s6 + $0x158] sm:$0xff]
  %v457 = vld [vmem:[%s6 + $0x160] sm:$0xff]
  %v458 = vld [vmem:[%s6 + $0x168] sm:$0xff]
  %v459 = vld [vmem:[%s6 + $0x170] sm:$0xff]
  %v460 = vld [vmem:[%s6 + $0x178] sm:$0xff]
  %v461 = vld [vmem:[%s6 + $0x180] sm:$0xff]
  %v462 = vld [vmem:[%s6 + $0x188] sm:$0xff]
  %v463 = vld [vmem:[%s6 + $0x190] sm:$0xff]
  %v464 = vld [vmem:[%s6 + $0x198] sm:$0xff]
  %v465 = vld [vmem:[%s6 + $0x1a0] sm:$0xff]
  %v466 = vld [vmem:[%s6 + $0x1a8] sm:$0xff]
  %v467 = vld [vmem:[%s6 + $0x1b0] sm:$0xff]
  %v468 = vld [vmem:[%s6 + $0x1b8] sm:$0xff]
  %v469 = vld [vmem:[%s6 + $0x1c0] sm:$0xff]
  %v470 = vld [vmem:[%s6 + $0x1c8] sm:$0xff]
  %v471 = vld [vmem:[%s6 + $0x1d0] sm:$0xff]
  %v472 = vld [vmem:[%s6 + $0x1d8] sm:$0xff]
  %v473 = vld [vmem:[%s6 + $0x1e0] sm:$0xff]
  %v474 = vld [vmem:[%s6 + $0x1e8] sm:$0xff]
  %v475 = vld [vmem:[%s6 + $0x1f0] sm:$0xff]
  %v476 = vld [vmem:[%s6 + $0x1f8] sm:$0xff]
  %v477 = vld [vmem:[%s6 + $0x200] sm:$0xff]
  %v478 = vld [vmem:[%s6 + $0x208] sm:$0xff]
  %v479 = vld [vmem:[%s6 + $0x210] sm:$0xff]
  %v480 = vld [vmem:[%s6 + $0x218] sm:$0xff]
  %v481 = vld [vmem:[%s6 + $0x220] sm:$0xff]
  %v482 = vld [vmem:[%s6 + $0x228] sm:$0xff]
  %v483 = vld [vmem:[%s6 + $0x230] sm:$0xff]
  %v484 = vld [vmem:[%s6 + $0x238] sm:$0xff]
  %v485 = vld [vmem:[%s6 + $0x240] sm:$0xff]
  %v486 = vld [vmem:[%s6 + $0x248] sm:$0xff]
  %v487 = vld [vmem:[%s6 + $0x250] sm:$0xff]
  %v488 = vld [vmem:[%s6 + $0x258] sm:$0xff]
  %v489 = vld [vmem:[%s6 + $0x260] sm:$0xff]
  %v490 = vld [vmem:[%s6 + $0x268] sm:$0xff]
  %v491 = vld [vmem:[%s6 + $0x270] sm:$0xff]
  %v492 = vld [vmem:[%s6 + $0x278] sm:$0xff]
  %v493 = vld [vmem:[%s6 + $0x280] sm:$0xff]
  %v494 = vld [vmem:[%s6 + $0x288] sm:$0xff]
  %v495 = vld [vmem:[%s6 + $0x290] sm:$0xff]
  %v496 = vld [vmem:[%s6 + $0x298] sm:$0xff]
  %v497 = vld [vmem:[%s6 + $0x2a0] sm:$0xff]
  %v498 = vld [vmem:[%s6 + $0x2a8] sm:$0xff]
  %v499 = vld [vmem:[%s6 + $0x2b0] sm:$0xff]
  %v500 = vld [vmem:[%s6 + $0x2b8] sm:$0xff]
  %v501 = vld [vmem:[%s6 + $0x2c0] sm:$0xff]
  %v502 = vld [vmem:[%s6 + $0x2c8] sm:$0xff]
  %v503 = vld [vmem:[%s6 + $0x2d0] sm:$0xff]
  %v504 = vld [vmem:[%s6 + $0x2d8] sm:$0xff]
  %v505 = vld [vmem:[%s6 + $0x2e0] sm:$0xff]
  %v506 = vld [vmem:[%s6 + $0x2e8] sm:$0xff]
  %v507 = vld [vmem:[%s6 + $0x2f0] sm:$0xff]
  %v508 = vld [vmem:[%s6 + $0x2f8] sm:$0xff]
  %v509 = vld [vmem:[%s6 + $0x300] sm:$0xff]
  %v510 = vld [vmem:[%s6 + $0x308] sm:$0xff]
  %v511 = vld [vmem:[%s6 + $0x310] sm:$0xff]
  %v512 = vld [vmem:[%s6 + $0x318] sm:$0xff]
  %v513 = vld [vmem:[%s6 + $0x320] sm:$0xff]
  %v514 = vld [vmem:[%s6 + $0x328] sm:$0xff]
  %v515 = vld [vmem:[%s6 + $0x330] sm:$0xff]
  %v516 = vld [vmem:[%s6 + $0x338] sm:$0xff]
  %v517 = vld [vmem:[%s6 + $0x340] sm:$0xff]
  %v518 = vld [vmem:[%s6 + $0x348] sm:$0xff]
  %v519 = vld [vmem:[%s6 + $0x350] sm:$0xff]
  %v520 = vld [vmem:[%s6 + $0x358] sm:$0xff]
  %v521 = vld [vmem:[%s6 + $0x360] sm:$0xff]
  %v522 = vld [vmem:[%s6 + $0x368] sm:$0xff]
  %v523 = vld [vmem:[%s6 + $0x370] sm:$0xff]
  %v524 = vld [vmem:[%s6 + $0x378] sm:$0xff]
  %v525 = vld [vmem:[%s6 + $0x380] sm:$0xff]
  %v526 = vld [vmem:[%s6 + $0x388] sm:$0xff]
  %v527 = vld [vmem:[%s6 + $0x390] sm:$0xff]
  %v528 = vld [vmem:[%s6 + $0x398] sm:$0xff]
  %v529 = vld [vmem:[%s6 + $0x3a0] sm:$0xff]
  %v530 = vld [vmem:[%s6 + $0x3a8] sm:$0xff]
  %v531 = vld [vmem:[%s6 + $0x3b0] sm:$0xff]
  %v532 = vld [vmem:[%s6 + $0x3b8] sm:$0xff]
  %v533 = vld [vmem:[%s6 + $0x3c0] sm:$0xff]
  %v534 = vld [vmem:[%s6 + $0x3c8] sm:$0xff]
  %v535 = vld [vmem:[%s6 + $0x3d0] sm:$0xff]
  %v536 = vld [vmem:[%s6 + $0x3d8] sm:$0xff]
  %v537 = vld [vmem:[%s6 + $0x3e0] sm:$0xff]
  %v538 = vld [vmem:[%s6 + $0x3e8] sm:$0xff]
  %v539 = vld [vmem:[%s6 + $0x3f0] sm:$0xff]
  %v540 = vld [vmem:[%s6 + $0x3f8] sm:$0xff]
  %v541 = vld [vmem:[%s6 + $0x400] sm:$0xff]
  %v542 = vld [vmem:[%s6 + $0x408] sm:$0xff]
  %v543 = vld [vmem:[%s6 + $0x410] sm:$0xff]
  %v544 = vld [vmem:[%s6 + $0x418] sm:$0xff]
  %v545 = vld [vmem:[%s6 + $0x420] sm:$0xff]
  %v546 = vld [vmem:[%s6 + $0x428] sm:$0xff]
  %v547 = vld [vmem:[%s6 + $0x430] sm:$0xff]
  %v548 = vld [vmem:[%s6 + $0x438] sm:$0xff]
  %v549 = vld [vmem:[%s6 + $0x440] sm:$0xff]
  %v550 = vld [vmem:[%s6 + $0x448] sm:$0xff]
  %v551 = vld [vmem:[%s6 + $0x450] sm:$0xff]
  %v552 = vld [vmem:[%s6 + $0x458] sm:$0xff]
  %v553 = vld [vmem:[%s6 + $0x460] sm:$0xff]
  %v554 = vld [vmem:[%s6 + $0x468] sm:$0xff]
  %v555 = vld [vmem:[%s6 + $0x470] sm:$0xff]
  %v556 = vld [vmem:[%s6 + $0x478] sm:$0xff]
  %v557 = vld [vmem:[%s6 + $0x480] sm:$0xff]
  %v558 = vld [vmem:[%s6 + $0x488] sm:$0xff]
  %v559 = vld [vmem:[%s6 + $0x490] sm:$0xff]
  %v560 = vld [vmem:[%s6 + $0x498] sm:$0xff]
  %v561 = vld [vmem:[%s6 + $0x4a0] sm:$0xff]
  %v562 = vld [vmem:[%s6 + $0x4a8] sm:$0xff]
  %v563 = vld [vmem:[%s6 + $0x4b0] sm:$0xff]
  %v564 = vld [vmem:[%s6 + $0x4b8] sm:$0xff]
  %v565 = vld [vmem:[%s6 + $0x4c0] sm:$0xff]
  %v566 = vld [vmem:[%s6 + $0x4c8] sm:$0xff]
  %v567 = vld [vmem:[%s6 + $0x4d0] sm:$0xff]
  %v568 = vld [vmem:[%s6 + $0x4d8] sm:$0xff]
  %v569 = vld [vmem:[%s6 + $0x4e0] sm:$0xff]
  %v570 = vld [vmem:[%s6 + $0x4e8] sm:$0xff]
  %v571 = vld [vmem:[%s6 + $0x4f0] sm:$0xff]
  %v572 = vld [vmem:[%s6 + $0x4f8] sm:$0xff]
  %v573 = vld [vmem:[%s6 + $0x500] sm:$0xff]
  %v574 = vld [vmem:[%s6 + $0x508] sm:$0xff]
  %v575 = vld [vmem:[%s6 + $0x510] sm:$0xff]
  %v576 = vld [vmem:[%s6 + $0x518] sm:$0xff]
  %v577 = vld [vmem:[%s6 + $0x520] sm:$0xff]
  %v578 = vld [vmem:[%s6 + $0x528] sm:$0xff]
  %v579 = vld [vmem:[%s6 + $0x530] sm:$0xff]
  %v580 = vld [vmem:[%s6 + $0x538] sm:$0xff]
  %v581 = vld [vmem:[%s6 + $0x540] sm:$0xff]
  %v582 = vld [vmem:[%s6 + $0x548] sm:$0xff]
  %v583 = vld [vmem:[%s6 + $0x550] sm:$0xff]
  %v584 = vld [vmem:[%s6 + $0x558] sm:$0xff]
  %v585 = vld [vmem:[%s6 + $0x560] sm:$0xff]
  %v586 = vld [vmem:[%s6 + $0x568] sm:$0xff]
  %v587 = vld [vmem:[%s6 + $0x570] sm:$0xff]
  %v588 = vld [vmem:[%s6 + $0x578] sm:$0xff]
  %v589 = vld [vmem:[%s6 + $0x580] sm:$0xff]
  %v590 = vld [vmem:[%s6 + $0x588] sm:$0xff]
  %v591 = vld [vmem:[%s6 + $0x590] sm:$0xff]
  %v592 = vld [vmem:[%s6 + $0x598] sm:$0xff]
  %v593 = vld [vmem:[%s6 + $0x5a0] sm:$0xff]
  %v594 = vld [vmem:[%s6 + $0x5a8] sm:$0xff]
  %v595 = vld [vmem:[%s6 + $0x5b0] sm:$0xff]
  %v596 = vld [vmem:[%s6 + $0x5b8] sm:$0xff]
  %v597 = vld [vmem:[%s6 + $0x5c0] sm:$0xff]
  %v598 = vld [vmem:[%s6 + $0x5c8] sm:$0xff]
  %v599 = vld [vmem:[%s6 + $0x5d0] sm:$0xff]
  %v600 = vld [vmem:[%s6 + $0x5d8] sm:$0xff]
  %v601 = vld [vmem:[%s6 + $0x5e0] sm:$0xff]
  %v602 = vld [vmem:[%s6 + $0x5e8] sm:$0xff]
  %v603 = vld [vmem:[%s6 + $0x5f0] sm:$0xff]
  %v604 = vld [vmem:[%s6 + $0x5f8] sm:$0xff]
  %v605 = vld [vmem:[%s6 + $0x600] sm:$0xff]
  %v606 = vld [vmem:[%s6 + $0x608] sm:$0xff]
  %v607 = vld [vmem:[%s6 + $0x610] sm:$0xff]
  %v608 = vld [vmem:[%s6 + $0x618] sm:$0xff]
  %v609 = vld [vmem:[%s6 + $0x620] sm:$0xff]
  %v610 = vld [vmem:[%s6 + $0x628] sm:$0xff]
  %v611 = vld [vmem:[%s6 + $0x630] sm:$0xff]
  %v612 = vld [vmem:[%s6 + $0x638] sm:$0xff]
  %v613 = vld [vmem:[%s6 + $0x640] sm:$0xff]
  %v614 = vld [vmem:[%s6 + $0x648] sm:$0xff]
  %v615 = vld [vmem:[%s6 + $0x650] sm:$0xff]
  %v616 = vld [vmem:[%s6 + $0x658] sm:$0xff]
  %v617 = vld [vmem:[%s6 + $0x660] sm:$0xff]
  %v618 = vld [vmem:[%s6 + $0x668] sm:$0xff]
  %v619 = vld [vmem:[%s6 + $0x670] sm:$0xff]
  %v620 = vld [vmem:[%s6 + $0x678] sm:$0xff]
  %v621 = vld [vmem:[%s6 + $0x680] sm:$0xff]
  %v622 = vld [vmem:[%s6 + $0x688] sm:$0xff]
  %v623 = vld [vmem:[%s6 + $0x690] sm:$0xff]
  %v624 = vld [vmem:[%s6 + $0x698] sm:$0xff]
  %v625 = vld [vmem:[%s6 + $0x6a0] sm:$0xff]
  %v626 = vld [vmem:[%s6 + $0x6a8] sm:$0xff]
  %v627 = vld [vmem:[%s6 + $0x6b0] sm:$0xff]
  %v628 = vld [vmem:[%s6 + $0x6b8] sm:$0xff]
  %v629 = vld [vmem:[%s6 + $0x6c0] sm:$0xff]
  %v630 = vld [vmem:[%s6 + $0x6c8] sm:$0xff]
  %v631 = vld [vmem:[%s6 + $0x6d0] sm:$0xff]
  %v632 = vld [vmem:[%s6 + $0x6d8] sm:$0xff]
  %v633 = vld [vmem:[%s6 + $0x6e0] sm:$0xff]
  %v634 = vld [vmem:[%s6 + $0x6e8] sm:$0xff]
  %v635 = vld [vmem:[%s6 + $0x6f0] sm:$0xff]
  %v636 = vld [vmem:[%s6 + $0x6f8] sm:$0xff]
  %v637 = vld [vmem:[%s6 + $0x700] sm:$0xff]
  %v638 = vld [vmem:[%s6 + $0x708] sm:$0xff]
  %v639 = vld [vmem:[%s6 + $0x710] sm:$0xff]
  %v640 = vld [vmem:[%s6 + $0x718] sm:$0xff]
  %v641 = vld [vmem:[%s6 + $0x720] sm:$0xff]
  %v642 = vld [vmem:[%s6 + $0x728] sm:$0xff]
  %v643 = vld [vmem:[%s6 + $0x730] sm:$0xff]
  %v644 = vld [vmem:[%s6 + $0x738] sm:$0xff]
  %v645 = vld [vmem:[%s6 + $0x740] sm:$0xff]
  %v646 = vld [vmem:[%s6 + $0x748] sm:$0xff]
  %v647 = vld [vmem:[%s6 + $0x750] sm:$0xff]
  %v648 = vld [vmem:[%s6 + $0x758] sm:$0xff]
  %v649 = vld [vmem:[%s6 + $0x760] sm:$0xff]
  %v650 = vld [vmem:[%s6 + $0x768] sm:$0xff]
  %v651 = vld [vmem:[%s6 + $0x770] sm:$0xff]
  %v652 = vld [vmem:[%s6 + $0x778] sm:$0xff]
  %v653 = vld [vmem:[%s6 + $0x780] sm:$0xff]
  %v654 = vld [vmem:[%s6 + $0x788] sm:$0xff]
  %v655 = vld [vmem:[%s6 + $0x790] sm:$0xff]
  %v656 = vld [vmem:[%s6 + $0x798] sm:$0xff]
  %v657 = vld [vmem:[%s6 + $0x7a0] sm:$0xff]
  %v658 = vld [vmem:[%s6 + $0x7a8] sm:$0xff]
  %v659 = vld [vmem:[%s6 + $0x7b0] sm:$0xff]
  %v660 = vld [vmem:[%s6 + $0x7b8] sm:$0xff]
  %v661 = vld [vmem:[%s6 + $0x7c0] sm:$0xff]
  %v662 = vld [vmem:[%s6 + $0x7c8] sm:$0xff]
  %v663 = vld [vmem:[%s6 + $0x7d0] sm:$0xff]
  %v664 = vld [vmem:[%s6 + $0x7d8] sm:$0xff]
  %v665 = vld [vmem:[%s6 + $0x7e0] sm:$0xff]
  %v666 = vld [vmem:[%s6 + $0x7e8] sm:$0xff]
  %v667 = vld [vmem:[%s6 + $0x7f0] sm:$0xff]
  %v668 = vld [vmem:[%s6 + $0x7f8] sm:$0xff]
  %v669 = vld [vmem:[%s7] sm:$0xf]
  %v671 = vlaneseq
  %v672 = vshrl.u32 %v671, 7
  %v673 = vsub.s32 0, %v672
  %v674 = vrot.slane %v669, %v673
  %v675 = vlaneseq
  %v676 = vshrl.u32 %v675, 7
  %v677 = vsub.s32 1, %v676
  %v678 = vrot.slane %v669, %v677
  %v679 = vlaneseq
  %v680 = vshrl.u32 %v679, 7
  %v681 = vsub.s32 2, %v680
  %v682 = vrot.slane %v669, %v681
  %v683 = vlaneseq
  %v684 = vshrl.u32 %v683, 7
  %v685 = vsub.s32 3, %v684
  %v686 = vrot.slane %v669, %v685
  %v947 = vunpack.c.l.b16 %v413
  %v948 = vunpack.c.h.b16 %v413
  %v949 = vunpack.c.l.b16 %v414
  %v950 = vunpack.c.h.b16 %v414
  %v951 = vunpack.c.l.b16 %v415
  %v952 = vunpack.c.h.b16 %v415
  %v953 = vunpack.c.l.b16 %v416
  %v954 = vunpack.c.h.b16 %v416
  %v955 = vunpack.c.l.b16 %v417
  %v956 = vunpack.c.h.b16 %v417
  %v957 = vunpack.c.l.b16 %v418
  %v958 = vunpack.c.h.b16 %v418
  %v959 = vunpack.c.l.b16 %v419
  %v960 = vunpack.c.h.b16 %v419
  %v961 = vunpack.c.l.b16 %v420
  %v962 = vunpack.c.h.b16 %v420
  %v963 = vunpack.c.l.b16 %v421
  %v964 = vunpack.c.h.b16 %v421
  %v965 = vunpack.c.l.b16 %v422
  %v966 = vunpack.c.h.b16 %v422
  %v967 = vunpack.c.l.b16 %v423
  %v968 = vunpack.c.h.b16 %v423
  %v969 = vunpack.c.l.b16 %v424
  %v970 = vunpack.c.h.b16 %v424
  %v971 = vunpack.c.l.b16 %v425
  %v972 = vunpack.c.h.b16 %v425
  %v973 = vunpack.c.l.b16 %v426
  %v974 = vunpack.c.h.b16 %v426
  %v975 = vunpack.c.l.b16 %v427
  %v976 = vunpack.c.h.b16 %v427
  %v977 = vunpack.c.l.b16 %v428
  %v978 = vunpack.c.h.b16 %v428
  %v979 = vunpack.c.l.b16 %v429
  %v980 = vunpack.c.h.b16 %v429
  %v981 = vunpack.c.l.b16 %v430
  %v982 = vunpack.c.h.b16 %v430
  %v983 = vunpack.c.l.b16 %v431
  %v984 = vunpack.c.h.b16 %v431
  %v985 = vunpack.c.l.b16 %v432
  %v986 = vunpack.c.h.b16 %v432
  %v987 = vunpack.c.l.b16 %v433
  %v988 = vunpack.c.h.b16 %v433
  %v989 = vunpack.c.l.b16 %v434
  %v990 = vunpack.c.h.b16 %v434
  %v991 = vunpack.c.l.b16 %v435
  %v992 = vunpack.c.h.b16 %v435
  %v993 = vunpack.c.l.b16 %v436
  %v994 = vunpack.c.h.b16 %v436
  %v995 = vunpack.c.l.b16 %v437
  %v996 = vunpack.c.h.b16 %v437
  %v997 = vunpack.c.l.b16 %v438
  %v998 = vunpack.c.h.b16 %v438
  %v999 = vunpack.c.l.b16 %v439
  %v1000 = vunpack.c.h.b16 %v439
  %v1001 = vunpack.c.l.b16 %v440
  %v1002 = vunpack.c.h.b16 %v440
  %v1003 = vunpack.c.l.b16 %v441
  %v1004 = vunpack.c.h.b16 %v441
  %v1005 = vunpack.c.l.b16 %v442
  %v1006 = vunpack.c.h.b16 %v442
  %v1007 = vunpack.c.l.b16 %v443
  %v1008 = vunpack.c.h.b16 %v443
  %v1009 = vunpack.c.l.b16 %v444
  %v1010 = vunpack.c.h.b16 %v444
  %v1011 = vunpack.c.l.b16 %v445
  %v1012 = vunpack.c.h.b16 %v445
  %v1013 = vunpack.c.l.b16 %v446
  %v1014 = vunpack.c.h.b16 %v446
  %v1015 = vunpack.c.l.b16 %v447
  %v1016 = vunpack.c.h.b16 %v447
  %v1017 = vunpack.c.l.b16 %v448
  %v1018 = vunpack.c.h.b16 %v448
  %v1019 = vunpack.c.l.b16 %v449
  %v1020 = vunpack.c.h.b16 %v449
  %v1021 = vunpack.c.l.b16 %v450
  %v1022 = vunpack.c.h.b16 %v450
  %v1023 = vunpack.c.l.b16 %v451
  %v1024 = vunpack.c.h.b16 %v451
  %v1025 = vunpack.c.l.b16 %v452
  %v1026 = vunpack.c.h.b16 %v452
  %v1027 = vunpack.c.l.b16 %v453
  %v1028 = vunpack.c.h.b16 %v453
  %v1029 = vunpack.c.l.b16 %v454
  %v1030 = vunpack.c.h.b16 %v454
  %v1031 = vunpack.c.l.b16 %v455
  %v1032 = vunpack.c.h.b16 %v455
  %v1033 = vunpack.c.l.b16 %v456
  %v1034 = vunpack.c.h.b16 %v456
  %v1035 = vunpack.c.l.b16 %v457
  %v1036 = vunpack.c.h.b16 %v457
  %v1037 = vunpack.c.l.b16 %v458
  %v1038 = vunpack.c.h.b16 %v458
  %v1039 = vunpack.c.l.b16 %v459
  %v1040 = vunpack.c.h.b16 %v459
  %v1041 = vunpack.c.l.b16 %v460
  %v1042 = vunpack.c.h.b16 %v460
  %v1043 = vunpack.c.l.b16 %v461
  %v1044 = vunpack.c.h.b16 %v461
  %v1045 = vunpack.c.l.b16 %v462
  %v1046 = vunpack.c.h.b16 %v462
  %v1047 = vunpack.c.l.b16 %v463
  %v1048 = vunpack.c.h.b16 %v463
  %v1049 = vunpack.c.l.b16 %v464
  %v1050 = vunpack.c.h.b16 %v464
  %v1051 = vunpack.c.l.b16 %v465
  %v1052 = vunpack.c.h.b16 %v465
  %v1053 = vunpack.c.l.b16 %v466
  %v1054 = vunpack.c.h.b16 %v466
  %v1055 = vunpack.c.l.b16 %v467
  %v1056 = vunpack.c.h.b16 %v467
  %v1057 = vunpack.c.l.b16 %v468
  %v1058 = vunpack.c.h.b16 %v468
  %v1059 = vunpack.c.l.b16 %v469
  %v1060 = vunpack.c.h.b16 %v469
  %v1061 = vunpack.c.l.b16 %v470
  %v1062 = vunpack.c.h.b16 %v470
  %v1063 = vunpack.c.l.b16 %v471
  %v1064 = vunpack.c.h.b16 %v471
  %v1065 = vunpack.c.l.b16 %v472
  %v1066 = vunpack.c.h.b16 %v472
  %v1067 = vunpack.c.l.b16 %v473
  %v1068 = vunpack.c.h.b16 %v473
  %v1069 = vunpack.c.l.b16 %v474
  %v1070 = vunpack.c.h.b16 %v474
  %v1071 = vunpack.c.l.b16 %v475
  %v1072 = vunpack.c.h.b16 %v475
  %v1073 = vunpack.c.l.b16 %v476
  %v1074 = vunpack.c.h.b16 %v476
  %v1075 = vunpack.c.l.b16 %v477
  %v1076 = vunpack.c.h.b16 %v477
  %v1077 = vunpack.c.l.b16 %v478
  %v1078 = vunpack.c.h.b16 %v478
  %v1079 = vunpack.c.l.b16 %v479
  %v1080 = vunpack.c.h.b16 %v479
  %v1081 = vunpack.c.l.b16 %v480
  %v1082 = vunpack.c.h.b16 %v480
  %v1083 = vunpack.c.l.b16 %v481
  %v1084 = vunpack.c.h.b16 %v481
  %v1085 = vunpack.c.l.b16 %v482
  %v1086 = vunpack.c.h.b16 %v482
  %v1087 = vunpack.c.l.b16 %v483
  %v1088 = vunpack.c.h.b16 %v483
  %v1089 = vunpack.c.l.b16 %v484
  %v1090 = vunpack.c.h.b16 %v484
  %v1091 = vunpack.c.l.b16 %v485
  %v1092 = vunpack.c.h.b16 %v485
  %v1093 = vunpack.c.l.b16 %v486
  %v1094 = vunpack.c.h.b16 %v486
  %v1095 = vunpack.c.l.b16 %v487
  %v1096 = vunpack.c.h.b16 %v487
  %v1097 = vunpack.c.l.b16 %v488
  %v1098 = vunpack.c.h.b16 %v488
  %v1099 = vunpack.c.l.b16 %v489
  %v1100 = vunpack.c.h.b16 %v489
  %v1101 = vunpack.c.l.b16 %v490
  %v1102 = vunpack.c.h.b16 %v490
  %v1103 = vunpack.c.l.b16 %v491
  %v1104 = vunpack.c.h.b16 %v491
  %v1105 = vunpack.c.l.b16 %v492
  %v1106 = vunpack.c.h.b16 %v492
  %v1107 = vunpack.c.l.b16 %v493
  %v1108 = vunpack.c.h.b16 %v493
  %v1109 = vunpack.c.l.b16 %v494
  %v1110 = vunpack.c.h.b16 %v494
  %v1111 = vunpack.c.l.b16 %v495
  %v1112 = vunpack.c.h.b16 %v495
  %v1113 = vunpack.c.l.b16 %v496
  %v1114 = vunpack.c.h.b16 %v496
  %v1115 = vunpack.c.l.b16 %v497
  %v1116 = vunpack.c.h.b16 %v497
  %v1117 = vunpack.c.l.b16 %v498
  %v1118 = vunpack.c.h.b16 %v498
  %v1119 = vunpack.c.l.b16 %v499
  %v1120 = vunpack.c.h.b16 %v499
  %v1121 = vunpack.c.l.b16 %v500
  %v1122 = vunpack.c.h.b16 %v500
  %v1123 = vunpack.c.l.b16 %v501
  %v1124 = vunpack.c.h.b16 %v501
  %v1125 = vunpack.c.l.b16 %v502
  %v1126 = vunpack.c.h.b16 %v502
  %v1127 = vunpack.c.l.b16 %v503
  %v1128 = vunpack.c.h.b16 %v503
  %v1129 = vunpack.c.l.b16 %v504
  %v1130 = vunpack.c.h.b16 %v504
  %v1131 = vunpack.c.l.b16 %v505
  %v1132 = vunpack.c.h.b16 %v505
  %v1133 = vunpack.c.l.b16 %v506
  %v1134 = vunpack.c.h.b16 %v506
  %v1135 = vunpack.c.l.b16 %v507
  %v1136 = vunpack.c.h.b16 %v507
  %v1137 = vunpack.c.l.b16 %v508
  %v1138 = vunpack.c.h.b16 %v508
  %v1139 = vunpack.c.l.b16 %v509
  %v1140 = vunpack.c.h.b16 %v509
  %v1141 = vunpack.c.l.b16 %v510
  %v1142 = vunpack.c.h.b16 %v510
  %v1143 = vunpack.c.l.b16 %v511
  %v1144 = vunpack.c.h.b16 %v511
  %v1145 = vunpack.c.l.b16 %v512
  %v1146 = vunpack.c.h.b16 %v512
  %v1147 = vunpack.c.l.b16 %v513
  %v1148 = vunpack.c.h.b16 %v513
  %v1149 = vunpack.c.l.b16 %v514
  %v1150 = vunpack.c.h.b16 %v514
  %v1151 = vunpack.c.l.b16 %v515
  %v1152 = vunpack.c.h.b16 %v515
  %v1153 = vunpack.c.l.b16 %v516
  %v1154 = vunpack.c.h.b16 %v516
  %v1155 = vunpack.c.l.b16 %v517
  %v1156 = vunpack.c.h.b16 %v517
  %v1157 = vunpack.c.l.b16 %v518
  %v1158 = vunpack.c.h.b16 %v518
  %v1159 = vunpack.c.l.b16 %v519
  %v1160 = vunpack.c.h.b16 %v519
  %v1161 = vunpack.c.l.b16 %v520
  %v1162 = vunpack.c.h.b16 %v520
  %v1163 = vunpack.c.l.b16 %v521
  %v1164 = vunpack.c.h.b16 %v521
  %v1165 = vunpack.c.l.b16 %v522
  %v1166 = vunpack.c.h.b16 %v522
  %v1167 = vunpack.c.l.b16 %v523
  %v1168 = vunpack.c.h.b16 %v523
  %v1169 = vunpack.c.l.b16 %v524
  %v1170 = vunpack.c.h.b16 %v524
  %v1171 = vunpack.c.l.b16 %v525
  %v1172 = vunpack.c.h.b16 %v525
  %v1173 = vunpack.c.l.b16 %v526
  %v1174 = vunpack.c.h.b16 %v526
  %v1175 = vunpack.c.l.b16 %v527
  %v1176 = vunpack.c.h.b16 %v527
  %v1177 = vunpack.c.l.b16 %v528
  %v1178 = vunpack.c.h.b16 %v528
  %v1179 = vunpack.c.l.b16 %v529
  %v1180 = vunpack.c.h.b16 %v529
  %v1181 = vunpack.c.l.b16 %v530
  %v1182 = vunpack.c.h.b16 %v530
  %v1183 = vunpack.c.l.b16 %v531
  %v1184 = vunpack.c.h.b16 %v531
  %v1185 = vunpack.c.l.b16 %v532
  %v1186 = vunpack.c.h.b16 %v532
  %v1187 = vunpack.c.l.b16 %v533
  %v1188 = vunpack.c.h.b16 %v533
  %v1189 = vunpack.c.l.b16 %v534
  %v1190 = vunpack.c.h.b16 %v534
  %v1191 = vunpack.c.l.b16 %v535
  %v1192 = vunpack.c.h.b16 %v535
  %v1193 = vunpack.c.l.b16 %v536
  %v1194 = vunpack.c.h.b16 %v536
  %v1195 = vunpack.c.l.b16 %v537
  %v1196 = vunpack.c.h.b16 %v537
  %v1197 = vunpack.c.l.b16 %v538
  %v1198 = vunpack.c.h.b16 %v538
  %v1199 = vunpack.c.l.b16 %v539
  %v1200 = vunpack.c.h.b16 %v539
  %v1201 = vunpack.c.l.b16 %v540
  %v1202 = vunpack.c.h.b16 %v540
  %v1203 = vunpack.c.l.b16 %v541
  %v1204 = vunpack.c.h.b16 %v541
  %v1205 = vunpack.c.l.b16 %v542
  %v1206 = vunpack.c.h.b16 %v542
  %v1207 = vunpack.c.l.b16 %v543
  %v1208 = vunpack.c.h.b16 %v543
  %v1209 = vunpack.c.l.b16 %v544
  %v1210 = vunpack.c.h.b16 %v544
  %v1211 = vunpack.c.l.b16 %v545
  %v1212 = vunpack.c.h.b16 %v545
  %v1213 = vunpack.c.l.b16 %v546
  %v1214 = vunpack.c.h.b16 %v546
  %v1215 = vunpack.c.l.b16 %v547
  %v1216 = vunpack.c.h.b16 %v547
  %v1217 = vunpack.c.l.b16 %v548
  %v1218 = vunpack.c.h.b16 %v548
  %v1219 = vunpack.c.l.b16 %v549
  %v1220 = vunpack.c.h.b16 %v549
  %v1221 = vunpack.c.l.b16 %v550
  %v1222 = vunpack.c.h.b16 %v550
  %v1223 = vunpack.c.l.b16 %v551
  %v1224 = vunpack.c.h.b16 %v551
  %v1225 = vunpack.c.l.b16 %v552
  %v1226 = vunpack.c.h.b16 %v552
  %v1227 = vunpack.c.l.b16 %v553
  %v1228 = vunpack.c.h.b16 %v553
  %v1229 = vunpack.c.l.b16 %v554
  %v1230 = vunpack.c.h.b16 %v554
  %v1231 = vunpack.c.l.b16 %v555
  %v1232 = vunpack.c.h.b16 %v555
  %v1233 = vunpack.c.l.b16 %v556
  %v1234 = vunpack.c.h.b16 %v556
  %v1235 = vunpack.c.l.b16 %v557
  %v1236 = vunpack.c.h.b16 %v557
  %v1237 = vunpack.c.l.b16 %v558
  %v1238 = vunpack.c.h.b16 %v558
  %v1239 = vunpack.c.l.b16 %v559
  %v1240 = vunpack.c.h.b16 %v559
  %v1241 = vunpack.c.l.b16 %v560
  %v1242 = vunpack.c.h.b16 %v560
  %v1243 = vunpack.c.l.b16 %v561
  %v1244 = vunpack.c.h.b16 %v561
  %v1245 = vunpack.c.l.b16 %v562
  %v1246 = vunpack.c.h.b16 %v562
  %v1247 = vunpack.c.l.b16 %v563
  %v1248 = vunpack.c.h.b16 %v563
  %v1249 = vunpack.c.l.b16 %v564
  %v1250 = vunpack.c.h.b16 %v564
  %v1251 = vunpack.c.l.b16 %v565
  %v1252 = vunpack.c.h.b16 %v565
  %v1253 = vunpack.c.l.b16 %v566
  %v1254 = vunpack.c.h.b16 %v566
  %v1255 = vunpack.c.l.b16 %v567
  %v1256 = vunpack.c.h.b16 %v567
  %v1257 = vunpack.c.l.b16 %v568
  %v1258 = vunpack.c.h.b16 %v568
  %v1259 = vunpack.c.l.b16 %v569
  %v1260 = vunpack.c.h.b16 %v569
  %v1261 = vunpack.c.l.b16 %v570
  %v1262 = vunpack.c.h.b16 %v570
  %v1263 = vunpack.c.l.b16 %v571
  %v1264 = vunpack.c.h.b16 %v571
  %v1265 = vunpack.c.l.b16 %v572
  %v1266 = vunpack.c.h.b16 %v572
  %v1267 = vunpack.c.l.b16 %v573
  %v1268 = vunpack.c.h.b16 %v573
  %v1269 = vunpack.c.l.b16 %v574
  %v1270 = vunpack.c.h.b16 %v574
  %v1271 = vunpack.c.l.b16 %v575
  %v1272 = vunpack.c.h.b16 %v575
  %v1273 = vunpack.c.l.b16 %v576
  %v1274 = vunpack.c.h.b16 %v576
  %v1275 = vunpack.c.l.b16 %v577
  %v1276 = vunpack.c.h.b16 %v577
  %v1277 = vunpack.c.l.b16 %v578
  %v1278 = vunpack.c.h.b16 %v578
  %v1279 = vunpack.c.l.b16 %v579
  %v1280 = vunpack.c.h.b16 %v579
  %v1281 = vunpack.c.l.b16 %v580
  %v1282 = vunpack.c.h.b16 %v580
  %v1283 = vunpack.c.l.b16 %v581
  %v1284 = vunpack.c.h.b16 %v581
  %v1285 = vunpack.c.l.b16 %v582
  %v1286 = vunpack.c.h.b16 %v582
  %v1287 = vunpack.c.l.b16 %v583
  %v1288 = vunpack.c.h.b16 %v583
  %v1289 = vunpack.c.l.b16 %v584
  %v1290 = vunpack.c.h.b16 %v584
  %v1291 = vunpack.c.l.b16 %v585
  %v1292 = vunpack.c.h.b16 %v585
  %v1293 = vunpack.c.l.b16 %v586
  %v1294 = vunpack.c.h.b16 %v586
  %v1295 = vunpack.c.l.b16 %v587
  %v1296 = vunpack.c.h.b16 %v587
  %v1297 = vunpack.c.l.b16 %v588
  %v1298 = vunpack.c.h.b16 %v588
  %v1299 = vunpack.c.l.b16 %v589
  %v1300 = vunpack.c.h.b16 %v589
  %v1301 = vunpack.c.l.b16 %v590
  %v1302 = vunpack.c.h.b16 %v590
  %v1303 = vunpack.c.l.b16 %v591
  %v1304 = vunpack.c.h.b16 %v591
  %v1305 = vunpack.c.l.b16 %v592
  %v1306 = vunpack.c.h.b16 %v592
  %v1307 = vunpack.c.l.b16 %v593
  %v1308 = vunpack.c.h.b16 %v593
  %v1309 = vunpack.c.l.b16 %v594
  %v1310 = vunpack.c.h.b16 %v594
  %v1311 = vunpack.c.l.b16 %v595
  %v1312 = vunpack.c.h.b16 %v595
  %v1313 = vunpack.c.l.b16 %v596
  %v1314 = vunpack.c.h.b16 %v596
  %v1315 = vunpack.c.l.b16 %v597
  %v1316 = vunpack.c.h.b16 %v597
  %v1317 = vunpack.c.l.b16 %v598
  %v1318 = vunpack.c.h.b16 %v598
  %v1319 = vunpack.c.l.b16 %v599
  %v1320 = vunpack.c.h.b16 %v599
  %v1321 = vunpack.c.l.b16 %v600
  %v1322 = vunpack.c.h.b16 %v600
  %v1323 = vunpack.c.l.b16 %v601
  %v1324 = vunpack.c.h.b16 %v601
  %v1325 = vunpack.c.l.b16 %v602
  %v1326 = vunpack.c.h.b16 %v602
  %v1327 = vunpack.c.l.b16 %v603
  %v1328 = vunpack.c.h.b16 %v603
  %v1329 = vunpack.c.l.b16 %v604
  %v1330 = vunpack.c.h.b16 %v604
  %v1331 = vunpack.c.l.b16 %v605
  %v1332 = vunpack.c.h.b16 %v605
  %v1333 = vunpack.c.l.b16 %v606
  %v1334 = vunpack.c.h.b16 %v606
  %v1335 = vunpack.c.l.b16 %v607
  %v1336 = vunpack.c.h.b16 %v607
  %v1337 = vunpack.c.l.b16 %v608
  %v1338 = vunpack.c.h.b16 %v608
  %v1339 = vunpack.c.l.b16 %v609
  %v1340 = vunpack.c.h.b16 %v609
  %v1341 = vunpack.c.l.b16 %v610
  %v1342 = vunpack.c.h.b16 %v610
  %v1343 = vunpack.c.l.b16 %v611
  %v1344 = vunpack.c.h.b16 %v611
  %v1345 = vunpack.c.l.b16 %v612
  %v1346 = vunpack.c.h.b16 %v612
  %v1347 = vunpack.c.l.b16 %v613
  %v1348 = vunpack.c.h.b16 %v613
  %v1349 = vunpack.c.l.b16 %v614
  %v1350 = vunpack.c.h.b16 %v614
  %v1351 = vunpack.c.l.b16 %v615
  %v1352 = vunpack.c.h.b16 %v615
  %v1353 = vunpack.c.l.b16 %v616
  %v1354 = vunpack.c.h.b16 %v616
  %v1355 = vunpack.c.l.b16 %v617
  %v1356 = vunpack.c.h.b16 %v617
  %v1357 = vunpack.c.l.b16 %v618
  %v1358 = vunpack.c.h.b16 %v618
  %v1359 = vunpack.c.l.b16 %v619
  %v1360 = vunpack.c.h.b16 %v619
  %v1361 = vunpack.c.l.b16 %v620
  %v1362 = vunpack.c.h.b16 %v620
  %v1363 = vunpack.c.l.b16 %v621
  %v1364 = vunpack.c.h.b16 %v621
  %v1365 = vunpack.c.l.b16 %v622
  %v1366 = vunpack.c.h.b16 %v622
  %v1367 = vunpack.c.l.b16 %v623
  %v1368 = vunpack.c.h.b16 %v623
  %v1369 = vunpack.c.l.b16 %v624
  %v1370 = vunpack.c.h.b16 %v624
  %v1371 = vunpack.c.l.b16 %v625
  %v1372 = vunpack.c.h.b16 %v625
  %v1373 = vunpack.c.l.b16 %v626
  %v1374 = vunpack.c.h.b16 %v626
  %v1375 = vunpack.c.l.b16 %v627
  %v1376 = vunpack.c.h.b16 %v627
  %v1377 = vunpack.c.l.b16 %v628
  %v1378 = vunpack.c.h.b16 %v628
  %v1379 = vunpack.c.l.b16 %v629
  %v1380 = vunpack.c.h.b16 %v629
  %v1381 = vunpack.c.l.b16 %v630
  %v1382 = vunpack.c.h.b16 %v630
  %v1383 = vunpack.c.l.b16 %v631
  %v1384 = vunpack.c.h.b16 %v631
  %v1385 = vunpack.c.l.b16 %v632
  %v1386 = vunpack.c.h.b16 %v632
  %v1387 = vunpack.c.l.b16 %v633
  %v1388 = vunpack.c.h.b16 %v633
  %v1389 = vunpack.c.l.b16 %v634
  %v1390 = vunpack.c.h.b16 %v634
  %v1391 = vunpack.c.l.b16 %v635
  %v1392 = vunpack.c.h.b16 %v635
  %v1393 = vunpack.c.l.b16 %v636
  %v1394 = vunpack.c.h.b16 %v636
  %v1395 = vunpack.c.l.b16 %v637
  %v1396 = vunpack.c.h.b16 %v637
  %v1397 = vunpack.c.l.b16 %v638
  %v1398 = vunpack.c.h.b16 %v638
  %v1399 = vunpack.c.l.b16 %v639
  %v1400 = vunpack.c.h.b16 %v639
  %v1401 = vunpack.c.l.b16 %v640
  %v1402 = vunpack.c.h.b16 %v640
  %v1403 = vunpack.c.l.b16 %v641
  %v1404 = vunpack.c.h.b16 %v641
  %v1405 = vunpack.c.l.b16 %v642
  %v1406 = vunpack.c.h.b16 %v642
  %v1407 = vunpack.c.l.b16 %v643
  %v1408 = vunpack.c.h.b16 %v643
  %v1409 = vunpack.c.l.b16 %v644
  %v1410 = vunpack.c.h.b16 %v644
  %v1411 = vunpack.c.l.b16 %v645
  %v1412 = vunpack.c.h.b16 %v645
  %v1413 = vunpack.c.l.b16 %v646
  %v1414 = vunpack.c.h.b16 %v646
  %v1415 = vunpack.c.l.b16 %v647
  %v1416 = vunpack.c.h.b16 %v647
  %v1417 = vunpack.c.l.b16 %v648
  %v1418 = vunpack.c.h.b16 %v648
  %v1419 = vunpack.c.l.b16 %v649
  %v1420 = vunpack.c.h.b16 %v649
  %v1421 = vunpack.c.l.b16 %v650
  %v1422 = vunpack.c.h.b16 %v650
  %v1423 = vunpack.c.l.b16 %v651
  %v1424 = vunpack.c.h.b16 %v651
  %v1425 = vunpack.c.l.b16 %v652
  %v1426 = vunpack.c.h.b16 %v652
  %v1427 = vunpack.c.l.b16 %v653
  %v1428 = vunpack.c.h.b16 %v653
  %v1429 = vunpack.c.l.b16 %v654
  %v1430 = vunpack.c.h.b16 %v654
  %v1431 = vunpack.c.l.b16 %v655
  %v1432 = vunpack.c.h.b16 %v655
  %v1433 = vunpack.c.l.b16 %v656
  %v1434 = vunpack.c.h.b16 %v656
  %v1435 = vunpack.c.l.b16 %v657
  %v1436 = vunpack.c.h.b16 %v657
  %v1437 = vunpack.c.l.b16 %v658
  %v1438 = vunpack.c.h.b16 %v658
  %v1439 = vunpack.c.l.b16 %v659
  %v1440 = vunpack.c.h.b16 %v659
  %v1441 = vunpack.c.l.b16 %v660
  %v1442 = vunpack.c.h.b16 %v660
  %v1443 = vunpack.c.l.b16 %v661
  %v1444 = vunpack.c.h.b16 %v661
  %v1445 = vunpack.c.l.b16 %v662
  %v1446 = vunpack.c.h.b16 %v662
  %v1447 = vunpack.c.l.b16 %v663
  %v1448 = vunpack.c.h.b16 %v663
  %v1449 = vunpack.c.l.b16 %v664
  %v1450 = vunpack.c.h.b16 %v664
  %v1451 = vunpack.c.l.b16 %v665
  %v1452 = vunpack.c.h.b16 %v665
  %v1453 = vunpack.c.l.b16 %v666
  %v1454 = vunpack.c.h.b16 %v666
  %v1455 = vunpack.c.l.b16 %v667
  %v1456 = vunpack.c.h.b16 %v667
  %v1457 = vunpack.c.l.b16 %v668
  %v1458 = vunpack.c.h.b16 %v668
  %v1459 = vpack.c.b16 %v951, %v947
  %v1460 = vpack.c.b16 %v952, %v948
  %v1461 = vpack.c.b16 %v953, %v949
  %v1462 = vpack.c.b16 %v954, %v950
  %v1463 = vpack.c.b16 %v959, %v955
  %v1464 = vpack.c.b16 %v960, %v956
  %v1465 = vpack.c.b16 %v961, %v957
  %v1466 = vpack.c.b16 %v962, %v958
  %v1467 = vpack.c.b16 %v967, %v963
  %v1468 = vpack.c.b16 %v968, %v964
  %v1469 = vpack.c.b16 %v969, %v965
  %v1470 = vpack.c.b16 %v970, %v966
  %v1471 = vpack.c.b16 %v975, %v971
  %v1472 = vpack.c.b16 %v976, %v972
  %v1473 = vpack.c.b16 %v977, %v973
  %v1474 = vpack.c.b16 %v978, %v974
  %v1475 = vpack.c.b16 %v983, %v979
  %v1476 = vpack.c.b16 %v984, %v980
  %v1477 = vpack.c.b16 %v985, %v981
  %v1478 = vpack.c.b16 %v986, %v982
  %v1479 = vpack.c.b16 %v991, %v987
  %v1480 = vpack.c.b16 %v992, %v988
  %v1481 = vpack.c.b16 %v993, %v989
  %v1482 = vpack.c.b16 %v994, %v990
  %v1483 = vpack.c.b16 %v999, %v995
  %v1484 = vpack.c.b16 %v1000, %v996
  %v1485 = vpack.c.b16 %v1001, %v997
  %v1486 = vpack.c.b16 %v1002, %v998
  %v1487 = vpack.c.b16 %v1007, %v1003
  %v1488 = vpack.c.b16 %v1008, %v1004
  %v1489 = vpack.c.b16 %v1009, %v1005
  %v1490 = vpack.c.b16 %v1010, %v1006
  %v1491 = vpack.c.b16 %v1015, %v1011
  %v1492 = vpack.c.b16 %v1016, %v1012
  %v1493 = vpack.c.b16 %v1017, %v1013
  %v1494 = vpack.c.b16 %v1018, %v1014
  %v1495 = vpack.c.b16 %v1023, %v1019
  %v1496 = vpack.c.b16 %v1024, %v1020
  %v1497 = vpack.c.b16 %v1025, %v1021
  %v1498 = vpack.c.b16 %v1026, %v1022
  %v1499 = vpack.c.b16 %v1031, %v1027
  %v1500 = vpack.c.b16 %v1032, %v1028
  %v1501 = vpack.c.b16 %v1033, %v1029
  %v1502 = vpack.c.b16 %v1034, %v1030
  %v1503 = vpack.c.b16 %v1039, %v1035
  %v1504 = vpack.c.b16 %v1040, %v1036
  %v1505 = vpack.c.b16 %v1041, %v1037
  %v1506 = vpack.c.b16 %v1042, %v1038
  %v1507 = vpack.c.b16 %v1047, %v1043
  %v1508 = vpack.c.b16 %v1048, %v1044
  %v1509 = vpack.c.b16 %v1049, %v1045
  %v1510 = vpack.c.b16 %v1050, %v1046
  %v1511 = vpack.c.b16 %v1055, %v1051
  %v1512 = vpack.c.b16 %v1056, %v1052
  %v1513 = vpack.c.b16 %v1057, %v1053
  %v1514 = vpack.c.b16 %v1058, %v1054
  %v1515 = vpack.c.b16 %v1063, %v1059
  %v1516 = vpack.c.b16 %v1064, %v1060
  %v1517 = vpack.c.b16 %v1065, %v1061
  %v1518 = vpack.c.b16 %v1066, %v1062
  %v1519 = vpack.c.b16 %v1071, %v1067
  %v1520 = vpack.c.b16 %v1072, %v1068
  %v1521 = vpack.c.b16 %v1073, %v1069
  %v1522 = vpack.c.b16 %v1074, %v1070
  %v1523 = vpack.c.b16 %v1079, %v1075
  %v1524 = vpack.c.b16 %v1080, %v1076
  %v1525 = vpack.c.b16 %v1081, %v1077
  %v1526 = vpack.c.b16 %v1082, %v1078
  %v1527 = vpack.c.b16 %v1087, %v1083
  %v1528 = vpack.c.b16 %v1088, %v1084
  %v1529 = vpack.c.b16 %v1089, %v1085
  %v1530 = vpack.c.b16 %v1090, %v1086
  %v1531 = vpack.c.b16 %v1095, %v1091
  %v1532 = vpack.c.b16 %v1096, %v1092
  %v1533 = vpack.c.b16 %v1097, %v1093
  %v1534 = vpack.c.b16 %v1098, %v1094
  %v1535 = vpack.c.b16 %v1103, %v1099
  %v1536 = vpack.c.b16 %v1104, %v1100
  %v1537 = vpack.c.b16 %v1105, %v1101
  %v1538 = vpack.c.b16 %v1106, %v1102
  %v1539 = vpack.c.b16 %v1111, %v1107
  %v1540 = vpack.c.b16 %v1112, %v1108
  %v1541 = vpack.c.b16 %v1113, %v1109
  %v1542 = vpack.c.b16 %v1114, %v1110
  %v1543 = vpack.c.b16 %v1119, %v1115
  %v1544 = vpack.c.b16 %v1120, %v1116
  %v1545 = vpack.c.b16 %v1121, %v1117
  %v1546 = vpack.c.b16 %v1122, %v1118
  %v1547 = vpack.c.b16 %v1127, %v1123
  %v1548 = vpack.c.b16 %v1128, %v1124
  %v1549 = vpack.c.b16 %v1129, %v1125
  %v1550 = vpack.c.b16 %v1130, %v1126
  %v1551 = vpack.c.b16 %v1135, %v1131
  %v1552 = vpack.c.b16 %v1136, %v1132
  %v1553 = vpack.c.b16 %v1137, %v1133
  %v1554 = vpack.c.b16 %v1138, %v1134
  %v1555 = vpack.c.b16 %v1143, %v1139
  %v1556 = vpack.c.b16 %v1144, %v1140
  %v1557 = vpack.c.b16 %v1145, %v1141
  %v1558 = vpack.c.b16 %v1146, %v1142
  %v1559 = vpack.c.b16 %v1151, %v1147
  %v1560 = vpack.c.b16 %v1152, %v1148
  %v1561 = vpack.c.b16 %v1153, %v1149
  %v1562 = vpack.c.b16 %v1154, %v1150
  %v1563 = vpack.c.b16 %v1159, %v1155
  %v1564 = vpack.c.b16 %v1160, %v1156
  %v1565 = vpack.c.b16 %v1161, %v1157
  %v1566 = vpack.c.b16 %v1162, %v1158
  %v1567 = vpack.c.b16 %v1167, %v1163
  %v1568 = vpack.c.b16 %v1168, %v1164
  %v1569 = vpack.c.b16 %v1169, %v1165
  %v1570 = vpack.c.b16 %v1170, %v1166
  %v1571 = vpack.c.b16 %v1175, %v1171
  %v1572 = vpack.c.b16 %v1176, %v1172
  %v1573 = vpack.c.b16 %v1177, %v1173
  %v1574 = vpack.c.b16 %v1178, %v1174
  %v1575 = vpack.c.b16 %v1183, %v1179
  %v1576 = vpack.c.b16 %v1184, %v1180
  %v1577 = vpack.c.b16 %v1185, %v1181
  %v1578 = vpack.c.b16 %v1186, %v1182
  %v1579 = vpack.c.b16 %v1191, %v1187
  %v1580 = vpack.c.b16 %v1192, %v1188
  %v1581 = vpack.c.b16 %v1193, %v1189
  %v1582 = vpack.c.b16 %v1194, %v1190
  %v1583 = vpack.c.b16 %v1199, %v1195
  %v1584 = vpack.c.b16 %v1200, %v1196
  %v1585 = vpack.c.b16 %v1201, %v1197
  %v1586 = vpack.c.b16 %v1202, %v1198
  %v1587 = vpack.c.b16 %v1207, %v1203
  %v1588 = vpack.c.b16 %v1208, %v1204
  %v1589 = vpack.c.b16 %v1209, %v1205
  %v1590 = vpack.c.b16 %v1210, %v1206
  %v1591 = vpack.c.b16 %v1215, %v1211
  %v1592 = vpack.c.b16 %v1216, %v1212
  %v1593 = vpack.c.b16 %v1217, %v1213
  %v1594 = vpack.c.b16 %v1218, %v1214
  %v1595 = vpack.c.b16 %v1223, %v1219
  %v1596 = vpack.c.b16 %v1224, %v1220
  %v1597 = vpack.c.b16 %v1225, %v1221
  %v1598 = vpack.c.b16 %v1226, %v1222
  %v1599 = vpack.c.b16 %v1231, %v1227
  %v1600 = vpack.c.b16 %v1232, %v1228
  %v1601 = vpack.c.b16 %v1233, %v1229
  %v1602 = vpack.c.b16 %v1234, %v1230
  %v1603 = vpack.c.b16 %v1239, %v1235
  %v1604 = vpack.c.b16 %v1240, %v1236
  %v1605 = vpack.c.b16 %v1241, %v1237
  %v1606 = vpack.c.b16 %v1242, %v1238
  %v1607 = vpack.c.b16 %v1247, %v1243
  %v1608 = vpack.c.b16 %v1248, %v1244
  %v1609 = vpack.c.b16 %v1249, %v1245
  %v1610 = vpack.c.b16 %v1250, %v1246
  %v1611 = vpack.c.b16 %v1255, %v1251
  %v1612 = vpack.c.b16 %v1256, %v1252
  %v1613 = vpack.c.b16 %v1257, %v1253
  %v1614 = vpack.c.b16 %v1258, %v1254
  %v1615 = vpack.c.b16 %v1263, %v1259
  %v1616 = vpack.c.b16 %v1264, %v1260
  %v1617 = vpack.c.b16 %v1265, %v1261
  %v1618 = vpack.c.b16 %v1266, %v1262
  %v1619 = vpack.c.b16 %v1271, %v1267
  %v1620 = vpack.c.b16 %v1272, %v1268
  %v1621 = vpack.c.b16 %v1273, %v1269
  %v1622 = vpack.c.b16 %v1274, %v1270
  %v1623 = vpack.c.b16 %v1279, %v1275
  %v1624 = vpack.c.b16 %v1280, %v1276
  %v1625 = vpack.c.b16 %v1281, %v1277
  %v1626 = vpack.c.b16 %v1282, %v1278
  %v1627 = vpack.c.b16 %v1287, %v1283
  %v1628 = vpack.c.b16 %v1288, %v1284
  %v1629 = vpack.c.b16 %v1289, %v1285
  %v1630 = vpack.c.b16 %v1290, %v1286
  %v1631 = vpack.c.b16 %v1295, %v1291
  %v1632 = vpack.c.b16 %v1296, %v1292
  %v1633 = vpack.c.b16 %v1297, %v1293
  %v1634 = vpack.c.b16 %v1298, %v1294
  %v1635 = vpack.c.b16 %v1303, %v1299
  %v1636 = vpack.c.b16 %v1304, %v1300
  %v1637 = vpack.c.b16 %v1305, %v1301
  %v1638 = vpack.c.b16 %v1306, %v1302
  %v1639 = vpack.c.b16 %v1311, %v1307
  %v1640 = vpack.c.b16 %v1312, %v1308
  %v1641 = vpack.c.b16 %v1313, %v1309
  %v1642 = vpack.c.b16 %v1314, %v1310
  %v1643 = vpack.c.b16 %v1319, %v1315
  %v1644 = vpack.c.b16 %v1320, %v1316
  %v1645 = vpack.c.b16 %v1321, %v1317
  %v1646 = vpack.c.b16 %v1322, %v1318
  %v1647 = vpack.c.b16 %v1327, %v1323
  %v1648 = vpack.c.b16 %v1328, %v1324
  %v1649 = vpack.c.b16 %v1329, %v1325
  %v1650 = vpack.c.b16 %v1330, %v1326
  %v1651 = vpack.c.b16 %v1335, %v1331
  %v1652 = vpack.c.b16 %v1336, %v1332
  %v1653 = vpack.c.b16 %v1337, %v1333
  %v1654 = vpack.c.b16 %v1338, %v1334
  %v1655 = vpack.c.b16 %v1343, %v1339
  %v1656 = vpack.c.b16 %v1344, %v1340
  %v1657 = vpack.c.b16 %v1345, %v1341
  %v1658 = vpack.c.b16 %v1346, %v1342
  %v1659 = vpack.c.b16 %v1351, %v1347
  %v1660 = vpack.c.b16 %v1352, %v1348
  %v1661 = vpack.c.b16 %v1353, %v1349
  %v1662 = vpack.c.b16 %v1354, %v1350
  %v1663 = vpack.c.b16 %v1359, %v1355
  %v1664 = vpack.c.b16 %v1360, %v1356
  %v1665 = vpack.c.b16 %v1361, %v1357
  %v1666 = vpack.c.b16 %v1362, %v1358
  %v1667 = vpack.c.b16 %v1367, %v1363
  %v1668 = vpack.c.b16 %v1368, %v1364
  %v1669 = vpack.c.b16 %v1369, %v1365
  %v1670 = vpack.c.b16 %v1370, %v1366
  %v1671 = vpack.c.b16 %v1375, %v1371
  %v1672 = vpack.c.b16 %v1376, %v1372
  %v1673 = vpack.c.b16 %v1377, %v1373
  %v1674 = vpack.c.b16 %v1378, %v1374
  %v1675 = vpack.c.b16 %v1383, %v1379
  %v1676 = vpack.c.b16 %v1384, %v1380
  %v1677 = vpack.c.b16 %v1385, %v1381
  %v1678 = vpack.c.b16 %v1386, %v1382
  %v1679 = vpack.c.b16 %v1391, %v1387
  %v1680 = vpack.c.b16 %v1392, %v1388
  %v1681 = vpack.c.b16 %v1393, %v1389
  %v1682 = vpack.c.b16 %v1394, %v1390
  %v1683 = vpack.c.b16 %v1399, %v1395
  %v1684 = vpack.c.b16 %v1400, %v1396
  %v1685 = vpack.c.b16 %v1401, %v1397
  %v1686 = vpack.c.b16 %v1402, %v1398
  %v1687 = vpack.c.b16 %v1407, %v1403
  %v1688 = vpack.c.b16 %v1408, %v1404
  %v1689 = vpack.c.b16 %v1409, %v1405
  %v1690 = vpack.c.b16 %v1410, %v1406
  %v1691 = vpack.c.b16 %v1415, %v1411
  %v1692 = vpack.c.b16 %v1416, %v1412
  %v1693 = vpack.c.b16 %v1417, %v1413
  %v1694 = vpack.c.b16 %v1418, %v1414
  %v1695 = vpack.c.b16 %v1423, %v1419
  %v1696 = vpack.c.b16 %v1424, %v1420
  %v1697 = vpack.c.b16 %v1425, %v1421
  %v1698 = vpack.c.b16 %v1426, %v1422
  %v1699 = vpack.c.b16 %v1431, %v1427
  %v1700 = vpack.c.b16 %v1432, %v1428
  %v1701 = vpack.c.b16 %v1433, %v1429
  %v1702 = vpack.c.b16 %v1434, %v1430
  %v1703 = vpack.c.b16 %v1439, %v1435
  %v1704 = vpack.c.b16 %v1440, %v1436
  %v1705 = vpack.c.b16 %v1441, %v1437
  %v1706 = vpack.c.b16 %v1442, %v1438
  %v1707 = vpack.c.b16 %v1447, %v1443
  %v1708 = vpack.c.b16 %v1448, %v1444
  %v1709 = vpack.c.b16 %v1449, %v1445
  %v1710 = vpack.c.b16 %v1450, %v1446
  %v1711 = vpack.c.b16 %v1455, %v1451
  %v1712 = vpack.c.b16 %v1456, %v1452
  %v1713 = vpack.c.b16 %v1457, %v1453
  %v1714 = vpack.c.b16 %v1458, %v1454
  %1971 = vmatprep.subr.bf16.mxu0 %v1460
  %1972 = vmatpush1.bf16.msra.mxu0 %v1459
  %1973 = vmatprep.subr.bf16.mxu0 %v1464
  %1974 = vmatpush1.bf16.msra.mxu0 %v1463
  %1975 = vmatprep.subr.bf16.mxu0 %v1468
  %1976 = vmatpush1.bf16.msra.mxu0 %v1467
  %1977 = vmatprep.subr.bf16.mxu0 %v1472
  %1978 = vmatpush1.bf16.msra.mxu0 %v1471
  %1979 = vmatprep.subr.bf16.mxu0 %v1476
  %1980 = vmatpush1.bf16.msra.mxu0 %v1475
  %1981 = vmatprep.subr.bf16.mxu0 %v1480
  %1982 = vmatpush1.bf16.msra.mxu0 %v1479
  %1983 = vmatprep.subr.bf16.mxu0 %v1484
  %1984 = vmatpush1.bf16.msra.mxu0 %v1483
  %1985 = vmatprep.subr.bf16.mxu0 %v1488
  %1986 = vmatpush1.bf16.msra.mxu0 %v1487
  %1987 = vmatprep.subr.bf16.mxu0 %v1492
  %1988 = vmatpush1.bf16.msra.mxu0 %v1491
  %1989 = vmatprep.subr.bf16.mxu0 %v1496
  %1990 = vmatpush1.bf16.msra.mxu0 %v1495
  %1991 = vmatprep.subr.bf16.mxu0 %v1500
  %1992 = vmatpush1.bf16.msra.mxu0 %v1499
  %1993 = vmatprep.subr.bf16.mxu0 %v1504
  %1994 = vmatpush1.bf16.msra.mxu0 %v1503
  %1995 = vmatprep.subr.bf16.mxu0 %v1508
  %1996 = vmatpush1.bf16.msra.mxu0 %v1507
  %1997 = vmatprep.subr.bf16.mxu0 %v1512
  %1998 = vmatpush1.bf16.msra.mxu0 %v1511
  %1999 = vmatprep.subr.bf16.mxu0 %v1516
  %2000 = vmatpush1.bf16.msra.mxu0 %v1515
  %2001 = vmatprep.subr.bf16.mxu0 %v1520
  %2002 = vmatpush1.bf16.msra.mxu0 %v1519
  %2003 = vmatprep.mubr.bf16.mxu0 %v406
  %2004 = vmatmul.mubr.bf16.gmra.mrb[0].mxu0 %v405
  %v2005 = vpop.f32.mrb[0].mxu0
  %v2006 = vadd.f32 %v674, %v2005
  %v2007 = vpop.f32.mrb[0].mxu0
  %v2008 = vadd.f32 %v678, %v2007
  %v2009 = vpop.f32.mrb[0].mxu0
  %v2010 = vpop.f32.mrb[0].mxu0
  %2011 = vdwg.mxu0
  %2012 = vmatprep.subr.bf16.mxu0 %v1524
  %2013 = vmatpush1.bf16.msra.mxu0 %v1523
  %2014 = vmatprep.subr.bf16.mxu0 %v1528
  %2015 = vmatpush1.bf16.msra.mxu0 %v1527
  %2016 = vmatprep.subr.bf16.mxu0 %v1532
  %2017 = vmatpush1.bf16.msra.mxu0 %v1531
  %2018 = vmatprep.subr.bf16.mxu0 %v1536
  %2019 = vmatpush1.bf16.msra.mxu0 %v1535
  %2020 = vmatprep.subr.bf16.mxu0 %v1540
  %2021 = vmatpush1.bf16.msra.mxu0 %v1539
  %2022 = vmatprep.subr.bf16.mxu0 %v1544
  %2023 = vmatpush1.bf16.msra.mxu0 %v1543
  %2024 = vmatprep.subr.bf16.mxu0 %v1548
  %2025 = vmatpush1.bf16.msra.mxu0 %v1547
  %2026 = vmatprep.subr.bf16.mxu0 %v1552
  %2027 = vmatpush1.bf16.msra.mxu0 %v1551
  %2028 = vmatprep.subr.bf16.mxu0 %v1556
  %2029 = vmatpush1.bf16.msra.mxu0 %v1555
  %2030 = vmatprep.subr.bf16.mxu0 %v1560
  %2031 = vmatpush1.bf16.msra.mxu0 %v1559
  %2032 = vmatprep.subr.bf16.mxu0 %v1564
  %2033 = vmatpush1.bf16.msra.mxu0 %v1563
  %2034 = vmatprep.subr.bf16.mxu0 %v1568
  %2035 = vmatpush1.bf16.msra.mxu0 %v1567
  %2036 = vmatprep.subr.bf16.mxu0 %v1572
  %2037 = vmatpush1.bf16.msra.mxu0 %v1571
  %2038 = vmatprep.subr.bf16.mxu0 %v1576
  %2039 = vmatpush1.bf16.msra.mxu0 %v1575
  %2040 = vmatprep.subr.bf16.mxu0 %v1580
  %2041 = vmatpush1.bf16.msra.mxu0 %v1579
  %2042 = vmatprep.subr.bf16.mxu0 %v1584
  %2043 = vmatpush1.bf16.msra.mxu0 %v1583
  %2044 = vmatprep.mubr.bf16.mxu0 %v408
  %2045 = vmatmul.mubr.bf16.gmra.mrb[0].mxu0 %v407
  %v2046 = vpop.f32.mrb[0].mxu0
  %v2047 = vadd.f32 %v2006, %v2046
  %v2048 = vpop.f32.mrb[0].mxu0
  %v2049 = vadd.f32 %v2008, %v2048
  %v2050 = vpop.f32.mrb[0].mxu0
  %v2051 = vpop.f32.mrb[0].mxu0
  %2052 = vdwg.mxu0
  %2053 = vmatprep.subr.bf16.mxu0 %v1588
  %2054 = vmatpush1.bf16.msra.mxu0 %v1587
  %2055 = vmatprep.subr.bf16.mxu0 %v1592
  %2056 = vmatpush1.bf16.msra.mxu0 %v1591
  %2057 = vmatprep.subr.bf16.mxu0 %v1596
  %2058 = vmatpush1.bf16.msra.mxu0 %v1595
  %2059 = vmatprep.subr.bf16.mxu0 %v1600
  %2060 = vmatpush1.bf16.msra.mxu0 %v1599
  %2061 = vmatprep.subr.bf16.mxu0 %v1604
  %2062 = vmatpush1.bf16.msra.mxu0 %v1603
  %2063 = vmatprep.subr.bf16.mxu0 %v1608
  %2064 = vmatpush1.bf16.msra.mxu0 %v1607
  %2065 = vmatprep.subr.bf16.mxu0 %v1612
  %2066 = vmatpush1.bf16.msra.mxu0 %v1611
  %2067 = vmatprep.subr.bf16.mxu0 %v1616
  %2068 = vmatpush1.bf16.msra.mxu0 %v1615
  %2069 = vmatprep.subr.bf16.mxu0 %v1620
  %2070 = vmatpush1.bf16.msra.mxu0 %v1619
  %2071 = vmatprep.subr.bf16.mxu0 %v1624
  %2072 = vmatpush1.bf16.msra.mxu0 %v1623
  %2073 = vmatprep.subr.bf16.mxu0 %v1628
  %2074 = vmatpush1.bf16.msra.mxu0 %v1627
  %2075 = vmatprep.subr.bf16.mxu0 %v1632
  %2076 = vmatpush1.bf16.msra.mxu0 %v1631
  %2077 = vmatprep.subr.bf16.mxu0 %v1636
  %2078 = vmatpush1.bf16.msra.mxu0 %v1635
  %2079 = vmatprep.subr.bf16.mxu0 %v1640
  %2080 = vmatpush1.bf16.msra.mxu0 %v1639
  %2081 = vmatprep.subr.bf16.mxu0 %v1644
  %2082 = vmatpush1.bf16.msra.mxu0 %v1643
  %2083 = vmatprep.subr.bf16.mxu0 %v1648
  %2084 = vmatpush1.bf16.msra.mxu0 %v1647
  %2085 = vmatprep.mubr.bf16.mxu0 %v410
  %2086 = vmatmul.mubr.bf16.gmra.mrb[0].mxu0 %v409
  %v2087 = vpop.f32.mrb[0].mxu0
  %v2088 = vadd.f32 %v2047, %v2087
  %v2089 = vpop.f32.mrb[0].mxu0
  %v2090 = vadd.f32 %v2049, %v2089
  %v2091 = vpop.f32.mrb[0].mxu0
  %v2092 = vpop.f32.mrb[0].mxu0
  %2093 = vdwg.mxu0
  %2094 = vmatprep.subr.bf16.mxu0 %v1652
  %2095 = vmatpush1.bf16.msra.mxu0 %v1651
  %2096 = vmatprep.subr.bf16.mxu0 %v1656
  %2097 = vmatpush1.bf16.msra.mxu0 %v1655
  %2098 = vmatprep.subr.bf16.mxu0 %v1660
  %2099 = vmatpush1.bf16.msra.mxu0 %v1659
  %2100 = vmatprep.subr.bf16.mxu0 %v1664
  %2101 = vmatpush1.bf16.msra.mxu0 %v1663
  %2102 = vmatprep.subr.bf16.mxu0 %v1668
  %2103 = vmatpush1.bf16.msra.mxu0 %v1667
  %2104 = vmatprep.subr.bf16.mxu0 %v1672
  %2105 = vmatpush1.bf16.msra.mxu0 %v1671
  %2106 = vmatprep.subr.bf16.mxu0 %v1676
  %2107 = vmatpush1.bf16.msra.mxu0 %v1675
  %2108 = vmatprep.subr.bf16.mxu0 %v1680
  %2109 = vmatpush1.bf16.msra.mxu0 %v1679
  %2110 = vmatprep.subr.bf16.mxu0 %v1684
  %2111 = vmatpush1.bf16.msra.mxu0 %v1683
  %2112 = vmatprep.subr.bf16.mxu0 %v1688
  %2113 = vmatpush1.bf16.msra.mxu0 %v1687
  %2114 = vmatprep.subr.bf16.mxu0 %v1692
  %2115 = vmatpush1.bf16.msra.mxu0 %v1691
  %2116 = vmatprep.subr.bf16.mxu0 %v1696
  %2117 = vmatpush1.bf16.msra.mxu0 %v1695
  %2118 = vmatprep.subr.bf16.mxu0 %v1700
  %2119 = vmatpush1.bf16.msra.mxu0 %v1699
  %2120 = vmatprep.subr.bf16.mxu0 %v1704
  %2121 = vmatpush1.bf16.msra.mxu0 %v1703
  %2122 = vmatprep.subr.bf16.mxu0 %v1708
  %2123 = vmatpush1.bf16.msra.mxu0 %v1707
  %2124 = vmatprep.subr.bf16.mxu0 %v1712
  %2125 = vmatpush1.bf16.msra.mxu0 %v1711
  %2126 = vmatprep.mubr.bf16.mxu0 %v412
  %2127 = vmatmul.mubr.bf16.gmra.mrb[0].mxu0 %v411
  %v2128 = vpop.f32.mrb[0].mxu0
  %v2129 = vadd.f32 %v2088, %v2128
  %v2130 = vpop.f32.mrb[0].mxu0
  %v2131 = vadd.f32 %v2090, %v2130
  %v2132 = vpop.f32.mrb[0].mxu0
  %v2133 = vpop.f32.mrb[0].mxu0
  %2134 = vdwg.mxu0
  %2135 = vmatprep.subr.bf16.mxu0 %v1462
  %2136 = vmatpush1.bf16.msra.mxu0 %v1461
  %2137 = vmatprep.subr.bf16.mxu0 %v1466
  %2138 = vmatpush1.bf16.msra.mxu0 %v1465
  %2139 = vmatprep.subr.bf16.mxu0 %v1470
  %2140 = vmatpush1.bf16.msra.mxu0 %v1469
  %2141 = vmatprep.subr.bf16.mxu0 %v1474
  %2142 = vmatpush1.bf16.msra.mxu0 %v1473
  %2143 = vmatprep.subr.bf16.mxu0 %v1478
  %2144 = vmatpush1.bf16.msra.mxu0 %v1477
  %2145 = vmatprep.subr.bf16.mxu0 %v1482
  %2146 = vmatpush1.bf16.msra.mxu0 %v1481
  %2147 = vmatprep.subr.bf16.mxu0 %v1486
  %2148 = vmatpush1.bf16.msra.mxu0 %v1485
  %2149 = vmatprep.subr.bf16.mxu0 %v1490
  %2150 = vmatpush1.bf16.msra.mxu0 %v1489
  %2151 = vmatprep.subr.bf16.mxu0 %v1494
  %2152 = vmatpush1.bf16.msra.mxu0 %v1493
  %2153 = vmatprep.subr.bf16.mxu0 %v1498
  %2154 = vmatpush1.bf16.msra.mxu0 %v1497
  %2155 = vmatprep.subr.bf16.mxu0 %v1502
  %2156 = vmatpush1.bf16.msra.mxu0 %v1501
  %2157 = vmatprep.subr.bf16.mxu0 %v1506
  %2158 = vmatpush1.bf16.msra.mxu0 %v1505
  %2159 = vmatprep.subr.bf16.mxu0 %v1510
  %2160 = vmatpush1.bf16.msra.mxu0 %v1509
  %2161 = vmatprep.subr.bf16.mxu0 %v1514
  %2162 = vmatpush1.bf16.msra.mxu0 %v1513
  %2163 = vmatprep.subr.bf16.mxu0 %v1518
  %2164 = vmatpush1.bf16.msra.mxu0 %v1517
  %2165 = vmatprep.subr.bf16.mxu0 %v1522
  %2166 = vmatpush1.bf16.msra.mxu0 %v1521
  %2167 = vmatprep.mubr.bf16.mxu0 %v406
  %2168 = vmatmul.mubr.bf16.gmra.mrb[0].mxu0 %v405
  %v2169 = vpop.f32.mrb[0].mxu0
  %v2170 = vadd.f32 %v682, %v2169
  %v2171 = vpop.f32.mrb[0].mxu0
  %v2172 = vadd.f32 %v686, %v2171
  %v2173 = vpop.f32.mrb[0].mxu0
  %v2174 = vpop.f32.mrb[0].mxu0
  %2175 = vdwg.mxu0
  %2176 = vmatprep.subr.bf16.mxu0 %v1526
  %2177 = vmatpush1.bf16.msra.mxu0 %v1525
  %2178 = vmatprep.subr.bf16.mxu0 %v1530
  %2179 = vmatpush1.bf16.msra.mxu0 %v1529
  %2180 = vmatprep.subr.bf16.mxu0 %v1534
  %2181 = vmatpush1.bf16.msra.mxu0 %v1533
  %2182 = vmatprep.subr.bf16.mxu0 %v1538
  %2183 = vmatpush1.bf16.msra.mxu0 %v1537
  %2184 = vmatprep.subr.bf16.mxu0 %v1542
  %2185 = vmatpush1.bf16.msra.mxu0 %v1541
  %2186 = vmatprep.subr.bf16.mxu0 %v1546
  %2187 = vmatpush1.bf16.msra.mxu0 %v1545
  %2188 = vmatprep.subr.bf16.mxu0 %v1550
  %2189 = vmatpush1.bf16.msra.mxu0 %v1549
  %2190 = vmatprep.subr.bf16.mxu0 %v1554
  %2191 = vmatpush1.bf16.msra.mxu0 %v1553
  %2192 = vmatprep.subr.bf16.mxu0 %v1558
  %2193 = vmatpush1.bf16.msra.mxu0 %v1557
  %2194 = vmatprep.subr.bf16.mxu0 %v1562
  %2195 = vmatpush1.bf16.msra.mxu0 %v1561
  %2196 = vmatprep.subr.bf16.mxu0 %v1566
  %2197 = vmatpush1.bf16.msra.mxu0 %v1565
  %2198 = vmatprep.subr.bf16.mxu0 %v1570
  %2199 = vmatpush1.bf16.msra.mxu0 %v1569
  %2200 = vmatprep.subr.bf16.mxu0 %v1574
  %2201 = vmatpush1.bf16.msra.mxu0 %v1573
  %2202 = vmatprep.subr.bf16.mxu0 %v1578
  %2203 = vmatpush1.bf16.msra.mxu0 %v1577
  %2204 = vmatprep.subr.bf16.mxu0 %v1582
  %2205 = vmatpush1.bf16.msra.mxu0 %v1581
  %2206 = vmatprep.subr.bf16.mxu0 %v1586
  %2207 = vmatpush1.bf16.msra.mxu0 %v1585
  %2208 = vmatprep.mubr.bf16.mxu0 %v408
  %2209 = vmatmul.mubr.bf16.gmra.mrb[0].mxu0 %v407
  %v2210 = vpop.f32.mrb[0].mxu0
  %v2211 = vadd.f32 %v2170, %v2210
  %v2212 = vpop.f32.mrb[0].mxu0
  %v2213 = vadd.f32 %v2172, %v2212
  %v2214 = vpop.f32.mrb[0].mxu0
  %v2215 = vpop.f32.mrb[0].mxu0
  %2216 = vdwg.mxu0
  %2217 = vmatprep.subr.bf16.mxu0 %v1590
  %2218 = vmatpush1.bf16.msra.mxu0 %v1589
  %2219 = vmatprep.subr.bf16.mxu0 %v1594
  %2220 = vmatpush1.bf16.msra.mxu0 %v1593
  %2221 = vmatprep.subr.bf16.mxu0 %v1598
  %2222 = vmatpush1.bf16.msra.mxu0 %v1597
  %2223 = vmatprep.subr.bf16.mxu0 %v1602
  %2224 = vmatpush1.bf16.msra.mxu0 %v1601
  %2225 = vmatprep.subr.bf16.mxu0 %v1606
  %2226 = vmatpush1.bf16.msra.mxu0 %v1605
  %2227 = vmatprep.subr.bf16.mxu0 %v1610
  %2228 = vmatpush1.bf16.msra.mxu0 %v1609
  %2229 = vmatprep.subr.bf16.mxu0 %v1614
  %2230 = vmatpush1.bf16.msra.mxu0 %v1613
  %2231 = vmatprep.subr.bf16.mxu0 %v1618
  %2232 = vmatpush1.bf16.msra.mxu0 %v1617
  %2233 = vmatprep.subr.bf16.mxu0 %v1622
  %2234 = vmatpush1.bf16.msra.mxu0 %v1621
  %2235 = vmatprep.subr.bf16.mxu0 %v1626
  %2236 = vmatpush1.bf16.msra.mxu0 %v1625
  %2237 = vmatprep.subr.bf16.mxu0 %v1630
  %2238 = vmatpush1.bf16.msra.mxu0 %v1629
  %2239 = vmatprep.subr.bf16.mxu0 %v1634
  %2240 = vmatpush1.bf16.msra.mxu0 %v1633
  %2241 = vmatprep.subr.bf16.mxu0 %v1638
  %2242 = vmatpush1.bf16.msra.mxu0 %v1637
  %2243 = vmatprep.subr.bf16.mxu0 %v1642
  %2244 = vmatpush1.bf16.msra.mxu0 %v1641
  %2245 = vmatprep.subr.bf16.mxu0 %v1646
  %2246 = vmatpush1.bf16.msra.mxu0 %v1645
  %2247 = vmatprep.subr.bf16.mxu0 %v1650
  %2248 = vmatpush1.bf16.msra.mxu0 %v1649
  %2249 = vmatprep.mubr.bf16.mxu0 %v410
  %2250 = vmatmul.mubr.bf16.gmra.mrb[0].mxu0 %v409
  %v2251 = vpop.f32.mrb[0].mxu0
  %v2252 = vadd.f32 %v2211, %v2251
  %v2253 = vpop.f32.mrb[0].mxu0
  %v2254 = vadd.f32 %v2213, %v2253
  %v2255 = vpop.f32.mrb[0].mxu0
  %v2256 = vpop.f32.mrb[0].mxu0
  %2257 = vdwg.mxu0
  %2258 = vmatprep.subr.bf16.mxu0 %v1654
  %2259 = vmatpush1.bf16.msra.mxu0 %v1653
  %2260 = vmatprep.subr.bf16.mxu0 %v1658
  %2261 = vmatpush1.bf16.msra.mxu0 %v1657
  %2262 = vmatprep.subr.bf16.mxu0 %v1662
  %2263 = vmatpush1.bf16.msra.mxu0 %v1661
  %2264 = vmatprep.subr.bf16.mxu0 %v1666
  %2265 = vmatpush1.bf16.msra.mxu0 %v1665
  %2266 = vmatprep.subr.bf16.mxu0 %v1670
  %2267 = vmatpush1.bf16.msra.mxu0 %v1669
  %2268 = vmatprep.subr.bf16.mxu0 %v1674
  %2269 = vmatpush1.bf16.msra.mxu0 %v1673
  %2270 = vmatprep.subr.bf16.mxu0 %v1678
  %2271 = vmatpush1.bf16.msra.mxu0 %v1677
  %2272 = vmatprep.subr.bf16.mxu0 %v1682
  %2273 = vmatpush1.bf16.msra.mxu0 %v1681
  %2274 = vmatprep.subr.bf16.mxu0 %v1686
  %2275 = vmatpush1.bf16.msra.mxu0 %v1685
  %2276 = vmatprep.subr.bf16.mxu0 %v1690
  %2277 = vmatpush1.bf16.msra.mxu0 %v1689
  %2278 = vmatprep.subr.bf16.mxu0 %v1694
  %2279 = vmatpush1.bf16.msra.mxu0 %v1693
  %2280 = vmatprep.subr.bf16.mxu0 %v1698
  %2281 = vmatpush1.bf16.msra.mxu0 %v1697
  %2282 = vmatprep.subr.bf16.mxu0 %v1702
  %2283 = vmatpush1.bf16.msra.mxu0 %v1701
  %2284 = vmatprep.subr.bf16.mxu0 %v1706
  %2285 = vmatpush1.bf16.msra.mxu0 %v1705
  %2286 = vmatprep.subr.bf16.mxu0 %v1710
  %2287 = vmatpush1.bf16.msra.mxu0 %v1709
  %2288 = vmatprep.subr.bf16.mxu0 %v1714
  %2289 = vmatpush1.bf16.msra.mxu0 %v1713
  %2290 = vmatprep.mubr.bf16.mxu0 %v412
  %2291 = vmatmul.mubr.bf16.gmra.mrb[0].mxu0 %v411
  %v2292 = vpop.f32.mrb[0].mxu0
  %v2293 = vadd.f32 %v2252, %v2292
  %v2294 = vpop.f32.mrb[0].mxu0
  %v2295 = vadd.f32 %v2254, %v2294
  %v2296 = vpop.f32.mrb[0].mxu0
  %v2297 = vpop.f32.mrb[0].mxu0
  %2298 = vdwg.mxu0
  %v2299 = vld [vmem:[%s8] sm:$0xf]
  %v2300 = vld [vmem:[%s9] sm:$0xf]
  %vm2301 = vcmask 1041408
  %v2302 = vsel %vm2301, %v2129, 0.0
  %v2303 = vrot.slane %v2302, 4
  %v2304 = vadd.f32 %v2302, %v2303
  %v2305 = vrot.slane %v2304, 2
  %v2306 = vadd.f32 %v2304, %v2305
  %v2307 = vrot.slane %v2306, 1
  %v2308 = vadd.f32 %v2306, %v2307
  %v2309 = vsel %vm2301, %v2131, 0.0
  %v2310 = vrot.slane %v2309, 4
  %v2311 = vadd.f32 %v2309, %v2310
  %v2312 = vrot.slane %v2311, 2
  %v2313 = vadd.f32 %v2311, %v2312
  %v2314 = vrot.slane %v2313, 1
  %v2315 = vadd.f32 %v2313, %v2314
  %v2316 = vsel %vm2301, %v2293, 0.0
  %v2317 = vrot.slane %v2316, 4
  %v2318 = vadd.f32 %v2316, %v2317
  %v2319 = vrot.slane %v2318, 2
  %v2320 = vadd.f32 %v2318, %v2319
  %v2321 = vrot.slane %v2320, 1
  %v2322 = vadd.f32 %v2320, %v2321
  %v2323 = vsel %vm2301, %v2295, 0.0
  %v2324 = vrot.slane %v2323, 4
  %v2325 = vadd.f32 %v2323, %v2324
  %v2326 = vrot.slane %v2325, 2
  %v2327 = vadd.f32 %v2325, %v2326
  %v2328 = vrot.slane %v2327, 1
  %v2329 = vadd.f32 %v2327, %v2328
  %v2330 = vrcp.pop 2.0
  %v2331 = vmul.f32 %v2308, %v2330
  %v2332 = vmul.f32 %v2315, %v2330
  %v2333 = vmul.f32 %v2322, %v2330
  %v2334 = vmul.f32 %v2329, %v2330
  %v2335 = vsub.f32 %v2129, %v2331
  %v2336 = vsub.f32 %v2131, %v2332
  %v2337 = vsub.f32 %v2293, %v2333
  %v2338 = vsub.f32 %v2295, %v2334
  %v2339 = vmul.f32 %v2335, %v2335
  %v2340 = vmul.f32 %v2336, %v2336
  %v2341 = vmul.f32 %v2337, %v2337
  %v2342 = vmul.f32 %v2338, %v2338
  %v2343 = vsel %vm2301, %v2339, 0.0
  %v2344 = vrot.slane %v2343, 4
  %v2345 = vadd.f32 %v2343, %v2344
  %v2346 = vrot.slane %v2345, 2
  %v2347 = vadd.f32 %v2345, %v2346
  %v2348 = vrot.slane %v2347, 1
  %v2349 = vadd.f32 %v2347, %v2348
  %v2350 = vsel %vm2301, %v2340, 0.0
  %v2351 = vrot.slane %v2350, 4
  %v2352 = vadd.f32 %v2350, %v2351
  %v2353 = vrot.slane %v2352, 2
  %v2354 = vadd.f32 %v2352, %v2353
  %v2355 = vrot.slane %v2354, 1
  %v2356 = vadd.f32 %v2354, %v2355
  %v2357 = vsel %vm2301, %v2341, 0.0
  %v2358 = vrot.slane %v2357, 4
  %v2359 = vadd.f32 %v2357, %v2358
  %v2360 = vrot.slane %v2359, 2
  %v2361 = vadd.f32 %v2359, %v2360
  %v2362 = vrot.slane %v2361, 1
  %v2363 = vadd.f32 %v2361, %v2362
  %v2364 = vsel %vm2301, %v2342, 0.0
  %v2365 = vrot.slane %v2364, 4
  %v2366 = vadd.f32 %v2364, %v2365
  %v2367 = vrot.slane %v2366, 2
  %v2368 = vadd.f32 %v2366, %v2367
  %v2369 = vrot.slane %v2368, 1
  %v2370 = vadd.f32 %v2368, %v2369
  %v2371 = vmul.f32 %v2349, %v2330
  %v2372 = vmul.f32 %v2356, %v2330
  %v2373 = vmul.f32 %v2363, %v2330
  %v2374 = vmul.f32 %v2370, %v2330
  %v2376 = vlaneseq
  %v2377 = vshrl.u32 %v2376, 7
  %v2378 = vsub.s32 0, %v2377
  %v2379 = vrot.slane %v2299, %v2378
  %v2380 = vlaneseq
  %v2381 = vshrl.u32 %v2380, 7
  %v2382 = vsub.s32 1, %v2381
  %v2383 = vrot.slane %v2299, %v2382
  %v2384 = vlaneseq
  %v2385 = vshrl.u32 %v2384, 7
  %v2386 = vsub.s32 2, %v2385
  %v2387 = vrot.slane %v2299, %v2386
  %v2388 = vlaneseq
  %v2389 = vshrl.u32 %v2388, 7
  %v2390 = vsub.s32 3, %v2389
  %v2391 = vrot.slane %v2299, %v2390
  %v2396 = vmul.f32 %v2379, %v2335
  %v2397 = vmul.f32 %v2383, %v2336
  %v2398 = vmul.f32 %v2387, %v2337
  %v2399 = vmul.f32 %v2391, %v2338
  %v2400 = vadd.f32 %v2371, 1e-05
  %v2401 = vadd.f32 %v2372, 1e-05
  %v2402 = vadd.f32 %v2373, 1e-05
  %v2403 = vadd.f32 %v2374, 1e-05
  %v2404 = vrsqrt.pop %v2400
  %v2405 = vrsqrt.pop %v2401
  %v2406 = vrsqrt.pop %v2402
  %v2407 = vrsqrt.pop %v2403
  %v2408 = vmul.f32 %v2396, %v2404
  %v2409 = vmul.f32 %v2397, %v2405
  %v2410 = vmul.f32 %v2398, %v2406
  %v2411 = vmul.f32 %v2399, %v2407
  %v2413 = vlaneseq
  %v2414 = vshrl.u32 %v2413, 7
  %v2415 = vsub.s32 0, %v2414
  %v2416 = vrot.slane %v2300, %v2415
  %v2417 = vlaneseq
  %v2418 = vshrl.u32 %v2417, 7
  %v2419 = vsub.s32 1, %v2418
  %v2420 = vrot.slane %v2300, %v2419
  %v2421 = vlaneseq
  %v2422 = vshrl.u32 %v2421, 7
  %v2423 = vsub.s32 2, %v2422
  %v2424 = vrot.slane %v2300, %v2423
  %v2425 = vlaneseq
  %v2426 = vshrl.u32 %v2425, 7
  %v2427 = vsub.s32 3, %v2426
  %v2428 = vrot.slane %v2300, %v2427
  %v2433 = vadd.f32 %v2408, %v2416
  %v2434 = vadd.f32 %v2409, %v2420
  %v2435 = vadd.f32 %v2410, %v2424
  %v2436 = vadd.f32 %v2411, %v2428
  %v2437 = vmax.f32 %v2433, 0.0
  %v2438 = vmax.f32 %v2434, 0.0
  %v2439 = vmax.f32 %v2435, 0.0
  %v2440 = vmax.f32 %v2436, 0.0
  %v2441 = vpack.c.bf16 %v2437, %v2437
  %v2442 = vpack.c.bf16 %v2438, %v2438
  %v2443 = vpack.c.bf16 %v2439, %v2439
  %v2444 = vpack.c.bf16 %v2440, %v2440
  %v2445 = vld [vmem:[%s10] sm:$0xff]
  %v2446 = vld [vmem:[%s10 + $0x8] sm:$0xff]
  %v2447 = vld [vmem:[%s10 + $0x10] sm:$0xff]
  %v2448 = vld [vmem:[%s10 + $0x18] sm:$0xff]
  %v2449 = vld [vmem:[%s10 + $0x20] sm:$0xff]
  %v2450 = vld [vmem:[%s10 + $0x28] sm:$0xff]
  %v2451 = vld [vmem:[%s10 + $0x30] sm:$0xff]
  %v2452 = vld [vmem:[%s10 + $0x38] sm:$0xff]
  %v2453 = vld [vmem:[%s10 + $0x40] sm:$0xff]
  %v2454 = vld [vmem:[%s10 + $0x48] sm:$0xff]
  %v2455 = vld [vmem:[%s10 + $0x50] sm:$0xff]
  %v2456 = vld [vmem:[%s10 + $0x58] sm:$0xff]
  %v2457 = vld [vmem:[%s10 + $0x60] sm:$0xff]
  %v2458 = vld [vmem:[%s10 + $0x68] sm:$0xff]
  %v2459 = vld [vmem:[%s10 + $0x70] sm:$0xff]
  %v2460 = vld [vmem:[%s10 + $0x78] sm:$0xff]
  %v2461 = vld [vmem:[%s10 + $0x80] sm:$0xff]
  %v2462 = vld [vmem:[%s10 + $0x88] sm:$0xff]
  %v2463 = vld [vmem:[%s10 + $0x90] sm:$0xff]
  %v2464 = vld [vmem:[%s10 + $0x98] sm:$0xff]
  %v2465 = vld [vmem:[%s10 + $0xa0] sm:$0xff]
  %v2466 = vld [vmem:[%s10 + $0xa8] sm:$0xff]
  %v2467 = vld [vmem:[%s10 + $0xb0] sm:$0xff]
  %v2468 = vld [vmem:[%s10 + $0xb8] sm:$0xff]
  %v2469 = vld [vmem:[%s10 + $0xc0] sm:$0xff]
  %v2470 = vld [vmem:[%s10 + $0xc8] sm:$0xff]
  %v2471 = vld [vmem:[%s10 + $0xd0] sm:$0xff]
  %v2472 = vld [vmem:[%s10 + $0xd8] sm:$0xff]
  %v2473 = vld [vmem:[%s10 + $0xe0] sm:$0xff]
  %v2474 = vld [vmem:[%s10 + $0xe8] sm:$0xff]
  %v2475 = vld [vmem:[%s10 + $0xf0] sm:$0xff]
  %v2476 = vld [vmem:[%s10 + $0xf8] sm:$0xff]
  %v2477 = vld [vmem:[%s10 + $0x100] sm:$0xff]
  %v2478 = vld [vmem:[%s10 + $0x108] sm:$0xff]
  %v2479 = vld [vmem:[%s10 + $0x110] sm:$0xff]
  %v2480 = vld [vmem:[%s10 + $0x118] sm:$0xff]
  %v2481 = vld [vmem:[%s10 + $0x120] sm:$0xff]
  %v2482 = vld [vmem:[%s10 + $0x128] sm:$0xff]
  %v2483 = vld [vmem:[%s10 + $0x130] sm:$0xff]
  %v2484 = vld [vmem:[%s10 + $0x138] sm:$0xff]
  %v2485 = vld [vmem:[%s10 + $0x140] sm:$0xff]
  %v2486 = vld [vmem:[%s10 + $0x148] sm:$0xff]
  %v2487 = vld [vmem:[%s10 + $0x150] sm:$0xff]
  %v2488 = vld [vmem:[%s10 + $0x158] sm:$0xff]
  %v2489 = vld [vmem:[%s10 + $0x160] sm:$0xff]
  %v2490 = vld [vmem:[%s10 + $0x168] sm:$0xff]
  %v2491 = vld [vmem:[%s10 + $0x170] sm:$0xff]
  %v2492 = vld [vmem:[%s10 + $0x178] sm:$0xff]
  %v2493 = vld [vmem:[%s10 + $0x180] sm:$0xff]
  %v2494 = vld [vmem:[%s10 + $0x188] sm:$0xff]
  %v2495 = vld [vmem:[%s10 + $0x190] sm:$0xff]
  %v2496 = vld [vmem:[%s10 + $0x198] sm:$0xff]
  %v2497 = vld [vmem:[%s10 + $0x1a0] sm:$0xff]
  %v2498 = vld [vmem:[%s10 + $0x1a8] sm:$0xff]
  %v2499 = vld [vmem:[%s10 + $0x1b0] sm:$0xff]
  %v2500 = vld [vmem:[%s10 + $0x1b8] sm:$0xff]
  %v2501 = vld [vmem:[%s10 + $0x1c0] sm:$0xff]
  %v2502 = vld [vmem:[%s10 + $0x1c8] sm:$0xff]
  %v2503 = vld [vmem:[%s10 + $0x1d0] sm:$0xff]
  %v2504 = vld [vmem:[%s10 + $0x1d8] sm:$0xff]
  %v2505 = vld [vmem:[%s10 + $0x1e0] sm:$0xff]
  %v2506 = vld [vmem:[%s10 + $0x1e8] sm:$0xff]
  %v2507 = vld [vmem:[%s10 + $0x1f0] sm:$0xff]
  %v2508 = vld [vmem:[%s10 + $0x1f8] sm:$0xff]
  %v2509 = vld [vmem:[%s11] sm:$0x3]
  %v2511 = vlaneseq
  %v2512 = vshrl.u32 %v2511, 7
  %v2513 = vsub.s32 0, %v2512
  %v2514 = vrot.slane %v2509, %v2513
  %v2515 = vlaneseq
  %v2516 = vshrl.u32 %v2515, 7
  %v2517 = vsub.s32 1, %v2516
  %v2518 = vrot.slane %v2509, %v2517
  %v2585 = vunpack.c.l.b16 %v2445
  %v2586 = vunpack.c.h.b16 %v2445
  %v2587 = vunpack.c.l.b16 %v2446
  %v2588 = vunpack.c.h.b16 %v2446
  %v2589 = vunpack.c.l.b16 %v2447
  %v2590 = vunpack.c.h.b16 %v2447
  %v2591 = vunpack.c.l.b16 %v2448
  %v2592 = vunpack.c.h.b16 %v2448
  %v2593 = vunpack.c.l.b16 %v2449
  %v2594 = vunpack.c.h.b16 %v2449
  %v2595 = vunpack.c.l.b16 %v2450
  %v2596 = vunpack.c.h.b16 %v2450
  %v2597 = vunpack.c.l.b16 %v2451
  %v2598 = vunpack.c.h.b16 %v2451
  %v2599 = vunpack.c.l.b16 %v2452
  %v2600 = vunpack.c.h.b16 %v2452
  %v2601 = vunpack.c.l.b16 %v2453
  %v2602 = vunpack.c.h.b16 %v2453
  %v2603 = vunpack.c.l.b16 %v2454
  %v2604 = vunpack.c.h.b16 %v2454
  %v2605 = vunpack.c.l.b16 %v2455
  %v2606 = vunpack.c.h.b16 %v2455
  %v2607 = vunpack.c.l.b16 %v2456
  %v2608 = vunpack.c.h.b16 %v2456
  %v2609 = vunpack.c.l.b16 %v2457
  %v2610 = vunpack.c.h.b16 %v2457
  %v2611 = vunpack.c.l.b16 %v2458
  %v2612 = vunpack.c.h.b16 %v2458
  %v2613 = vunpack.c.l.b16 %v2459
  %v2614 = vunpack.c.h.b16 %v2459
  %v2615 = vunpack.c.l.b16 %v2460
  %v2616 = vunpack.c.h.b16 %v2460
  %v2617 = vunpack.c.l.b16 %v2461
  %v2618 = vunpack.c.h.b16 %v2461
  %v2619 = vunpack.c.l.b16 %v2462
  %v2620 = vunpack.c.h.b16 %v2462
  %v2621 = vunpack.c.l.b16 %v2463
  %v2622 = vunpack.c.h.b16 %v2463
  %v2623 = vunpack.c.l.b16 %v2464
  %v2624 = vunpack.c.h.b16 %v2464
  %v2625 = vunpack.c.l.b16 %v2465
  %v2626 = vunpack.c.h.b16 %v2465
  %v2627 = vunpack.c.l.b16 %v2466
  %v2628 = vunpack.c.h.b16 %v2466
  %v2629 = vunpack.c.l.b16 %v2467
  %v2630 = vunpack.c.h.b16 %v2467
  %v2631 = vunpack.c.l.b16 %v2468
  %v2632 = vunpack.c.h.b16 %v2468
  %v2633 = vunpack.c.l.b16 %v2469
  %v2634 = vunpack.c.h.b16 %v2469
  %v2635 = vunpack.c.l.b16 %v2470
  %v2636 = vunpack.c.h.b16 %v2470
  %v2637 = vunpack.c.l.b16 %v2471
  %v2638 = vunpack.c.h.b16 %v2471
  %v2639 = vunpack.c.l.b16 %v2472
  %v2640 = vunpack.c.h.b16 %v2472
  %v2641 = vunpack.c.l.b16 %v2473
  %v2642 = vunpack.c.h.b16 %v2473
  %v2643 = vunpack.c.l.b16 %v2474
  %v2644 = vunpack.c.h.b16 %v2474
  %v2645 = vunpack.c.l.b16 %v2475
  %v2646 = vunpack.c.h.b16 %v2475
  %v2647 = vunpack.c.l.b16 %v2476
  %v2648 = vunpack.c.h.b16 %v2476
  %v2649 = vunpack.c.l.b16 %v2477
  %v2650 = vunpack.c.h.b16 %v2477
  %v2651 = vunpack.c.l.b16 %v2478
  %v2652 = vunpack.c.h.b16 %v2478
  %v2653 = vunpack.c.l.b16 %v2479
  %v2654 = vunpack.c.h.b16 %v2479
  %v2655 = vunpack.c.l.b16 %v2480
  %v2656 = vunpack.c.h.b16 %v2480
  %v2657 = vunpack.c.l.b16 %v2481
  %v2658 = vunpack.c.h.b16 %v2481
  %v2659 = vunpack.c.l.b16 %v2482
  %v2660 = vunpack.c.h.b16 %v2482
  %v2661 = vunpack.c.l.b16 %v2483
  %v2662 = vunpack.c.h.b16 %v2483
  %v2663 = vunpack.c.l.b16 %v2484
  %v2664 = vunpack.c.h.b16 %v2484
  %v2665 = vunpack.c.l.b16 %v2485
  %v2666 = vunpack.c.h.b16 %v2485
  %v2667 = vunpack.c.l.b16 %v2486
  %v2668 = vunpack.c.h.b16 %v2486
  %v2669 = vunpack.c.l.b16 %v2487
  %v2670 = vunpack.c.h.b16 %v2487
  %v2671 = vunpack.c.l.b16 %v2488
  %v2672 = vunpack.c.h.b16 %v2488
  %v2673 = vunpack.c.l.b16 %v2489
  %v2674 = vunpack.c.h.b16 %v2489
  %v2675 = vunpack.c.l.b16 %v2490
  %v2676 = vunpack.c.h.b16 %v2490
  %v2677 = vunpack.c.l.b16 %v2491
  %v2678 = vunpack.c.h.b16 %v2491
  %v2679 = vunpack.c.l.b16 %v2492
  %v2680 = vunpack.c.h.b16 %v2492
  %v2681 = vunpack.c.l.b16 %v2493
  %v2682 = vunpack.c.h.b16 %v2493
  %v2683 = vunpack.c.l.b16 %v2494
  %v2684 = vunpack.c.h.b16 %v2494
  %v2685 = vunpack.c.l.b16 %v2495
  %v2686 = vunpack.c.h.b16 %v2495
  %v2687 = vunpack.c.l.b16 %v2496
  %v2688 = vunpack.c.h.b16 %v2496
  %v2689 = vunpack.c.l.b16 %v2497
  %v2690 = vunpack.c.h.b16 %v2497
  %v2691 = vunpack.c.l.b16 %v2498
  %v2692 = vunpack.c.h.b16 %v2498
  %v2693 = vunpack.c.l.b16 %v2499
  %v2694 = vunpack.c.h.b16 %v2499
  %v2695 = vunpack.c.l.b16 %v2500
  %v2696 = vunpack.c.h.b16 %v2500
  %v2697 = vunpack.c.l.b16 %v2501
  %v2698 = vunpack.c.h.b16 %v2501
  %v2699 = vunpack.c.l.b16 %v2502
  %v2700 = vunpack.c.h.b16 %v2502
  %v2701 = vunpack.c.l.b16 %v2503
  %v2702 = vunpack.c.h.b16 %v2503
  %v2703 = vunpack.c.l.b16 %v2504
  %v2704 = vunpack.c.h.b16 %v2504
  %v2705 = vunpack.c.l.b16 %v2505
  %v2706 = vunpack.c.h.b16 %v2505
  %v2707 = vunpack.c.l.b16 %v2506
  %v2708 = vunpack.c.h.b16 %v2506
  %v2709 = vunpack.c.l.b16 %v2507
  %v2710 = vunpack.c.h.b16 %v2507
  %v2711 = vunpack.c.l.b16 %v2508
  %v2712 = vunpack.c.h.b16 %v2508
  %v2713 = vpack.c.b16 %v2587, %v2585
  %v2714 = vpack.c.b16 %v2588, %v2586
  %v2715 = vpack.c.b16 %v2591, %v2589
  %v2716 = vpack.c.b16 %v2592, %v2590
  %v2717 = vpack.c.b16 %v2595, %v2593
  %v2718 = vpack.c.b16 %v2596, %v2594
  %v2719 = vpack.c.b16 %v2599, %v2597
  %v2720 = vpack.c.b16 %v2600, %v2598
  %v2721 = vpack.c.b16 %v2603, %v2601
  %v2722 = vpack.c.b16 %v2604, %v2602
  %v2723 = vpack.c.b16 %v2607, %v2605
  %v2724 = vpack.c.b16 %v2608, %v2606
  %v2725 = vpack.c.b16 %v2611, %v2609
  %v2726 = vpack.c.b16 %v2612, %v2610
  %v2727 = vpack.c.b16 %v2615, %v2613
  %v2728 = vpack.c.b16 %v2616, %v2614
  %v2729 = vpack.c.b16 %v2619, %v2617
  %v2730 = vpack.c.b16 %v2620, %v2618
  %v2731 = vpack.c.b16 %v2623, %v2621
  %v2732 = vpack.c.b16 %v2624, %v2622
  %v2733 = vpack.c.b16 %v2627, %v2625
  %v2734 = vpack.c.b16 %v2628, %v2626
  %v2735 = vpack.c.b16 %v2631, %v2629
  %v2736 = vpack.c.b16 %v2632, %v2630
  %v2737 = vpack.c.b16 %v2635, %v2633
  %v2738 = vpack.c.b16 %v2636, %v2634
  %v2739 = vpack.c.b16 %v2639, %v2637
  %v2740 = vpack.c.b16 %v2640, %v2638
  %v2741 = vpack.c.b16 %v2643, %v2641
  %v2742 = vpack.c.b16 %v2644, %v2642
  %v2743 = vpack.c.b16 %v2647, %v2645
  %v2744 = vpack.c.b16 %v2648, %v2646
  %v2745 = vpack.c.b16 %v2651, %v2649
  %v2746 = vpack.c.b16 %v2652, %v2650
  %v2747 = vpack.c.b16 %v2655, %v2653
  %v2748 = vpack.c.b16 %v2656, %v2654
  %v2749 = vpack.c.b16 %v2659, %v2657
  %v2750 = vpack.c.b16 %v2660, %v2658
  %v2751 = vpack.c.b16 %v2663, %v2661
  %v2752 = vpack.c.b16 %v2664, %v2662
  %v2753 = vpack.c.b16 %v2667, %v2665
  %v2754 = vpack.c.b16 %v2668, %v2666
  %v2755 = vpack.c.b16 %v2671, %v2669
  %v2756 = vpack.c.b16 %v2672, %v2670
  %v2757 = vpack.c.b16 %v2675, %v2673
  %v2758 = vpack.c.b16 %v2676, %v2674
  %v2759 = vpack.c.b16 %v2679, %v2677
  %v2760 = vpack.c.b16 %v2680, %v2678
  %v2761 = vpack.c.b16 %v2683, %v2681
  %v2762 = vpack.c.b16 %v2684, %v2682
  %v2763 = vpack.c.b16 %v2687, %v2685
  %v2764 = vpack.c.b16 %v2688, %v2686
  %v2765 = vpack.c.b16 %v2691, %v2689
  %v2766 = vpack.c.b16 %v2692, %v2690
  %v2767 = vpack.c.b16 %v2695, %v2693
  %v2768 = vpack.c.b16 %v2696, %v2694
  %v2769 = vpack.c.b16 %v2699, %v2697
  %v2770 = vpack.c.b16 %v2700, %v2698
  %v2771 = vpack.c.b16 %v2703, %v2701
  %v2772 = vpack.c.b16 %v2704, %v2702
  %v2773 = vpack.c.b16 %v2707, %v2705
  %v2774 = vpack.c.b16 %v2708, %v2706
  %v2775 = vpack.c.b16 %v2711, %v2709
  %v2776 = vpack.c.b16 %v2712, %v2710
  %2841 = vmatprep.subr.bf16.mxu0 %v2714
  %2842 = vmatpush1.bf16.msra.mxu0 %v2713
  %2843 = vmatprep.subr.bf16.mxu0 %v2716
  %2844 = vmatpush1.bf16.msra.mxu0 %v2715
  %2845 = vmatprep.subr.bf16.mxu0 %v2718
  %2846 = vmatpush1.bf16.msra.mxu0 %v2717
  %2847 = vmatprep.subr.bf16.mxu0 %v2720
  %2848 = vmatpush1.bf16.msra.mxu0 %v2719
  %2849 = vmatprep.subr.bf16.mxu0 %v2722
  %2850 = vmatpush1.bf16.msra.mxu0 %v2721
  %2851 = vmatprep.subr.bf16.mxu0 %v2724
  %2852 = vmatpush1.bf16.msra.mxu0 %v2723
  %2853 = vmatprep.subr.bf16.mxu0 %v2726
  %2854 = vmatpush1.bf16.msra.mxu0 %v2725
  %2855 = vmatprep.subr.bf16.mxu0 %v2728
  %2856 = vmatpush1.bf16.msra.mxu0 %v2727
  %2857 = vmatprep.subr.bf16.mxu0 %v2730
  %2858 = vmatpush1.bf16.msra.mxu0 %v2729
  %2859 = vmatprep.subr.bf16.mxu0 %v2732
  %2860 = vmatpush1.bf16.msra.mxu0 %v2731
  %2861 = vmatprep.subr.bf16.mxu0 %v2734
  %2862 = vmatpush1.bf16.msra.mxu0 %v2733
  %2863 = vmatprep.subr.bf16.mxu0 %v2736
  %2864 = vmatpush1.bf16.msra.mxu0 %v2735
  %2865 = vmatprep.subr.bf16.mxu0 %v2738
  %2866 = vmatpush1.bf16.msra.mxu0 %v2737
  %2867 = vmatprep.subr.bf16.mxu0 %v2740
  %2868 = vmatpush1.bf16.msra.mxu0 %v2739
  %2869 = vmatprep.subr.bf16.mxu0 %v2742
  %2870 = vmatpush1.bf16.msra.mxu0 %v2741
  %2871 = vmatprep.subr.bf16.mxu0 %v2744
  %2872 = vmatpush1.bf16.msra.mxu0 %v2743
  %2873 = vmatprep.mubr.bf16.mxu0 %v2442
  %2874 = vmatmul.mubr.bf16.gmra.mrb[0].mxu0 %v2441
  %v2875 = vpop.f32.mrb[0].mxu0
  %v2876 = vadd.f32 %v2514, %v2875
  %v2877 = vpop.f32.mrb[0].mxu0
  %v2878 = vadd.f32 %v2518, %v2877
  %v2879 = vpop.f32.mrb[0].mxu0
  %v2880 = vpop.f32.mrb[0].mxu0
  %2881 = vdwg.mxu0
  %2882 = vmatprep.subr.bf16.mxu0 %v2746
  %2883 = vmatpush1.bf16.msra.mxu0 %v2745
  %2884 = vmatprep.subr.bf16.mxu0 %v2748
  %2885 = vmatpush1.bf16.msra.mxu0 %v2747
  %2886 = vmatprep.subr.bf16.mxu0 %v2750
  %2887 = vmatpush1.bf16.msra.mxu0 %v2749
  %2888 = vmatprep.subr.bf16.mxu0 %v2752
  %2889 = vmatpush1.bf16.msra.mxu0 %v2751
  %2890 = vmatprep.subr.bf16.mxu0 %v2754
  %2891 = vmatpush1.bf16.msra.mxu0 %v2753
  %2892 = vmatprep.subr.bf16.mxu0 %v2756
  %2893 = vmatpush1.bf16.msra.mxu0 %v2755
  %2894 = vmatprep.subr.bf16.mxu0 %v2758
  %2895 = vmatpush1.bf16.msra.mxu0 %v2757
  %2896 = vmatprep.subr.bf16.mxu0 %v2760
  %2897 = vmatpush1.bf16.msra.mxu0 %v2759
  %2898 = vmatprep.subr.bf16.mxu0 %v2762
  %2899 = vmatpush1.bf16.msra.mxu0 %v2761
  %2900 = vmatprep.subr.bf16.mxu0 %v2764
  %2901 = vmatpush1.bf16.msra.mxu0 %v2763
  %2902 = vmatprep.subr.bf16.mxu0 %v2766
  %2903 = vmatpush1.bf16.msra.mxu0 %v2765
  %2904 = vmatprep.subr.bf16.mxu0 %v2768
  %2905 = vmatpush1.bf16.msra.mxu0 %v2767
  %2906 = vmatprep.subr.bf16.mxu0 %v2770
  %2907 = vmatpush1.bf16.msra.mxu0 %v2769
  %2908 = vmatprep.subr.bf16.mxu0 %v2772
  %2909 = vmatpush1.bf16.msra.mxu0 %v2771
  %2910 = vmatprep.subr.bf16.mxu0 %v2774
  %2911 = vmatpush1.bf16.msra.mxu0 %v2773
  %2912 = vmatprep.subr.bf16.mxu0 %v2776
  %2913 = vmatpush1.bf16.msra.mxu0 %v2775
  %2914 = vmatprep.mubr.bf16.mxu0 %v2444
  %2915 = vmatmul.mubr.bf16.gmra.mrb[0].mxu0 %v2443
  %v2916 = vpop.f32.mrb[0].mxu0
  %v2917 = vadd.f32 %v2876, %v2916
  %v2918 = vpop.f32.mrb[0].mxu0
  %v2919 = vadd.f32 %v2878, %v2918
  %v2920 = vpop.f32.mrb[0].mxu0
  %v2921 = vpop.f32.mrb[0].mxu0
  %2922 = vdwg.mxu0
  %v2923 = vld [vmem:[%s12] sm:$0x3]
  %v2924 = vld [vmem:[%s13] sm:$0x3]
  %v2925 = vsel %vm2301, %v2917, 0.0
  %v2926 = vrot.slane %v2925, 4
  %v2927 = vadd.f32 %v2925, %v2926
  %v2928 = vrot.slane %v2927, 2
  %v2929 = vadd.f32 %v2927, %v2928
  %v2930 = vrot.slane %v2929, 1
  %v2931 = vadd.f32 %v2929, %v2930
  %v2932 = vsel %vm2301, %v2919, 0.0
  %v2933 = vrot.slane %v2932, 4
  %v2934 = vadd.f32 %v2932, %v2933
  %v2935 = vrot.slane %v2934, 2
  %v2936 = vadd.f32 %v2934, %v2935
  %v2937 = vrot.slane %v2936, 1
  %v2938 = vadd.f32 %v2936, %v2937
  %v2939 = vmul.f32 %v2931, %v2330
  %v2940 = vmul.f32 %v2938, %v2330
  %v2941 = vsub.f32 %v2917, %v2939
  %v2942 = vsub.f32 %v2919, %v2940
  %v2943 = vmul.f32 %v2941, %v2941
  %v2944 = vmul.f32 %v2942, %v2942
  %v2945 = vsel %vm2301, %v2943, 0.0
  %v2946 = vrot.slane %v2945, 4
  %v2947 = vadd.f32 %v2945, %v2946
  %v2948 = vrot.slane %v2947, 2
  %v2949 = vadd.f32 %v2947, %v2948
  %v2950 = vrot.slane %v2949, 1
  %v2951 = vadd.f32 %v2949, %v2950
  %v2952 = vsel %vm2301, %v2944, 0.0
  %v2953 = vrot.slane %v2952, 4
  %v2954 = vadd.f32 %v2952, %v2953
  %v2955 = vrot.slane %v2954, 2
  %v2956 = vadd.f32 %v2954, %v2955
  %v2957 = vrot.slane %v2956, 1
  %v2958 = vadd.f32 %v2956, %v2957
  %v2959 = vmul.f32 %v2951, %v2330
  %v2960 = vmul.f32 %v2958, %v2330
  %v2962 = vlaneseq
  %v2963 = vshrl.u32 %v2962, 7
  %v2964 = vsub.s32 0, %v2963
  %v2965 = vrot.slane %v2923, %v2964
  %v2966 = vlaneseq
  %v2967 = vshrl.u32 %v2966, 7
  %v2968 = vsub.s32 1, %v2967
  %v2969 = vrot.slane %v2923, %v2968
  %v2972 = vmul.f32 %v2965, %v2941
  %v2973 = vmul.f32 %v2969, %v2942
  %v2974 = vadd.f32 %v2959, 1e-05
  %v2975 = vadd.f32 %v2960, 1e-05
  %v2976 = vrsqrt.pop %v2974
  %v2977 = vrsqrt.pop %v2975
  %v2978 = vmul.f32 %v2972, %v2976
  %v2979 = vmul.f32 %v2973, %v2977
  %v2981 = vlaneseq
  %v2982 = vshrl.u32 %v2981, 7
  %v2983 = vsub.s32 0, %v2982
  %v2984 = vrot.slane %v2924, %v2983
  %v2985 = vlaneseq
  %v2986 = vshrl.u32 %v2985, 7
  %v2987 = vsub.s32 1, %v2986
  %v2988 = vrot.slane %v2924, %v2987
  %v2991 = vadd.f32 %v2978, %v2984
  %v2992 = vadd.f32 %v2979, %v2988
  %v2993 = vmax.f32 %v2991, 0.0
  %v2994 = vmax.f32 %v2992, 0.0
  %v2995 = vpack.c.bf16 %v2993, %v2993
  %v2996 = vpack.c.bf16 %v2994, %v2994
  %v2997 = vld [vmem:[%s14] sm:$0xf]
  %v2998 = vld [vmem:[%s14 + $0x4] sm:$0xf]
  %v2999 = vld [vmem:[%s14 + $0x8] sm:$0xf]
  %v3000 = vld [vmem:[%s14 + $0xc] sm:$0xf]
  %v3001 = vld [vmem:[%s14 + $0x10] sm:$0xf]
  %v3002 = vld [vmem:[%s14 + $0x14] sm:$0xf]
  %v3003 = vld [vmem:[%s14 + $0x18] sm:$0xf]
  %v3004 = vld [vmem:[%s14 + $0x1c] sm:$0xf]
  %v3005 = vld [vmem:[%s14 + $0x20] sm:$0xf]
  %v3006 = vld [vmem:[%s14 + $0x24] sm:$0xf]
  %v3007 = vld [vmem:[%s14 + $0x28] sm:$0xf]
  %v3008 = vld [vmem:[%s14 + $0x2c] sm:$0xf]
  %v3009 = vld [vmem:[%s14 + $0x30] sm:$0xf]
  %v3010 = vld [vmem:[%s14 + $0x34] sm:$0xf]
  %v3011 = vld [vmem:[%s14 + $0x38] sm:$0xf]
  %v3012 = vld [vmem:[%s14 + $0x3c] sm:$0xf]
  %v3013 = vld [vmem:[%s14 + $0x40] sm:$0xf]
  %v3014 = vld [vmem:[%s14 + $0x44] sm:$0xf]
  %v3015 = vld [vmem:[%s14 + $0x48] sm:$0xf]
  %v3016 = vld [vmem:[%s14 + $0x4c] sm:$0xf]
  %v3017 = vld [vmem:[%s14 + $0x50] sm:$0xf]
  %v3018 = vld [vmem:[%s14 + $0x54] sm:$0xf]
  %v3019 = vld [vmem:[%s14 + $0x58] sm:$0xf]
  %v3020 = vld [vmem:[%s14 + $0x5c] sm:$0xf]
  %v3021 = vld [vmem:[%s14 + $0x60] sm:$0xf]
  %v3022 = vld [vmem:[%s14 + $0x64] sm:$0xf]
  %v3023 = vld [vmem:[%s14 + $0x68] sm:$0xf]
  %v3024 = vld [vmem:[%s14 + $0x6c] sm:$0xf]
  %v3025 = vld [vmem:[%s14 + $0x70] sm:$0xf]
  %v3026 = vld [vmem:[%s14 + $0x74] sm:$0xf]
  %v3027 = vld [vmem:[%s14 + $0x78] sm:$0xf]
  %v3028 = vld [vmem:[%s14 + $0x7c] sm:$0xf]
  %v3029 = vld [vmem:[%s15] sm:$0x1]
  %v3031 = vlaneseq
  %v3032 = vshrl.u32 %v3031, 7
  %v3033 = vsub.s32 0, %v3032
  %v3034 = vrot.slane %v3029, %v3033
  %v3068 = vunpack.c.l.b16 %v2997
  %v3069 = vunpack.c.l.b16 %v2998
  %v3070 = vunpack.c.l.b16 %v2999
  %v3071 = vunpack.c.l.b16 %v3000
  %v3072 = vunpack.c.l.b16 %v3001
  %v3073 = vunpack.c.l.b16 %v3002
  %v3074 = vunpack.c.l.b16 %v3003
  %v3075 = vunpack.c.l.b16 %v3004
  %v3076 = vunpack.c.l.b16 %v3005
  %v3077 = vunpack.c.l.b16 %v3006
  %v3078 = vunpack.c.l.b16 %v3007
  %v3079 = vunpack.c.l.b16 %v3008
  %v3080 = vunpack.c.l.b16 %v3009
  %v3081 = vunpack.c.l.b16 %v3010
  %v3082 = vunpack.c.l.b16 %v3011
  %v3083 = vunpack.c.l.b16 %v3012
  %v3084 = vunpack.c.l.b16 %v3013
  %v3085 = vunpack.c.l.b16 %v3014
  %v3086 = vunpack.c.l.b16 %v3015
  %v3087 = vunpack.c.l.b16 %v3016
  %v3088 = vunpack.c.l.b16 %v3017
  %v3089 = vunpack.c.l.b16 %v3018
  %v3090 = vunpack.c.l.b16 %v3019
  %v3091 = vunpack.c.l.b16 %v3020
  %v3092 = vunpack.c.l.b16 %v3021
  %v3093 = vunpack.c.l.b16 %v3022
  %v3094 = vunpack.c.l.b16 %v3023
  %v3095 = vunpack.c.l.b16 %v3024
  %v3096 = vunpack.c.l.b16 %v3025
  %v3097 = vunpack.c.l.b16 %v3026
  %v3098 = vunpack.c.l.b16 %v3027
  %v3099 = vunpack.c.l.b16 %v3028
  %v3100 = vpack.c.b16 %v3069, %v3068
  %v3101 = vpack.c.b16 %v3071, %v3070
  %v3102 = vpack.c.b16 %v3073, %v3072
  %v3103 = vpack.c.b16 %v3075, %v3074
  %v3104 = vpack.c.b16 %v3077, %v3076
  %v3105 = vpack.c.b16 %v3079, %v3078
  %v3106 = vpack.c.b16 %v3081, %v3080
  %v3107 = vpack.c.b16 %v3083, %v3082
  %v3108 = vpack.c.b16 %v3085, %v3084
  %v3109 = vpack.c.b16 %v3087, %v3086
  %v3110 = vpack.c.b16 %v3089, %v3088
  %v3111 = vpack.c.b16 %v3091, %v3090
  %v3112 = vpack.c.b16 %v3093, %v3092
  %v3113 = vpack.c.b16 %v3095, %v3094
  %v3114 = vpack.c.b16 %v3097, %v3096
  %v3115 = vpack.c.b16 %v3099, %v3098
  %3132 = vmatprep.subr.bf16.mxu0 0
  %3133 = vmatpush1.bf16.msra.mxu0 %v3100
  %3134 = vmatprep.subr.bf16.mxu0 0
  %3135 = vmatpush1.bf16.msra.mxu0 %v3101
  %3136 = vmatprep.subr.bf16.mxu0 0
  %3137 = vmatpush1.bf16.msra.mxu0 %v3102
  %3138 = vmatprep.subr.bf16.mxu0 0
  %3139 = vmatpush1.bf16.msra.mxu0 %v3103
  %3140 = vmatprep.subr.bf16.mxu0 0
  %3141 = vmatpush1.bf16.msra.mxu0 %v3104
  %3142 = vmatprep.subr.bf16.mxu0 0
  %3143 = vmatpush1.bf16.msra.mxu0 %v3105
  %3144 = vmatprep.subr.bf16.mxu0 0
  %3145 = vmatpush1.bf16.msra.mxu0 %v3106
  %3146 = vmatprep.subr.bf16.mxu0 0
  %3147 = vmatpush1.bf16.msra.mxu0 %v3107
  %3148 = vmatprep.subr.bf16.mxu0 0
  %3149 = vmatpush1.bf16.msra.mxu0 %v3108
  %3150 = vmatprep.subr.bf16.mxu0 0
  %3151 = vmatpush1.bf16.msra.mxu0 %v3109
  %3152 = vmatprep.subr.bf16.mxu0 0
  %3153 = vmatpush1.bf16.msra.mxu0 %v3110
  %3154 = vmatprep.subr.bf16.mxu0 0
  %3155 = vmatpush1.bf16.msra.mxu0 %v3111
  %3156 = vmatprep.subr.bf16.mxu0 0
  %3157 = vmatpush1.bf16.msra.mxu0 %v3112
  %3158 = vmatprep.subr.bf16.mxu0 0
  %3159 = vmatpush1.bf16.msra.mxu0 %v3113
  %3160 = vmatprep.subr.bf16.mxu0 0
  %3161 = vmatpush1.bf16.msra.mxu0 %v3114
  %3162 = vmatprep.subr.bf16.mxu0 0
  %3163 = vmatpush1.bf16.msra.mxu0 %v3115
  %3164 = vmatprep.mubr.bf16.mxu0 %v2996
  %3165 = vmatmul.mubr.bf16.gmra.mrb[0].mxu0 %v2995
  %v3166 = vpop.f32.mrb[0].mxu0
  %v3167 = vadd.f32 %v3034, %v3166
  %v3168 = vpop.f32.mrb[0].mxu0
  %v3169 = vpop.f32.mrb[0].mxu0
  %v3170 = vpop.f32.mrb[0].mxu0
  %3171 = vdwg.mxu0
  %v3172 = vld [vmem:[%s16] sm:$0x1]
  %v3174 = vlaneseq
  %v3175 = vshrl.u32 %v3174, 7
  %v3176 = vsub.s32 0, %v3175
  %v3177 = vrot.slane %v3172, %v3176
  %v3179 = vadd.f32 %v3167, %v3177
  %3180 = vst [vmem:[%s17] sm:$0x3] %v3179
  // Predicated region
  $region70: #{transformation_net.7} parent=0 // pred_check
    _
  $region71: #{transformation_net.7} parent=0 // pred_check_branch
    %3182 = sbr.rel (0) target = $region73
  $region72: #{transformation_net.7} parent=0 // pred_region
    _
  $region73: #{transformation_net.7} parent=0 // pred_fallthru
    _
  // Predicated region
  $region74: #{transformation_net.7} parent=0 // pred_check
    _
  $region75: #{transformation_net.7} parent=0 // pred_check_branch
    %3184 = sbr.rel (0) target = $region77
  $region76: #{transformation_net.7} parent=0 // pred_region
    _
  $region77: #{transformation_net.7} parent=0 // pred_fallthru
    _

</llo_original>
